<compile_context>
chip_gen: v7x
topology: tpu7x:2x2x1
jax: 0.10.0
libtpu: 0.0.40
codegen_flags: <defaults>
</compile_context>

<pallas_src>
import functools

import jax
import jax.numpy as jnp
from jax import lax
from jax.experimental import pallas as pl
from jax.experimental.pallas import tpu as pltpu


LN_EPS = 1e-5       # PyTorch nn.LayerNorm default
NORM_EPS = 1e-12    # PyTorch F.normalize default


def _refinement_kernel(x_ref, w1_ref, b1_ref, w2_ref, b2_ref, w3_ref, b3_ref,
                       o_ref, *, residual: bool, gelu_approximate: bool):
    # ---- LayerNorm over the feature (last / lane) axis, in f32.
    # gamma/beta are folded into w1/b1 host-side, so only mean/var remain.
    x = x_ref[...].astype(jnp.float32)
    mean = jnp.mean(x, axis=-1, keepdims=True)
    centered = x - mean
    var = jnp.mean(centered * centered, axis=-1, keepdims=True)
    xn = centered * lax.rsqrt(var + LN_EPS)

    # ---- Linear 1 + GELU: bf16 operands, f32 accumulation -------------------
    h1 = jnp.dot(xn.astype(w1_ref.dtype), w1_ref[...],
                 preferred_element_type=jnp.float32) + b1_ref[...]
    h1 = jax.nn.gelu(h1, approximate=gelu_approximate)
    # Dropout(0.1): identity at inference time.

    # ---- Linear 2 + GELU -----------------------------------------------------
    h2 = jnp.dot(h1.astype(w2_ref.dtype), w2_ref[...],
                 preferred_element_type=jnp.float32) + b2_ref[...]
    h2 = jax.nn.gelu(h2, approximate=gelu_approximate)
    # Dropout(0.1): identity at inference time.

    # ---- Linear 3 -------------------------------------------------------------
    out = jnp.dot(h2.astype(w3_ref.dtype), w3_ref[...],
                  preferred_element_type=jnp.float32) + b3_ref[...]

    # ---- Optional residual (only when input_dim == output_dim) ---------------
    # PyTorch adds the raw, pre-LayerNorm input (identity = x).
    if residual:
        out = out + x

    # ---- F.normalize(out, p=2, dim=1): out / max(||out||, eps) ---------------
    norm_sq = jnp.sum(out * out, axis=-1, keepdims=True)
    inv = lax.rsqrt(jnp.maximum(norm_sq, NORM_EPS * NORM_EPS))
    o_ref[...] = (out * inv).astype(o_ref.dtype)


def _round_up(v, m):
    return ((v + m - 1) // m) * m


def _vmem_capacity_bytes():
    try:
        return int(pltpu.get_tpu_info().vmem_capacity_bytes)
    except Exception:
        return 64 << 20   # conservative fallback (v7x per-TC VMEM)


def refinement_net_forward(x, params, *, tm=256, min_grid_steps=2,
                           gelu_approximate=True):
    """x: (batch, input_dim) float32.  params: dict of kernel parameters."""
    batch, input_dim = x.shape
    hidden_dim = params["w1"].shape[1]
    output_dim = params["w3"].shape[1]
    residual = (input_dim == output_dim)

    # ---- Fold LayerNorm affine (gamma, beta) into the first Linear ----------
    # (xn*g + beta) @ W1 + b1 == xn @ (diag(g) W1) + (beta @ W1 + b1)
    gamma = params["ln_gamma"].reshape(-1).astype(jnp.float32)
    beta = params["ln_beta"].reshape(-1).astype(jnp.float32)
    w1_f32 = params["w1"].astype(jnp.float32)
    w1 = (gamma[:, None] * w1_f32).astype(params["w1"].dtype)
    b1 = ((beta @ w1_f32)[None, :]
          + params["b1"].astype(jnp.float32)).astype(jnp.float32)
    w2, b2 = params["w2"], params["b2"].astype(jnp.float32)
    w3, b3 = params["w3"], params["b3"].astype(jnp.float32)

    # ---- Batch tile: multiple of 16 (bf16 LHS packing); keep >= min_grid_steps
    # grid steps when the batch allows (v7x has 2 TensorCores on the grid).
    tm = max(16, min(_round_up(int(tm), 16), _round_up(batch, 16)))
    if min_grid_steps > 1 and batch > 16 * min_grid_steps:
        tm = min(tm, max(16, _round_up(pl.cdiv(batch, min_grid_steps), 16)))
    tm = _round_up(tm, 16)
    padded = pl.cdiv(batch, tm) * tm
    if padded != batch:
        x = jnp.pad(x, ((0, padded - batch), (0, 0)))
    grid = (padded // tm,)

    kernel = functools.partial(_refinement_kernel, residual=residual,
                               gelu_approximate=gelu_approximate)

    row_map = lambda i: (i, 0)        # x / out tiles walk the batch axis
    const_map = lambda i: (0, 0)      # weights & biases resident across grid

    # ---- VMEM accounting (generation-aware limit, no hard cap) --------------
    weight_arrays = (w1, b1, w2, b2, w3, b3)
    weight_bytes = sum(int(a.size) * a.dtype.itemsize for a in weight_arrays)
    io_bytes = 2 * tm * (input_dim + output_dim) * 4          # x/out, 2 bufs
    act_bytes = tm * (input_dim + 2 * hidden_dim + output_dim) * 4
    footprint = weight_bytes + io_bytes + act_bytes
    vmem_cap = _vmem_capacity_bytes()
    vmem_limit = max(32 << 20, 2 * footprint)                 # headroom
    vmem_limit = min(vmem_limit, int(0.75 * vmem_cap))        # per-generation
    vmem_limit = max(vmem_limit, footprint + (4 << 20))       # never starve
    vmem_limit = int(min(vmem_limit, int(0.9 * vmem_cap)))    # safety ceiling

    flops = 2 * padded * (input_dim * hidden_dim
                          + hidden_dim * hidden_dim
                          + hidden_dim * output_dim)
    bytes_accessed = (padded * input_dim * 4
                      + weight_bytes
                      + padded * output_dim * 4)
    transcendentals = padded * 2 * hidden_dim  # two GELUs

    single = pl.Buffered(1)   # constants: one resident buffer, no double-buffer

    out_padded = pl.pallas_call(
        kernel,
        out_shape=jax.ShapeDtypeStruct((padded, output_dim), x.dtype),
        grid_spec=pltpu.PrefetchScalarGridSpec(
            num_scalar_prefetch=0,
            grid=grid,
            in_specs=[
                pl.BlockSpec((tm, input_dim), row_map),                  # x
                pl.BlockSpec((input_dim, hidden_dim), const_map,
                             pipeline_mode=single),                      # w1
                pl.BlockSpec((1, hidden_dim), const_map,
                             pipeline_mode=single),                      # b1
                pl.BlockSpec((hidden_dim, hidden_dim), const_map,
                             pipeline_mode=single),                      # w2
                pl.BlockSpec((1, hidden_dim), const_map,
                             pipeline_mode=single),                      # b2
                pl.BlockSpec((hidden_dim, output_dim), const_map,
                             pipeline_mode=single),                      # w3
                pl.BlockSpec((1, output_dim), const_map,
                             pipeline_mode=single),                      # b3
            ],
            out_specs=pl.BlockSpec((tm, output_dim), row_map),
        ),
        compiler_params=pltpu.CompilerParams(
            dimension_semantics=("parallel",),
            vmem_limit_bytes=vmem_limit,
        ),
        cost_estimate=pl.CostEstimate(
            flops=flops,
            transcendentals=transcendentals,
            bytes_accessed=bytes_accessed,
        ),
    )(x, w1, b1, w2, b2, w3, b3)

    return out_padded[:batch]


def init_params(key, input_dim, hidden_dim, output_dim,
                weight_dtype=jnp.bfloat16):
    """Deterministic init mirroring the PyTorch module:
       - Linear weights: orthogonal init (stored transposed, (in, out)),
         cast to bf16 for MXU-native matmuls (f32 accumulation in-kernel)
       - Linear biases: zeros (f32)
       - LayerNorm: gamma=1, beta=0 (f32)
       - temperature: 20.0 (unused in forward)"""
    k1, k2, k3 = jax.random.split(key, 3)
    ortho = jax.nn.initializers.orthogonal()

    # PyTorch Linear weight has shape (out, in); init in f32, transpose, cast.
    w1 = ortho(k1, (hidden_dim, input_dim), jnp.float32).T.astype(weight_dtype)
    w2 = ortho(k2, (hidden_dim, hidden_dim), jnp.float32).T.astype(weight_dtype)
    w3 = ortho(k3, (output_dim, hidden_dim), jnp.float32).T.astype(weight_dtype)

    return {
        "ln_gamma": jnp.ones((1, input_dim), jnp.float32),
        "ln_beta": jnp.zeros((1, input_dim), jnp.float32),
        "w1": w1, "b1": jnp.zeros((1, hidden_dim), jnp.float32),
        "w2": w2, "b2": jnp.zeros((1, hidden_dim), jnp.float32),
        "w3": w3, "b3": jnp.zeros((1, output_dim), jnp.float32),
        "temperature": jnp.array([20.0], jnp.float32),  # unused in forward
    }


def reference_forward(x, params, *, gelu_approximate=True):
    """Pure-JAX reference with the same precision policy (bf16 matmul
    operands, f32 accumulation, same GELU variant) for a sanity check."""
    xf = x.astype(jnp.float32)
    mean = jnp.mean(xf, axis=-1, keepdims=True)
    var = jnp.mean((xf - mean) ** 2, axis=-1, keepdims=True)
    xn = (xf - mean) * lax.rsqrt(var + LN_EPS)
    xn = xn * params["ln_gamma"] + params["ln_beta"]
    wdt = params["w1"].dtype
    h = jax.nn.gelu(jnp.dot(xn.astype(wdt), params["w1"],
                            preferred_element_type=jnp.float32) + params["b1"],
                    approximate=gelu_approximate)
    h = jax.nn.gelu(jnp.dot(h.astype(wdt), params["w2"],
                            preferred_element_type=jnp.float32) + params["b2"],
                    approximate=gelu_approximate)
    out = jnp.dot(h.astype(wdt), params["w3"],
                  preferred_element_type=jnp.float32) + params["b3"]
    if x.shape[1] == out.shape[1]:
        out = out + xf
    norm_sq = jnp.sum(out * out, axis=-1, keepdims=True)
    return out * lax.rsqrt(jnp.maximum(norm_sq, NORM_EPS * NORM_EPS))


if __name__ == "__main__":
    # Small shapes consistent with the module's 1024->2048->512 proportions
    # (input_dim != output_dim, so no residual — same branch as the default
    # config).  Batch 256: the tm logic yields tm=128 -> a 2-step "parallel"
    # grid, so both v7x TensorCores get a tile.
    BATCH, INPUT_DIM, HIDDEN_DIM, OUTPUT_DIM = 256, 256, 512, 128

    key = jax.random.PRNGKey(0)
    k_param, k_x = jax.random.split(key)

    params = init_params(k_param, INPUT_DIM, HIDDEN_DIM, OUTPUT_DIM)
    x = jax.random.normal(k_x, (BATCH, INPUT_DIM), dtype=jnp.float32)

    out = refinement_net_forward(x, params, tm=256, gelu_approximate=True)
    out = jax.block_until_ready(out)

    # Sanity check against the pure-JAX reference (same precision policy).
    ref = jax.block_until_ready(
        reference_forward(x, params, gelu_approximate=True))
    assert out.shape == (BATCH, OUTPUT_DIM)
    assert jnp.allclose(out, ref, atol=2e-3, rtol=2e-3), "mismatch vs reference"

    print("KERNEL_OK")
</pallas_src>

<mosaic_0001>
module attributes {stable_mosaic.version = 11 : i64} {
  func.func @_refinement_kernel(%arg0: i32, %arg1: memref<128x256xf32, #tpu.memory_space<vmem>>, %arg2: memref<256x512xbf16, #tpu.memory_space<vmem>>, %arg3: memref<1x512xf32, #tpu.memory_space<vmem>>, %arg4: memref<512x512xbf16, #tpu.memory_space<vmem>>, %arg5: memref<1x512xf32, #tpu.memory_space<vmem>>, %arg6: memref<512x128xbf16, #tpu.memory_space<vmem>>, %arg7: memref<1x128xf32, #tpu.memory_space<vmem>>, %arg8: memref<128x128xf32, #tpu.memory_space<vmem>>) attributes {dimension_semantics = [#tpu.dimension_semantics<parallel>], iteration_bounds = array<i64: 2>, scalar_prefetch = 0 : i64, scratch_operands = 0 : i64, tpu.core_type = #tpu.core_type<tc>, window_params = [{transform_indices = @transform_0, window_bounds = array<i64: 128, 256>}, {pipeline_mode = #tpu.pipeline_mode<synchronous>, transform_indices = @transform_1, window_bounds = array<i64: 256, 512>}, {pipeline_mode = #tpu.pipeline_mode<synchronous>, transform_indices = @transform_2, window_bounds = array<i64: 1, 512>}, {pipeline_mode = #tpu.pipeline_mode<synchronous>, transform_indices = @transform_3, window_bounds = array<i64: 512, 512>}, {pipeline_mode = #tpu.pipeline_mode<synchronous>, transform_indices = @transform_4, window_bounds = array<i64: 1, 512>}, {pipeline_mode = #tpu.pipeline_mode<synchronous>, transform_indices = @transform_5, window_bounds = array<i64: 512, 128>}, {pipeline_mode = #tpu.pipeline_mode<synchronous>, transform_indices = @transform_6, window_bounds = array<i64: 1, 128>}, {transform_indices = @transform_7, window_bounds = array<i64: 128, 128>}]} {
    %c0 = arith.constant 0 : index
    %c0_0 = arith.constant 0 : index
    %0 = vector.load %arg1[%c0, %c0_0] : memref<128x256xf32, #tpu.memory_space<vmem>>, vector<128x256xf32>
    %cst = arith.constant dense<0.000000e+00> : vector<128xf32>
    %1 = vector.multi_reduction <add>, %0, %cst [1] : vector<128x256xf32> to vector<128xf32>
    %2 = vector.shape_cast %1 : vector<128xf32> to vector<128x1xf32>
    %cst_1 = arith.constant 2.560000e+02 : f32
    %3 = vector.broadcast %cst_1 : f32 to vector<128x1xf32>
    %4 = arith.divf %2, %3 : vector<128x1xf32>
    %5 = vector.broadcast %4 : vector<128x1xf32> to vector<128x256xf32>
    %6 = arith.subf %0, %5 : vector<128x256xf32>
    %7 = arith.mulf %6, %6 : vector<128x256xf32>
    %cst_2 = arith.constant dense<0.000000e+00> : vector<128xf32>
    %8 = vector.multi_reduction <add>, %7, %cst_2 [1] : vector<128x256xf32> to vector<128xf32>
    %9 = vector.shape_cast %8 : vector<128xf32> to vector<128x1xf32>
    %cst_3 = arith.constant 2.560000e+02 : f32
    %10 = vector.broadcast %cst_3 : f32 to vector<128x1xf32>
    %11 = arith.divf %9, %10 : vector<128x1xf32>
    %cst_4 = arith.constant 9.99999974E-6 : f32
    %12 = vector.broadcast %cst_4 : f32 to vector<128x1xf32>
    %13 = arith.addf %11, %12 : vector<128x1xf32>
    %14 = math.rsqrt %13 : vector<128x1xf32>
    %15 = vector.broadcast %14 : vector<128x1xf32> to vector<128x256xf32>
    %16 = arith.mulf %6, %15 : vector<128x256xf32>
    %17 = arith.truncf %16 : vector<128x256xf32> to vector<128x256xbf16>
    %c0_5 = arith.constant 0 : index
    %c0_6 = arith.constant 0 : index
    %18 = vector.load %arg2[%c0_5, %c0_6] : memref<256x512xbf16, #tpu.memory_space<vmem>>, vector<256x512xbf16>
    %cst_7 = arith.constant dense<0.000000e+00> : vector<128x512xf32>
    %19 = tpu.matmul %17, %18, %cst_7 {dimension_numbers = #tpu.dot_dimension_numbers<[1], [0], [0], [1], [0, 0, 1, 1], [], []>} : vector<128x256xbf16>, vector<256x512xbf16>, vector<128x512xf32> -> vector<128x512xf32>
    %c0_8 = arith.constant 0 : index
    %c0_9 = arith.constant 0 : index
    %20 = vector.load %arg3[%c0_8, %c0_9] : memref<1x512xf32, #tpu.memory_space<vmem>>, vector<1x512xf32>
    %21 = vector.broadcast %20 : vector<1x512xf32> to vector<128x512xf32>
    %22 = arith.addf %19, %21 : vector<128x512xf32>
    %23 = arith.mulf %22, %22 : vector<128x512xf32>
    %24 = arith.mulf %22, %23 : vector<128x512xf32>
    %cst_10 = arith.constant 4.471500e-02 : f32
    %25 = vector.broadcast %cst_10 : f32 to vector<128x512xf32>
    %26 = arith.mulf %25, %24 : vector<128x512xf32>
    %27 = arith.addf %22, %26 : vector<128x512xf32>
    %cst_11 = arith.constant 0.797884583 : f32
    %28 = vector.broadcast %cst_11 : f32 to vector<128x512xf32>
    %29 = arith.mulf %28, %27 : vector<128x512xf32>
    %30 = math.tanh %29 : vector<128x512xf32>
    %cst_12 = arith.constant 1.000000e+00 : f32
    %31 = vector.broadcast %cst_12 : f32 to vector<128x512xf32>
    %32 = arith.addf %31, %30 : vector<128x512xf32>
    %cst_13 = arith.constant 5.000000e-01 : f32
    %33 = vector.broadcast %cst_13 : f32 to vector<128x512xf32>
    %34 = arith.mulf %33, %32 : vector<128x512xf32>
    %35 = arith.mulf %22, %34 : vector<128x512xf32>
    %36 = arith.truncf %35 : vector<128x512xf32> to vector<128x512xbf16>
    %c0_14 = arith.constant 0 : index
    %c0_15 = arith.constant 0 : index
    %37 = vector.load %arg4[%c0_14, %c0_15] : memref<512x512xbf16, #tpu.memory_space<vmem>>, vector<512x512xbf16>
    %cst_16 = arith.constant dense<0.000000e+00> : vector<128x512xf32>
    %38 = tpu.matmul %36, %37, %cst_16 {dimension_numbers = #tpu.dot_dimension_numbers<[1], [0], [0], [1], [0, 0, 1, 1], [], []>} : vector<128x512xbf16>, vector<512x512xbf16>, vector<128x512xf32> -> vector<128x512xf32>
    %c0_17 = arith.constant 0 : index
    %c0_18 = arith.constant 0 : index
    %39 = vector.load %arg5[%c0_17, %c0_18] : memref<1x512xf32, #tpu.memory_space<vmem>>, vector<1x512xf32>
    %40 = vector.broadcast %39 : vector<1x512xf32> to vector<128x512xf32>
    %41 = arith.addf %38, %40 : vector<128x512xf32>
    %42 = arith.mulf %41, %41 : vector<128x512xf32>
    %43 = arith.mulf %41, %42 : vector<128x512xf32>
    %cst_19 = arith.constant 4.471500e-02 : f32
    %44 = vector.broadcast %cst_19 : f32 to vector<128x512xf32>
    %45 = arith.mulf %44, %43 : vector<128x512xf32>
    %46 = arith.addf %41, %45 : vector<128x512xf32>
    %cst_20 = arith.constant 0.797884583 : f32
    %47 = vector.broadcast %cst_20 : f32 to vector<128x512xf32>
    %48 = arith.mulf %47, %46 : vector<128x512xf32>
    %49 = math.tanh %48 : vector<128x512xf32>
    %cst_21 = arith.constant 1.000000e+00 : f32
    %50 = vector.broadcast %cst_21 : f32 to vector<128x512xf32>
    %51 = arith.addf %50, %49 : vector<128x512xf32>
    %cst_22 = arith.constant 5.000000e-01 : f32
    %52 = vector.broadcast %cst_22 : f32 to vector<128x512xf32>
    %53 = arith.mulf %52, %51 : vector<128x512xf32>
    %54 = arith.mulf %41, %53 : vector<128x512xf32>
    %55 = arith.truncf %54 : vector<128x512xf32> to vector<128x512xbf16>
    %c0_23 = arith.constant 0 : index
    %c0_24 = arith.constant 0 : index
    %56 = vector.load %arg6[%c0_23, %c0_24] : memref<512x128xbf16, #tpu.memory_space<vmem>>, vector<512x128xbf16>
    %cst_25 = arith.constant dense<0.000000e+00> : vector<128x128xf32>
    %57 = tpu.matmul %55, %56, %cst_25 {dimension_numbers = #tpu.dot_dimension_numbers<[1], [0], [0], [1], [0, 0, 1, 1], [], []>} : vector<128x512xbf16>, vector<512x128xbf16>, vector<128x128xf32> -> vector<128x128xf32>
    %c0_26 = arith.constant 0 : index
    %c0_27 = arith.constant 0 : index
    %58 = vector.load %arg7[%c0_26, %c0_27] : memref<1x128xf32, #tpu.memory_space<vmem>>, vector<1x128xf32>
    %59 = vector.broadcast %58 : vector<1x128xf32> to vector<128x128xf32>
    %60 = arith.addf %57, %59 : vector<128x128xf32>
    %61 = arith.mulf %60, %60 : vector<128x128xf32>
    %cst_28 = arith.constant dense<0.000000e+00> : vector<128xf32>
    %62 = vector.multi_reduction <add>, %61, %cst_28 [1] : vector<128x128xf32> to vector<128xf32>
    %63 = vector.shape_cast %62 : vector<128xf32> to vector<128x1xf32>
    %cst_29 = arith.constant 1.000000e-24 : f32
    %64 = vector.broadcast %cst_29 : f32 to vector<128x1xf32>
    %65 = arith.maximumf %63, %64 : vector<128x1xf32>
    %66 = math.rsqrt %65 : vector<128x1xf32>
    %67 = vector.broadcast %66 : vector<128x1xf32> to vector<128x128xf32>
    %68 = arith.mulf %60, %67 : vector<128x128xf32>
    %c0_30 = arith.constant 0 : index
    %c0_31 = arith.constant 0 : index
    %69 = vector.load %arg8[%c0_30, %c0_31] : memref<128x128xf32, #tpu.memory_space<vmem>>, vector<128x128xf32>
    tpu.vector_store %arg8[%c0_30, %c0_31], %68 {strides = array<i32>} : memref<128x128xf32, #tpu.memory_space<vmem>>, vector<128x128xf32>,
    return
  }
  func.func @transform_0(%arg0: i32) -> (i32, i32) {
    %c0_i32 = arith.constant 0 : i32
    %c0_i32_0 = arith.constant 0 : i32
    return %arg0, %c0_i32 : i32, i32
  }
  func.func @transform_1(%arg0: i32) -> (i32, i32) {
    %c0_i32 = arith.constant 0 : i32
    %c0_i32_0 = arith.constant 0 : i32
    %c0_i32_1 = arith.constant 0 : i32
    return %c0_i32, %c0_i32_0 : i32, i32
  }
  func.func @transform_2(%arg0: i32) -> (i32, i32) {
    %c0_i32 = arith.constant 0 : i32
    %c0_i32_0 = arith.constant 0 : i32
    %c0_i32_1 = arith.constant 0 : i32
    return %c0_i32, %c0_i32_0 : i32, i32
  }
  func.func @transform_3(%arg0: i32) -> (i32, i32) {
    %c0_i32 = arith.constant 0 : i32
    %c0_i32_0 = arith.constant 0 : i32
    %c0_i32_1 = arith.constant 0 : i32
    return %c0_i32, %c0_i32_0 : i32, i32
  }
  func.func @transform_4(%arg0: i32) -> (i32, i32) {
    %c0_i32 = arith.constant 0 : i32
    %c0_i32_0 = arith.constant 0 : i32
    %c0_i32_1 = arith.constant 0 : i32
    return %c0_i32, %c0_i32_0 : i32, i32
  }
  func.func @transform_5(%arg0: i32) -> (i32, i32) {
    %c0_i32 = arith.constant 0 : i32
    %c0_i32_0 = arith.constant 0 : i32
    %c0_i32_1 = arith.constant 0 : i32
    return %c0_i32, %c0_i32_0 : i32, i32
  }
  func.func @transform_6(%arg0: i32) -> (i32, i32) {
    %c0_i32 = arith.constant 0 : i32
    %c0_i32_0 = arith.constant 0 : i32
    %c0_i32_1 = arith.constant 0 : i32
    return %c0_i32, %c0_i32_0 : i32, i32
  }
  func.func @transform_7(%arg0: i32) -> (i32, i32) {
    %c0_i32 = arith.constant 0 : i32
    %c0_i32_0 = arith.constant 0 : i32
    return %arg0, %c0_i32 : i32, i32
  }
}

</mosaic_0001>

<llo_original>
// kernel: tpu_custom_call.1
$region0: #{tpu_custom_call.1}
  #allocation0 [shape = 'u32[]', space=smem, size = 0x4, offset = 0x4, fixed_abs, tag = 'smem constant byte address 0x4 - core index']
  #allocation1 [shape = 'u32[144,128]{1,0:T(1,128)}', space=vmem, size = 0x12000, scoped, tag = 'internal scratch']
  %s0 = inlined_call_operand.hbm [shape: f32[256,256], index: 0, kind: input, shape index: {}]
  %s1 = inlined_call_operand.hbm [shape: bf16[256,512], index: 1, kind: input, shape index: {}]
  %s2 = inlined_call_operand.vmem [shape: f32[1,512], index: 2, kind: input, shape index: {}]
  %s3 = inlined_call_operand.hbm [shape: bf16[512,512], index: 3, kind: input, shape index: {}]
  %s4 = inlined_call_operand.vmem [shape: f32[1,512], index: 4, kind: input, shape index: {}]
  %s5 = inlined_call_operand.hbm [shape: bf16[512,128], index: 5, kind: input, shape index: {}]
  %s6 = inlined_call_operand.vmem [shape: f32[1,128], index: 6, kind: input, shape index: {}]
  %s7 = inlined_call_operand.hbm [shape: f32[256,128], index: 7, kind: output, shape index: {}]
  %s8 = sld [smem:[#allocation0]]
  $region77: #{tpu_custom_call.1} parent=0
    _
  %s10 = ssub.s32 1, %s8
  %s11 = scalar_select 0, %s10, %s8
  $region1: #{tpu_custom_call.1} parent=0
    #allocation2 [shape = 'u8[262144]{0}', space=vmem, size = 0x40000, scoped, tag = 'input window, operand 0']
    #allocation3 [shape = 's32[2]{0}', space=sflag, size = 0x8, scoped, tag = 'scoped memory for tpu_custom_call.1']
    #allocation4 [shape = 's32[2]{0}', space=sflag, size = 0x8, scoped, tag = 'scoped memory for tpu_custom_call.1']
    #allocation5 [shape = 'u8[262144]{0}', space=vmem, size = 0x40000, scoped, tag = 'input window, operand 1, single buffered']
    #allocation6 [shape = 's32[1]{0}', space=sflag, size = 0x4, scoped, tag = 'scoped memory for tpu_custom_call.1']
    #allocation7 [shape = 'u8[524288]{0}', space=vmem, size = 0x80000, scoped, tag = 'input window, operand 3, single buffered']
    #allocation8 [shape = 'u8[131072]{0}', space=vmem, size = 0x20000, scoped, tag = 'input window, operand 5, single buffered']
    #allocation9 [shape = 's32[1]{0}', space=sflag, size = 0x4, scoped, tag = 'scoped memory for tpu_custom_call.1']
    #allocation10 [shape = 'u8[131072]{0}', space=vmem, size = 0x20000, scoped, tag = 'output window, operand 0']
    %12 = vsyncpa [#allocation3], 0
    %s13 = scalar_lea.sflag [#allocation3], 1
    %14 = vsyncpa %s13, 0
    %15 = vsyncpa [#allocation6], 0
    %16 = vsyncpa [#allocation9], 0
    %17 = vsyncpa [#allocation4], 0
    %s18 = scalar_lea.sflag [#allocation4], 1
    %19 = vsyncpa %s18, 0
    loop: start=0, step=1, limit=4
    $region2: #{tpu_custom_call.1} parent=1 // loop_pre_header
      _
    $region3: #{tpu_custom_call.1} parent=1 // loop_header
      %s21 = sphi 0, %s25
      %p22 = scmp.ge.s32.totalorder %s21, 4
      %s31 = sphi 0, %s33
      %s34 = sphi 0, %s31
      %s35 = sphi 0, %s34
      %s51 = sphi 0, %s35
      %s55 = sphi 0, %s55
      %s57 = sphi 0, %s55
      %s58 = sphi 0, %s57
      %s72 = sphi 0, %s58
      %s76 = sphi 0, %s76
      %s78 = sphi 0, %s76
      %s79 = sphi 0, %s78
      %s93 = sphi 0, %s79
      %s97 = sphi 0, %s97
      %s99 = sphi 0, %s97
      %s100 = sphi 0, %s99
      %s114 = sphi 0, %s100
      %s118 = sphi 0, %s118
      %s120 = sphi 0, %s118
      %s121 = sphi 0, %s120
      %s135 = sphi 0, %s121
      %s139 = sphi 0, %s139
      %s141 = sphi 0, %s139
      %s142 = sphi 0, %s141
      %s156 = sphi 0, %s142
      %s160 = sphi 0, %s160
      %s162 = sphi 0, %s160
      %s163 = sphi 0, %s162
      %s177 = sphi 0, %s163
      %s183 = sphi 0, %s185
      %s186 = sphi 0, %s183
      %s187 = sphi 0, %s186
      %s203 = sphi 0, %s187
    $region4: #{tpu_custom_call.1} parent=1 // loop_header_branch
      %24 = sbr.rel (%p22) target = $region8
    $region5: #{tpu_custom_call.1} parent=1 // loop_body
      %s26 = ssub.s32 %s21, 1
      %s27 = ssub.s32 %s21, 2
      %s28 = sadd.s32 %s21, 1
      %s29 = ssub.s32 %s21, %s28
      %p30 = scmp.eq.s32.totalorder %s29, 0
      %s32 = sadd.s32 %s31, 1
      %s33 = scalar_select %p30, %s31, %s32
      %p36 = pneg %p30
      %p37 = scmp.eq.s32.totalorder %s21, 1
      %p38 = por %p36, %p37
      %p39 = scmp.ne.s32.totalorder %s31, %s34
      %p40 = scmp.eq.s32.totalorder %s21, 0
      %p41 = por %p39, %p40
      %p42 = scmp.ne.s32.totalorder %s31, %s34
      %p43 = scmp.eq.s32.totalorder %s26, 1
      %p44 = por %p42, %p43
      %p45 = scmp.ne.s32.totalorder %s34, %s35
      %p46 = scmp.eq.s32.totalorder %s26, 0
      %p47 = por %p45, %p46
      %p48 = scmp.ne.s32.totalorder %s34, %s35
      %p49 = scmp.eq.s32.totalorder %s27, 1
      %p50 = por %p48, %p49
      %p52 = scmp.ne.s32.totalorder %s35, %s51
      %p53 = scmp.eq.s32.totalorder %s27, 0
      %p54 = por %p52, %p53
      %s56 = sadd.s32 %s55, 1
      %p59 = scmp.eq.s32.totalorder %s21, 1
      %p60 = scmp.ne.s32.totalorder %s55, %s57
      %p61 = scmp.eq.s32.totalorder %s21, 0
      %p62 = por %p60, %p61
      %p63 = scmp.ne.s32.totalorder %s55, %s57
      %p64 = scmp.eq.s32.totalorder %s26, 1
      %p65 = por %p63, %p64
      %p66 = scmp.ne.s32.totalorder %s57, %s58
      %p67 = scmp.eq.s32.totalorder %s26, 0
      %p68 = por %p66, %p67
      %p69 = scmp.ne.s32.totalorder %s57, %s58
      %p70 = scmp.eq.s32.totalorder %s27, 1
      %p71 = por %p69, %p70
      %p73 = scmp.ne.s32.totalorder %s58, %s72
      %p74 = scmp.eq.s32.totalorder %s27, 0
      %p75 = por %p73, %p74
      %s77 = sadd.s32 %s76, 1
      %p80 = scmp.eq.s32.totalorder %s21, 1
      %p81 = scmp.ne.s32.totalorder %s76, %s78
      %p82 = scmp.eq.s32.totalorder %s21, 0
      %p83 = por %p81, %p82
      %p84 = scmp.ne.s32.totalorder %s76, %s78
      %p85 = scmp.eq.s32.totalorder %s26, 1
      %p86 = por %p84, %p85
      %p87 = scmp.ne.s32.totalorder %s78, %s79
      %p88 = scmp.eq.s32.totalorder %s26, 0
      %p89 = por %p87, %p88
      %p90 = scmp.ne.s32.totalorder %s78, %s79
      %p91 = scmp.eq.s32.totalorder %s27, 1
      %p92 = por %p90, %p91
      %p94 = scmp.ne.s32.totalorder %s79, %s93
      %p95 = scmp.eq.s32.totalorder %s27, 0
      %p96 = por %p94, %p95
      %s98 = sadd.s32 %s97, 1
      %p101 = scmp.eq.s32.totalorder %s21, 1
      %p102 = scmp.ne.s32.totalorder %s97, %s99
      %p103 = scmp.eq.s32.totalorder %s21, 0
      %p104 = por %p102, %p103
      %p105 = scmp.ne.s32.totalorder %s97, %s99
      %p106 = scmp.eq.s32.totalorder %s26, 1
      %p107 = por %p105, %p106
      %p108 = scmp.ne.s32.totalorder %s99, %s100
      %p109 = scmp.eq.s32.totalorder %s26, 0
      %p110 = por %p108, %p109
      %p111 = scmp.ne.s32.totalorder %s99, %s100
      %p112 = scmp.eq.s32.totalorder %s27, 1
      %p113 = por %p111, %p112
      %p115 = scmp.ne.s32.totalorder %s100, %s114
      %p116 = scmp.eq.s32.totalorder %s27, 0
      %p117 = por %p115, %p116
      %s119 = sadd.s32 %s118, 1
      %p122 = scmp.eq.s32.totalorder %s21, 1
      %p123 = scmp.ne.s32.totalorder %s118, %s120
      %p124 = scmp.eq.s32.totalorder %s21, 0
      %p125 = por %p123, %p124
      %p126 = scmp.ne.s32.totalorder %s118, %s120
      %p127 = scmp.eq.s32.totalorder %s26, 1
      %p128 = por %p126, %p127
      %p129 = scmp.ne.s32.totalorder %s120, %s121
      %p130 = scmp.eq.s32.totalorder %s26, 0
      %p131 = por %p129, %p130
      %p132 = scmp.ne.s32.totalorder %s120, %s121
      %p133 = scmp.eq.s32.totalorder %s27, 1
      %p134 = por %p132, %p133
      %p136 = scmp.ne.s32.totalorder %s121, %s135
      %p137 = scmp.eq.s32.totalorder %s27, 0
      %p138 = por %p136, %p137
      %s140 = sadd.s32 %s139, 1
      %p143 = scmp.eq.s32.totalorder %s21, 1
      %p144 = scmp.ne.s32.totalorder %s139, %s141
      %p145 = scmp.eq.s32.totalorder %s21, 0
      %p146 = por %p144, %p145
      %p147 = scmp.ne.s32.totalorder %s139, %s141
      %p148 = scmp.eq.s32.totalorder %s26, 1
      %p149 = por %p147, %p148
      %p150 = scmp.ne.s32.totalorder %s141, %s142
      %p151 = scmp.eq.s32.totalorder %s26, 0
      %p152 = por %p150, %p151
      %p153 = scmp.ne.s32.totalorder %s141, %s142
      %p154 = scmp.eq.s32.totalorder %s27, 1
      %p155 = por %p153, %p154
      %p157 = scmp.ne.s32.totalorder %s142, %s156
      %p158 = scmp.eq.s32.totalorder %s27, 0
      %p159 = por %p157, %p158
      %s161 = sadd.s32 %s160, 1
      %p164 = scmp.eq.s32.totalorder %s21, 1
      %p165 = scmp.ne.s32.totalorder %s160, %s162
      %p166 = scmp.eq.s32.totalorder %s21, 0
      %p167 = por %p165, %p166
      %p168 = scmp.ne.s32.totalorder %s160, %s162
      %p169 = scmp.eq.s32.totalorder %s26, 1
      %p170 = por %p168, %p169
      %p171 = scmp.ne.s32.totalorder %s162, %s163
      %p172 = scmp.eq.s32.totalorder %s26, 0
      %p173 = por %p171, %p172
      %p174 = scmp.ne.s32.totalorder %s162, %s163
      %p175 = scmp.eq.s32.totalorder %s27, 1
      %p176 = por %p174, %p175
      %p178 = scmp.ne.s32.totalorder %s163, %s177
      %p179 = scmp.eq.s32.totalorder %s27, 0
      %p180 = por %p178, %p179
      %s181 = ssub.s32 %s21, %s28
      %p182 = scmp.eq.s32.totalorder %s181, 0
      %s184 = sadd.s32 %s183, 1
      %s185 = scalar_select %p182, %s183, %s184
      %p188 = pneg %p182
      %p189 = scmp.eq.s32.totalorder %s21, 1
      %p190 = por %p188, %p189
      %p191 = scmp.ne.s32.totalorder %s183, %s186
      %p192 = scmp.eq.s32.totalorder %s21, 0
      %p193 = por %p191, %p192
      %p194 = scmp.ne.s32.totalorder %s183, %s186
      %p195 = scmp.eq.s32.totalorder %s26, 1
      %p196 = por %p194, %p195
      %p197 = scmp.ne.s32.totalorder %s186, %s187
      %p198 = scmp.eq.s32.totalorder %s26, 0
      %p199 = por %p197, %p198
      %p200 = scmp.ne.s32.totalorder %s186, %s187
      %p201 = scmp.eq.s32.totalorder %s27, 1
      %p202 = por %p200, %p201
      %p204 = scmp.ne.s32.totalorder %s187, %s203
      %p205 = scmp.eq.s32.totalorder %s27, 0
      %p206 = por %p204, %p205
      %p207 = scmp.le.s32.totalorder 1, %s21
      %p208 = scmp.lt.s32.totalorder %s21, 3
      %p209 = pnand %p207, %p208
      %p210 = pneg %p209
      // Predicated region
      $region9: #{tpu_custom_call.1} parent=5 // pred_check
        _
      $region10: #{tpu_custom_call.1} parent=5 // pred_check_branch
        %212 = sbr.rel (%p209) target = $region12
      $region11: #{tpu_custom_call.1} parent=5 // pred_region
        %s213 = ssub.s32 %s21, 1
        // Predicated region
        $region13: #{tpu_custom_call.1} parent=11 // pred_check
          %p214 = pneg %p68
        $region14: #{tpu_custom_call.1} parent=11 // pred_check_branch
          %216 = sbr.rel (%p214) target = $region16
        $region15: #{tpu_custom_call.1} parent=11 // pred_region
          %s218 = ssub.s32 8192, 8192
          %219 = vsyncadd [#allocation6], %s218
          %s220 = sshll.u32 [#allocation5], 4
          %s221 = int_to_ptr.vmem [resolvable:$true] %s220
          %226 = dma.hbm_to_vmem [thread:$0]  %s1, 8192, %s221, [#allocation6], 256, 256, 16
        $region16: #{tpu_custom_call.1} parent=11 // pred_fallthru
          _
        // Predicated region
        $region17: #{tpu_custom_call.1} parent=11 // pred_check
          %p227 = pneg %p89
        $region18: #{tpu_custom_call.1} parent=11 // pred_check_branch
          %229 = sbr.rel (%p227) target = $region20
        $region19: #{tpu_custom_call.1} parent=11 // pred_region
          _
        $region20: #{tpu_custom_call.1} parent=11 // pred_fallthru
          _
        // Predicated region
        $region21: #{tpu_custom_call.1} parent=11 // pred_check
          %p230 = pneg %p110
        $region22: #{tpu_custom_call.1} parent=11 // pred_check_branch
          %232 = sbr.rel (%p230) target = $region24
        $region23: #{tpu_custom_call.1} parent=11 // pred_region
          %s234 = ssub.s32 16384, 16384
          %235 = vsyncadd [#allocation6], %s234
          %s236 = sshll.u32 [#allocation7], 4
          %s237 = int_to_ptr.vmem [resolvable:$true] %s236
          %242 = dma.hbm_to_vmem [thread:$0]  %s3, 16384, %s237, [#allocation6], 256, 256, 16
        $region24: #{tpu_custom_call.1} parent=11 // pred_fallthru
          _
        // Predicated region
        $region25: #{tpu_custom_call.1} parent=11 // pred_check
          %p243 = pneg %p131
        $region26: #{tpu_custom_call.1} parent=11 // pred_check_branch
          %245 = sbr.rel (%p243) target = $region28
        $region27: #{tpu_custom_call.1} parent=11 // pred_region
          _
        $region28: #{tpu_custom_call.1} parent=11 // pred_fallthru
          _
        // Predicated region
        $region29: #{tpu_custom_call.1} parent=11 // pred_check
          %p246 = pneg %p152
        $region30: #{tpu_custom_call.1} parent=11 // pred_check_branch
          %248 = sbr.rel (%p246) target = $region32
        $region31: #{tpu_custom_call.1} parent=11 // pred_region
          %s250 = ssub.s32 4096, 4096
          %251 = vsyncadd [#allocation9], %s250
          %s252 = sshll.u32 [#allocation8], 4
          %s253 = int_to_ptr.vmem [resolvable:$true] %s252
          %258 = dma.hbm_to_vmem [thread:$0]  %s5, 4096, %s253, [#allocation9], 64, 64, 4
        $region32: #{tpu_custom_call.1} parent=11 // pred_fallthru
          _
        // Predicated region
        $region33: #{tpu_custom_call.1} parent=11 // pred_check
          %p259 = pneg %p173
        $region34: #{tpu_custom_call.1} parent=11 // pred_check_branch
          %261 = sbr.rel (%p259) target = $region36
        $region35: #{tpu_custom_call.1} parent=11 // pred_region
          _
        $region36: #{tpu_custom_call.1} parent=11 // pred_fallthru
          _
      $region12: #{tpu_custom_call.1} parent=5 // pred_fallthru
        _
      %p262 = scmp.lt.s32.totalorder %s21, 2
      // Predicated region
      $region37: #{tpu_custom_call.1} parent=5 // pred_check
        %p263 = pneg %p262
      $region38: #{tpu_custom_call.1} parent=5 // pred_check_branch
        %265 = sbr.rel (%p263) target = $region40
      $region39: #{tpu_custom_call.1} parent=5 // pred_region
        // Predicated region
        $region41: #{tpu_custom_call.1} parent=39 // pred_check
          %p266 = pneg %p41
        $region42: #{tpu_custom_call.1} parent=39 // pred_check_branch
          %268 = sbr.rel (%p266) target = $region44
        $region43: #{tpu_custom_call.1} parent=39 // pred_region
          %s269 = sand.u32 %s31, 1
          %s270 = scalar_lea.sflag [#allocation3], %s269
          %s271 = sand.u32 %s31, 1
          %s272 = smul.addr %s271, 256
          %s273 = scalar_lea.vmem [#allocation2], %s272
          %s274 = smul.u32 16, %s21
          %s276 = ssub.s32 4096, 4096
          %277 = vsyncadd %s270, %s276
          %s278 = smul.addr %s274, 2
          %s279 = smul.addr %s278, 128
          %s280 = scalar_lea.hbm %s0, %s279
          %s281 = sshll.u32 %s273, 4
          %s282 = int_to_ptr.vmem [resolvable:$true] %s281
          %287 = dma.hbm_to_vmem [thread:$0]  %s280, 4096, %s282, %s270, 256, 256, 16
        $region44: #{tpu_custom_call.1} parent=39 // pred_fallthru
          _
      $region40: #{tpu_custom_call.1} parent=5 // pred_fallthru
        _
      %p288 = scmp.le.s32.totalorder 1, %s21
      %p289 = scmp.lt.s32.totalorder %s21, 3
      %p290 = pnand %p288, %p289
      %p291 = pneg %p290
      // Predicated region
      $region45: #{tpu_custom_call.1} parent=5 // pred_check
        _
      $region46: #{tpu_custom_call.1} parent=5 // pred_check_branch
        %293 = sbr.rel (%p290) target = $region48
      $region47: #{tpu_custom_call.1} parent=5 // pred_region
        %s294 = ssub.s32 %s21, 1
        %s295 = sand.u32 %s34, 1
        %s296 = scalar_lea.sflag [#allocation3], %s295
        %s297 = sand.u32 %s34, 1
        %s298 = smul.addr %s297, 256
        %s299 = scalar_lea.vmem [#allocation2], %s298
        // Predicated region
        $region49: #{tpu_custom_call.1} parent=47 // pred_check
          %p300 = pneg %p47
        $region50: #{tpu_custom_call.1} parent=47 // pred_check_branch
          %302 = sbr.rel (%p300) target = $region52
        $region51: #{tpu_custom_call.1} parent=47 // pred_region
          %303 = dma.done %s296, 4096
        $region52: #{tpu_custom_call.1} parent=47 // pred_fallthru
          _
        // Predicated region
        $region53: #{tpu_custom_call.1} parent=47 // pred_check
          %p304 = pneg %p68
        $region54: #{tpu_custom_call.1} parent=47 // pred_check_branch
          %306 = sbr.rel (%p304) target = $region56
        $region55: #{tpu_custom_call.1} parent=47 // pred_region
          %307 = dma.done [#allocation6], 8192
        $region56: #{tpu_custom_call.1} parent=47 // pred_fallthru
          _
        // Predicated region
        $region57: #{tpu_custom_call.1} parent=47 // pred_check
          %p308 = pneg %p110
        $region58: #{tpu_custom_call.1} parent=47 // pred_check_branch
          %310 = sbr.rel (%p308) target = $region60
        $region59: #{tpu_custom_call.1} parent=47 // pred_region
          %311 = dma.done [#allocation6], 16384
        $region60: #{tpu_custom_call.1} parent=47 // pred_fallthru
          _
        // Predicated region
        $region61: #{tpu_custom_call.1} parent=47 // pred_check
          %p312 = pneg %p152
        $region62: #{tpu_custom_call.1} parent=47 // pred_check_branch
          %314 = sbr.rel (%p312) target = $region64
        $region63: #{tpu_custom_call.1} parent=47 // pred_region
          %315 = dma.done [#allocation9], 4096
        $region64: #{tpu_custom_call.1} parent=47 // pred_fallthru
          _
        %s316 = sand.u32 %s34, 1
        %s317 = scalar_lea.sflag [#allocation3], %s316
        %s318 = sand.u32 %s34, 1
        %s319 = smul.addr %s318, 256
        %s320 = scalar_lea.vmem [#allocation2], %s319
        %p321 = pneg %p47
        %p322 = pneg %p44
        %p323 = pneg %p68
        %p324 = pneg %p65
        %p325 = pneg %p89
        %p326 = pneg %p86
        %p327 = pneg %p110
        %p328 = pneg %p107
        %p329 = pneg %p131
        %p330 = pneg %p128
        %p331 = pneg %p152
        %p332 = pneg %p149
        %p333 = pneg %p173
        %p334 = pneg %p170
        %p335 = pneg %p199
        %p336 = pneg %p196
        %s337 = sand.u32 %s186, 1
        %s338 = scalar_lea.sflag [#allocation4], %s337
        %s339 = sand.u32 %s186, 1
        %s340 = smul.addr %s339, 128
        %s341 = scalar_lea.vmem [#allocation10], %s340
        %s342 = smul.u32 16, %s26
        %s343 = smul.u32 16, %s26
        %v345 = vld [vmem:[%s299] sm:$0xff]
        %v346 = vld [vmem:[%s299 + $0x8] sm:$0xff]
        %v347 = vld [vmem:[%s299 + $0x10] sm:$0xff]
        %v348 = vld [vmem:[%s299 + $0x18] sm:$0xff]
        %v349 = vld [vmem:[%s299 + $0x20] sm:$0xff]
        %v350 = vld [vmem:[%s299 + $0x28] sm:$0xff]
        %v351 = vld [vmem:[%s299 + $0x30] sm:$0xff]
        %v352 = vld [vmem:[%s299 + $0x38] sm:$0xff]
        %v353 = vld [vmem:[%s299 + $0x40] sm:$0xff]
        %v354 = vld [vmem:[%s299 + $0x48] sm:$0xff]
        %v355 = vld [vmem:[%s299 + $0x50] sm:$0xff]
        %v356 = vld [vmem:[%s299 + $0x58] sm:$0xff]
        %v357 = vld [vmem:[%s299 + $0x60] sm:$0xff]
        %v358 = vld [vmem:[%s299 + $0x68] sm:$0xff]
        %v359 = vld [vmem:[%s299 + $0x70] sm:$0xff]
        %v360 = vld [vmem:[%s299 + $0x78] sm:$0xff]
        %v361 = vld [vmem:[%s299 + $0x80] sm:$0xff]
        %v362 = vld [vmem:[%s299 + $0x88] sm:$0xff]
        %v363 = vld [vmem:[%s299 + $0x90] sm:$0xff]
        %v364 = vld [vmem:[%s299 + $0x98] sm:$0xff]
        %v365 = vld [vmem:[%s299 + $0xa0] sm:$0xff]
        %v366 = vld [vmem:[%s299 + $0xa8] sm:$0xff]
        %v367 = vld [vmem:[%s299 + $0xb0] sm:$0xff]
        %v368 = vld [vmem:[%s299 + $0xb8] sm:$0xff]
        %v369 = vld [vmem:[%s299 + $0xc0] sm:$0xff]
        %v370 = vld [vmem:[%s299 + $0xc8] sm:$0xff]
        %v371 = vld [vmem:[%s299 + $0xd0] sm:$0xff]
        %v372 = vld [vmem:[%s299 + $0xd8] sm:$0xff]
        %v373 = vld [vmem:[%s299 + $0xe0] sm:$0xff]
        %v374 = vld [vmem:[%s299 + $0xe8] sm:$0xff]
        %v375 = vld [vmem:[%s299 + $0xf0] sm:$0xff]
        %v376 = vld [vmem:[%s299 + $0xf8] sm:$0xff]
        %v377 = vadd.f32 %v345, %v346
        %378 = vadd.xlane.f32.xlu0 %v377
        %v379 = vpop.xlane.xlu0 %378
        %v380 = vadd.f32 %v347, %v348
        %381 = vadd.xlane.f32.xlu0 %v380
        %v382 = vpop.xlane.xlu0 %381
        %v383 = vadd.f32 %v349, %v350
        %384 = vadd.xlane.f32.xlu0 %v383
        %v385 = vpop.xlane.xlu0 %384
        %v386 = vadd.f32 %v351, %v352
        %387 = vadd.xlane.f32.xlu0 %v386
        %v388 = vpop.xlane.xlu0 %387
        %v389 = vadd.f32 %v353, %v354
        %390 = vadd.xlane.f32.xlu0 %v389
        %v391 = vpop.xlane.xlu0 %390
        %v392 = vadd.f32 %v355, %v356
        %393 = vadd.xlane.f32.xlu0 %v392
        %v394 = vpop.xlane.xlu0 %393
        %v395 = vadd.f32 %v357, %v358
        %396 = vadd.xlane.f32.xlu0 %v395
        %v397 = vpop.xlane.xlu0 %396
        %v398 = vadd.f32 %v359, %v360
        %399 = vadd.xlane.f32.xlu0 %v398
        %v400 = vpop.xlane.xlu0 %399
        %v401 = vadd.f32 %v361, %v362
        %402 = vadd.xlane.f32.xlu0 %v401
        %v403 = vpop.xlane.xlu0 %402
        %v404 = vadd.f32 %v363, %v364
        %405 = vadd.xlane.f32.xlu0 %v404
        %v406 = vpop.xlane.xlu0 %405
        %v407 = vadd.f32 %v365, %v366
        %408 = vadd.xlane.f32.xlu0 %v407
        %v409 = vpop.xlane.xlu0 %408
        %v410 = vadd.f32 %v367, %v368
        %411 = vadd.xlane.f32.xlu0 %v410
        %v412 = vpop.xlane.xlu0 %411
        %v413 = vadd.f32 %v369, %v370
        %414 = vadd.xlane.f32.xlu0 %v413
        %v415 = vpop.xlane.xlu0 %414
        %v416 = vadd.f32 %v371, %v372
        %417 = vadd.xlane.f32.xlu0 %v416
        %v418 = vpop.xlane.xlu0 %417
        %v419 = vadd.f32 %v373, %v374
        %420 = vadd.xlane.f32.xlu0 %v419
        %v421 = vpop.xlane.xlu0 %420
        %v422 = vadd.f32 %v375, %v376
        %423 = vadd.xlane.f32.xlu0 %v422
        %v424 = vpop.xlane.xlu0 %423
        %v425 = vrcp.pop 256.0
        %v426 = vmul.f32 %v379, %v425
        %v427 = vmul.f32 %v382, %v425
        %v428 = vmul.f32 %v385, %v425
        %v429 = vmul.f32 %v388, %v425
        %v430 = vmul.f32 %v391, %v425
        %v431 = vmul.f32 %v394, %v425
        %v432 = vmul.f32 %v397, %v425
        %v433 = vmul.f32 %v400, %v425
        %v434 = vmul.f32 %v403, %v425
        %v435 = vmul.f32 %v406, %v425
        %v436 = vmul.f32 %v409, %v425
        %v437 = vmul.f32 %v412, %v425
        %v438 = vmul.f32 %v415, %v425
        %v439 = vmul.f32 %v418, %v425
        %v440 = vmul.f32 %v421, %v425
        %v441 = vmul.f32 %v424, %v425
        %v442 = vsub.f32 %v345, %v426
        %v443 = vsub.f32 %v346, %v426
        %v444 = vsub.f32 %v347, %v427
        %v445 = vsub.f32 %v348, %v427
        %v446 = vsub.f32 %v349, %v428
        %v447 = vsub.f32 %v350, %v428
        %v448 = vsub.f32 %v351, %v429
        %v449 = vsub.f32 %v352, %v429
        %v450 = vsub.f32 %v353, %v430
        %v451 = vsub.f32 %v354, %v430
        %v452 = vsub.f32 %v355, %v431
        %v453 = vsub.f32 %v356, %v431
        %v454 = vsub.f32 %v357, %v432
        %v455 = vsub.f32 %v358, %v432
        %v456 = vsub.f32 %v359, %v433
        %v457 = vsub.f32 %v360, %v433
        %v458 = vsub.f32 %v361, %v434
        %v459 = vsub.f32 %v362, %v434
        %v460 = vsub.f32 %v363, %v435
        %v461 = vsub.f32 %v364, %v435
        %v462 = vsub.f32 %v365, %v436
        %v463 = vsub.f32 %v366, %v436
        %v464 = vsub.f32 %v367, %v437
        %v465 = vsub.f32 %v368, %v437
        %v466 = vsub.f32 %v369, %v438
        %v467 = vsub.f32 %v370, %v438
        %v468 = vsub.f32 %v371, %v439
        %v469 = vsub.f32 %v372, %v439
        %v470 = vsub.f32 %v373, %v440
        %v471 = vsub.f32 %v374, %v440
        %v472 = vsub.f32 %v375, %v441
        %v473 = vsub.f32 %v376, %v441
        %v474 = vmul.f32 %v442, %v442
        %v475 = vmul.f32 %v443, %v443
        %v476 = vmul.f32 %v444, %v444
        %v477 = vmul.f32 %v445, %v445
        %v478 = vmul.f32 %v446, %v446
        %v479 = vmul.f32 %v447, %v447
        %v480 = vmul.f32 %v448, %v448
        %v481 = vmul.f32 %v449, %v449
        %v482 = vmul.f32 %v450, %v450
        %v483 = vmul.f32 %v451, %v451
        %v484 = vmul.f32 %v452, %v452
        %v485 = vmul.f32 %v453, %v453
        %v486 = vmul.f32 %v454, %v454
        %v487 = vmul.f32 %v455, %v455
        %v488 = vmul.f32 %v456, %v456
        %v489 = vmul.f32 %v457, %v457
        %v490 = vmul.f32 %v458, %v458
        %v491 = vmul.f32 %v459, %v459
        %v492 = vmul.f32 %v460, %v460
        %v493 = vmul.f32 %v461, %v461
        %v494 = vmul.f32 %v462, %v462
        %v495 = vmul.f32 %v463, %v463
        %v496 = vmul.f32 %v464, %v464
        %v497 = vmul.f32 %v465, %v465
        %v498 = vmul.f32 %v466, %v466
        %v499 = vmul.f32 %v467, %v467
        %v500 = vmul.f32 %v468, %v468
        %v501 = vmul.f32 %v469, %v469
        %v502 = vmul.f32 %v470, %v470
        %v503 = vmul.f32 %v471, %v471
        %v504 = vmul.f32 %v472, %v472
        %v505 = vmul.f32 %v473, %v473
        %v506 = vadd.f32 %v474, %v475
        %507 = vadd.xlane.f32.xlu0 %v506
        %v508 = vpop.xlane.xlu0 %507
        %v509 = vadd.f32 %v476, %v477
        %510 = vadd.xlane.f32.xlu0 %v509
        %v511 = vpop.xlane.xlu0 %510
        %v512 = vadd.f32 %v478, %v479
        %513 = vadd.xlane.f32.xlu0 %v512
        %v514 = vpop.xlane.xlu0 %513
        %v515 = vadd.f32 %v480, %v481
        %516 = vadd.xlane.f32.xlu0 %v515
        %v517 = vpop.xlane.xlu0 %516
        %v518 = vadd.f32 %v482, %v483
        %519 = vadd.xlane.f32.xlu0 %v518
        %v520 = vpop.xlane.xlu0 %519
        %v521 = vadd.f32 %v484, %v485
        %522 = vadd.xlane.f32.xlu0 %v521
        %v523 = vpop.xlane.xlu0 %522
        %v524 = vadd.f32 %v486, %v487
        %525 = vadd.xlane.f32.xlu0 %v524
        %v526 = vpop.xlane.xlu0 %525
        %v527 = vadd.f32 %v488, %v489
        %528 = vadd.xlane.f32.xlu0 %v527
        %v529 = vpop.xlane.xlu0 %528
        %v530 = vadd.f32 %v490, %v491
        %531 = vadd.xlane.f32.xlu0 %v530
        %v532 = vpop.xlane.xlu0 %531
        %v533 = vadd.f32 %v492, %v493
        %534 = vadd.xlane.f32.xlu0 %v533
        %v535 = vpop.xlane.xlu0 %534
        %v536 = vadd.f32 %v494, %v495
        %537 = vadd.xlane.f32.xlu0 %v536
        %v538 = vpop.xlane.xlu0 %537
        %v539 = vadd.f32 %v496, %v497
        %540 = vadd.xlane.f32.xlu0 %v539
        %v541 = vpop.xlane.xlu0 %540
        %v542 = vadd.f32 %v498, %v499
        %543 = vadd.xlane.f32.xlu0 %v542
        %v544 = vpop.xlane.xlu0 %543
        %v545 = vadd.f32 %v500, %v501
        %546 = vadd.xlane.f32.xlu0 %v545
        %v547 = vpop.xlane.xlu0 %546
        %v548 = vadd.f32 %v502, %v503
        %549 = vadd.xlane.f32.xlu0 %v548
        %v550 = vpop.xlane.xlu0 %549
        %v551 = vadd.f32 %v504, %v505
        %552 = vadd.xlane.f32.xlu0 %v551
        %v553 = vpop.xlane.xlu0 %552
        %v554 = vmul.f32 %v508, %v425
        %v555 = vmul.f32 %v511, %v425
        %v556 = vmul.f32 %v514, %v425
        %v557 = vmul.f32 %v517, %v425
        %v558 = vmul.f32 %v520, %v425
        %v559 = vmul.f32 %v523, %v425
        %v560 = vmul.f32 %v526, %v425
        %v561 = vmul.f32 %v529, %v425
        %v562 = vmul.f32 %v532, %v425
        %v563 = vmul.f32 %v535, %v425
        %v564 = vmul.f32 %v538, %v425
        %v565 = vmul.f32 %v541, %v425
        %v566 = vmul.f32 %v544, %v425
        %v567 = vmul.f32 %v547, %v425
        %v568 = vmul.f32 %v550, %v425
        %v569 = vmul.f32 %v553, %v425
        %v570 = vadd.f32 %v554, 1e-05
        %v571 = vadd.f32 %v555, 1e-05
        %v572 = vadd.f32 %v556, 1e-05
        %v573 = vadd.f32 %v557, 1e-05
        %v574 = vadd.f32 %v558, 1e-05
        %v575 = vadd.f32 %v559, 1e-05
        %v576 = vadd.f32 %v560, 1e-05
        %v577 = vadd.f32 %v561, 1e-05
        %v578 = vadd.f32 %v562, 1e-05
        %v579 = vadd.f32 %v563, 1e-05
        %v580 = vadd.f32 %v564, 1e-05
        %v581 = vadd.f32 %v565, 1e-05
        %v582 = vadd.f32 %v566, 1e-05
        %v583 = vadd.f32 %v567, 1e-05
        %v584 = vadd.f32 %v568, 1e-05
        %v585 = vadd.f32 %v569, 1e-05
        %v586 = vrsqrt.pop %v570
        %v587 = vrsqrt.pop %v571
        %v588 = vrsqrt.pop %v572
        %v589 = vrsqrt.pop %v573
        %v590 = vrsqrt.pop %v574
        %v591 = vrsqrt.pop %v575
        %v592 = vrsqrt.pop %v576
        %v593 = vrsqrt.pop %v577
        %v594 = vrsqrt.pop %v578
        %v595 = vrsqrt.pop %v579
        %v596 = vrsqrt.pop %v580
        %v597 = vrsqrt.pop %v581
        %v598 = vrsqrt.pop %v582
        %v599 = vrsqrt.pop %v583
        %v600 = vrsqrt.pop %v584
        %v601 = vrsqrt.pop %v585
        %v602 = vmul.f32 %v442, %v586
        %v603 = vmul.f32 %v443, %v586
        %v604 = vmul.f32 %v444, %v587
        %v605 = vmul.f32 %v445, %v587
        %v606 = vmul.f32 %v446, %v588
        %v607 = vmul.f32 %v447, %v588
        %v608 = vmul.f32 %v448, %v589
        %v609 = vmul.f32 %v449, %v589
        %v610 = vmul.f32 %v450, %v590
        %v611 = vmul.f32 %v451, %v590
        %v612 = vmul.f32 %v452, %v591
        %v613 = vmul.f32 %v453, %v591
        %v614 = vmul.f32 %v454, %v592
        %v615 = vmul.f32 %v455, %v592
        %v616 = vmul.f32 %v456, %v593
        %v617 = vmul.f32 %v457, %v593
        %v618 = vmul.f32 %v458, %v594
        %v619 = vmul.f32 %v459, %v594
        %v620 = vmul.f32 %v460, %v595
        %v621 = vmul.f32 %v461, %v595
        %v622 = vmul.f32 %v462, %v596
        %v623 = vmul.f32 %v463, %v596
        %v624 = vmul.f32 %v464, %v597
        %v625 = vmul.f32 %v465, %v597
        %v626 = vmul.f32 %v466, %v598
        %v627 = vmul.f32 %v467, %v598
        %v628 = vmul.f32 %v468, %v599
        %v629 = vmul.f32 %v469, %v599
        %v630 = vmul.f32 %v470, %v600
        %v631 = vmul.f32 %v471, %v600
        %v632 = vmul.f32 %v472, %v601
        %v633 = vmul.f32 %v473, %v601
        %v634 = vpack.c.bf16 %v604, %v602
        %v635 = vpack.c.bf16 %v605, %v603
        %v636 = vpack.c.bf16 %v608, %v606
        %v637 = vpack.c.bf16 %v609, %v607
        %v638 = vpack.c.bf16 %v612, %v610
        %v639 = vpack.c.bf16 %v613, %v611
        %v640 = vpack.c.bf16 %v616, %v614
        %v641 = vpack.c.bf16 %v617, %v615
        %v642 = vpack.c.bf16 %v620, %v618
        %v643 = vpack.c.bf16 %v621, %v619
        %v644 = vpack.c.bf16 %v624, %v622
        %v645 = vpack.c.bf16 %v625, %v623
        %v646 = vpack.c.bf16 %v628, %v626
        %v647 = vpack.c.bf16 %v629, %v627
        %v648 = vpack.c.bf16 %v632, %v630
        %v649 = vpack.c.bf16 %v633, %v631
        %v650 = vld [vmem:[#allocation5] sm:$0xff]
        %v651 = vld [vmem:[#allocation5 + $0x8] sm:$0xff]
        %v652 = vld [vmem:[#allocation5 + $0x10] sm:$0xff]
        %v653 = vld [vmem:[#allocation5 + $0x18] sm:$0xff]
        %v654 = vld [vmem:[#allocation5 + $0x20] sm:$0xff]
        %v655 = vld [vmem:[#allocation5 + $0x28] sm:$0xff]
        %v656 = vld [vmem:[#allocation5 + $0x30] sm:$0xff]
        %v657 = vld [vmem:[#allocation5 + $0x38] sm:$0xff]
        %v658 = vld [vmem:[#allocation5 + $0x40] sm:$0xff]
        %v659 = vld [vmem:[#allocation5 + $0x48] sm:$0xff]
        %v660 = vld [vmem:[#allocation5 + $0x50] sm:$0xff]
        %v661 = vld [vmem:[#allocation5 + $0x58] sm:$0xff]
        %v662 = vld [vmem:[#allocation5 + $0x60] sm:$0xff]
        %v663 = vld [vmem:[#allocation5 + $0x68] sm:$0xff]
        %v664 = vld [vmem:[#allocation5 + $0x70] sm:$0xff]
        %v665 = vld [vmem:[#allocation5 + $0x78] sm:$0xff]
        %v666 = vld [vmem:[#allocation5 + $0x80] sm:$0xff]
        %v667 = vld [vmem:[#allocation5 + $0x88] sm:$0xff]
        %v668 = vld [vmem:[#allocation5 + $0x90] sm:$0xff]
        %v669 = vld [vmem:[#allocation5 + $0x98] sm:$0xff]
        %v670 = vld [vmem:[#allocation5 + $0xa0] sm:$0xff]
        %v671 = vld [vmem:[#allocation5 + $0xa8] sm:$0xff]
        %v672 = vld [vmem:[#allocation5 + $0xb0] sm:$0xff]
        %v673 = vld [vmem:[#allocation5 + $0xb8] sm:$0xff]
        %v674 = vld [vmem:[#allocation5 + $0xc0] sm:$0xff]
        %v675 = vld [vmem:[#allocation5 + $0xc8] sm:$0xff]
        %v676 = vld [vmem:[#allocation5 + $0xd0] sm:$0xff]
        %v677 = vld [vmem:[#allocation5 + $0xd8] sm:$0xff]
        %v678 = vld [vmem:[#allocation5 + $0xe0] sm:$0xff]
        %v679 = vld [vmem:[#allocation5 + $0xe8] sm:$0xff]
        %v680 = vld [vmem:[#allocation5 + $0xf0] sm:$0xff]
        %v681 = vld [vmem:[#allocation5 + $0xf8] sm:$0xff]
        %v682 = vld [vmem:[#allocation5 + $0x100] sm:$0xff]
        %v683 = vld [vmem:[#allocation5 + $0x108] sm:$0xff]
        %v684 = vld [vmem:[#allocation5 + $0x110] sm:$0xff]
        %v685 = vld [vmem:[#allocation5 + $0x118] sm:$0xff]
        %v686 = vld [vmem:[#allocation5 + $0x120] sm:$0xff]
        %v687 = vld [vmem:[#allocation5 + $0x128] sm:$0xff]
        %v688 = vld [vmem:[#allocation5 + $0x130] sm:$0xff]
        %v689 = vld [vmem:[#allocation5 + $0x138] sm:$0xff]
        %v690 = vld [vmem:[#allocation5 + $0x140] sm:$0xff]
        %v691 = vld [vmem:[#allocation5 + $0x148] sm:$0xff]
        %v692 = vld [vmem:[#allocation5 + $0x150] sm:$0xff]
        %v693 = vld [vmem:[#allocation5 + $0x158] sm:$0xff]
        %v694 = vld [vmem:[#allocation5 + $0x160] sm:$0xff]
        %v695 = vld [vmem:[#allocation5 + $0x168] sm:$0xff]
        %v696 = vld [vmem:[#allocation5 + $0x170] sm:$0xff]
        %v697 = vld [vmem:[#allocation5 + $0x178] sm:$0xff]
        %v698 = vld [vmem:[#allocation5 + $0x180] sm:$0xff]
        %v699 = vld [vmem:[#allocation5 + $0x188] sm:$0xff]
        %v700 = vld [vmem:[#allocation5 + $0x190] sm:$0xff]
        %v701 = vld [vmem:[#allocation5 + $0x198] sm:$0xff]
        %v702 = vld [vmem:[#allocation5 + $0x1a0] sm:$0xff]
        %v703 = vld [vmem:[#allocation5 + $0x1a8] sm:$0xff]
        %v704 = vld [vmem:[#allocation5 + $0x1b0] sm:$0xff]
        %v705 = vld [vmem:[#allocation5 + $0x1b8] sm:$0xff]
        %v706 = vld [vmem:[#allocation5 + $0x1c0] sm:$0xff]
        %v707 = vld [vmem:[#allocation5 + $0x1c8] sm:$0xff]
        %v708 = vld [vmem:[#allocation5 + $0x1d0] sm:$0xff]
        %v709 = vld [vmem:[#allocation5 + $0x1d8] sm:$0xff]
        %v710 = vld [vmem:[#allocation5 + $0x1e0] sm:$0xff]
        %v711 = vld [vmem:[#allocation5 + $0x1e8] sm:$0xff]
        %v712 = vld [vmem:[#allocation5 + $0x1f0] sm:$0xff]
        %v713 = vld [vmem:[#allocation5 + $0x1f8] sm:$0xff]
        %v714 = vld [vmem:[%s2] sm:$0xf]
        %v716 = vlaneseq
        %v717 = vshrl.u32 %v716, 7
        %v718 = vsub.s32 0, %v717
        %v719 = vrot.slane %v714, %v718
        %v720 = vlaneseq
        %v721 = vshrl.u32 %v720, 7
        %v722 = vsub.s32 1, %v721
        %v723 = vrot.slane %v714, %v722
        %v724 = vlaneseq
        %v725 = vshrl.u32 %v724, 7
        %v726 = vsub.s32 2, %v725
        %v727 = vrot.slane %v714, %v726
        %v728 = vlaneseq
        %v729 = vshrl.u32 %v728, 7
        %v730 = vsub.s32 3, %v729
        %v731 = vrot.slane %v714, %v730
        %v800 = vunpack.c.l.b16 %v650
        %v801 = vunpack.c.h.b16 %v650
        %v802 = vunpack.c.l.b16 %v651
        %v803 = vunpack.c.h.b16 %v651
        %v804 = vunpack.c.l.b16 %v652
        %v805 = vunpack.c.h.b16 %v652
        %v806 = vunpack.c.l.b16 %v653
        %v807 = vunpack.c.h.b16 %v653
        %v808 = vunpack.c.l.b16 %v654
        %v809 = vunpack.c.h.b16 %v654
        %v810 = vunpack.c.l.b16 %v655
        %v811 = vunpack.c.h.b16 %v655
        %v812 = vunpack.c.l.b16 %v656
        %v813 = vunpack.c.h.b16 %v656
        %v814 = vunpack.c.l.b16 %v657
        %v815 = vunpack.c.h.b16 %v657
        %v816 = vunpack.c.l.b16 %v658
        %v817 = vunpack.c.h.b16 %v658
        %v818 = vunpack.c.l.b16 %v659
        %v819 = vunpack.c.h.b16 %v659
        %v820 = vunpack.c.l.b16 %v660
        %v821 = vunpack.c.h.b16 %v660
        %v822 = vunpack.c.l.b16 %v661
        %v823 = vunpack.c.h.b16 %v661
        %v824 = vunpack.c.l.b16 %v662
        %v825 = vunpack.c.h.b16 %v662
        %v826 = vunpack.c.l.b16 %v663
        %v827 = vunpack.c.h.b16 %v663
        %v828 = vunpack.c.l.b16 %v664
        %v829 = vunpack.c.h.b16 %v664
        %v830 = vunpack.c.l.b16 %v665
        %v831 = vunpack.c.h.b16 %v665
        %v832 = vunpack.c.l.b16 %v666
        %v833 = vunpack.c.h.b16 %v666
        %v834 = vunpack.c.l.b16 %v667
        %v835 = vunpack.c.h.b16 %v667
        %v836 = vunpack.c.l.b16 %v668
        %v837 = vunpack.c.h.b16 %v668
        %v838 = vunpack.c.l.b16 %v669
        %v839 = vunpack.c.h.b16 %v669
        %v840 = vunpack.c.l.b16 %v670
        %v841 = vunpack.c.h.b16 %v670
        %v842 = vunpack.c.l.b16 %v671
        %v843 = vunpack.c.h.b16 %v671
        %v844 = vunpack.c.l.b16 %v672
        %v845 = vunpack.c.h.b16 %v672
        %v846 = vunpack.c.l.b16 %v673
        %v847 = vunpack.c.h.b16 %v673
        %v848 = vunpack.c.l.b16 %v674
        %v849 = vunpack.c.h.b16 %v674
        %v850 = vunpack.c.l.b16 %v675
        %v851 = vunpack.c.h.b16 %v675
        %v852 = vunpack.c.l.b16 %v676
        %v853 = vunpack.c.h.b16 %v676
        %v854 = vunpack.c.l.b16 %v677
        %v855 = vunpack.c.h.b16 %v677
        %v856 = vunpack.c.l.b16 %v678
        %v857 = vunpack.c.h.b16 %v678
        %v858 = vunpack.c.l.b16 %v679
        %v859 = vunpack.c.h.b16 %v679
        %v860 = vunpack.c.l.b16 %v680
        %v861 = vunpack.c.h.b16 %v680
        %v862 = vunpack.c.l.b16 %v681
        %v863 = vunpack.c.h.b16 %v681
        %v864 = vunpack.c.l.b16 %v682
        %v865 = vunpack.c.h.b16 %v682
        %v866 = vunpack.c.l.b16 %v683
        %v867 = vunpack.c.h.b16 %v683
        %v868 = vunpack.c.l.b16 %v684
        %v869 = vunpack.c.h.b16 %v684
        %v870 = vunpack.c.l.b16 %v685
        %v871 = vunpack.c.h.b16 %v685
        %v872 = vunpack.c.l.b16 %v686
        %v873 = vunpack.c.h.b16 %v686
        %v874 = vunpack.c.l.b16 %v687
        %v875 = vunpack.c.h.b16 %v687
        %v876 = vunpack.c.l.b16 %v688
        %v877 = vunpack.c.h.b16 %v688
        %v878 = vunpack.c.l.b16 %v689
        %v879 = vunpack.c.h.b16 %v689
        %v880 = vunpack.c.l.b16 %v690
        %v881 = vunpack.c.h.b16 %v690
        %v882 = vunpack.c.l.b16 %v691
        %v883 = vunpack.c.h.b16 %v691
        %v884 = vunpack.c.l.b16 %v692
        %v885 = vunpack.c.h.b16 %v692
        %v886 = vunpack.c.l.b16 %v693
        %v887 = vunpack.c.h.b16 %v693
        %v888 = vunpack.c.l.b16 %v694
        %v889 = vunpack.c.h.b16 %v694
        %v890 = vunpack.c.l.b16 %v695
        %v891 = vunpack.c.h.b16 %v695
        %v892 = vunpack.c.l.b16 %v696
        %v893 = vunpack.c.h.b16 %v696
        %v894 = vunpack.c.l.b16 %v697
        %v895 = vunpack.c.h.b16 %v697
        %v896 = vunpack.c.l.b16 %v698
        %v897 = vunpack.c.h.b16 %v698
        %v898 = vunpack.c.l.b16 %v699
        %v899 = vunpack.c.h.b16 %v699
        %v900 = vunpack.c.l.b16 %v700
        %v901 = vunpack.c.h.b16 %v700
        %v902 = vunpack.c.l.b16 %v701
        %v903 = vunpack.c.h.b16 %v701
        %v904 = vunpack.c.l.b16 %v702
        %v905 = vunpack.c.h.b16 %v702
        %v906 = vunpack.c.l.b16 %v703
        %v907 = vunpack.c.h.b16 %v703
        %v908 = vunpack.c.l.b16 %v704
        %v909 = vunpack.c.h.b16 %v704
        %v910 = vunpack.c.l.b16 %v705
        %v911 = vunpack.c.h.b16 %v705
        %v912 = vunpack.c.l.b16 %v706
        %v913 = vunpack.c.h.b16 %v706
        %v914 = vunpack.c.l.b16 %v707
        %v915 = vunpack.c.h.b16 %v707
        %v916 = vunpack.c.l.b16 %v708
        %v917 = vunpack.c.h.b16 %v708
        %v918 = vunpack.c.l.b16 %v709
        %v919 = vunpack.c.h.b16 %v709
        %v920 = vunpack.c.l.b16 %v710
        %v921 = vunpack.c.h.b16 %v710
        %v922 = vunpack.c.l.b16 %v711
        %v923 = vunpack.c.h.b16 %v711
        %v924 = vunpack.c.l.b16 %v712
        %v925 = vunpack.c.h.b16 %v712
        %v926 = vunpack.c.l.b16 %v713
        %v927 = vunpack.c.h.b16 %v713
        %v928 = vpack.c.b16 %v804, %v800
        %v929 = vpack.c.b16 %v805, %v801
        %v930 = vpack.c.b16 %v806, %v802
        %v931 = vpack.c.b16 %v807, %v803
        %v932 = vpack.c.b16 %v812, %v808
        %v933 = vpack.c.b16 %v813, %v809
        %v934 = vpack.c.b16 %v814, %v810
        %v935 = vpack.c.b16 %v815, %v811
        %v936 = vpack.c.b16 %v820, %v816
        %v937 = vpack.c.b16 %v821, %v817
        %v938 = vpack.c.b16 %v822, %v818
        %v939 = vpack.c.b16 %v823, %v819
        %v940 = vpack.c.b16 %v828, %v824
        %v941 = vpack.c.b16 %v829, %v825
        %v942 = vpack.c.b16 %v830, %v826
        %v943 = vpack.c.b16 %v831, %v827
        %v944 = vpack.c.b16 %v836, %v832
        %v945 = vpack.c.b16 %v837, %v833
        %v946 = vpack.c.b16 %v838, %v834
        %v947 = vpack.c.b16 %v839, %v835
        %v948 = vpack.c.b16 %v844, %v840
        %v949 = vpack.c.b16 %v845, %v841
        %v950 = vpack.c.b16 %v846, %v842
        %v951 = vpack.c.b16 %v847, %v843
        %v952 = vpack.c.b16 %v852, %v848
        %v953 = vpack.c.b16 %v853, %v849
        %v954 = vpack.c.b16 %v854, %v850
        %v955 = vpack.c.b16 %v855, %v851
        %v956 = vpack.c.b16 %v860, %v856
        %v957 = vpack.c.b16 %v861, %v857
        %v958 = vpack.c.b16 %v862, %v858
        %v959 = vpack.c.b16 %v863, %v859
        %v960 = vpack.c.b16 %v868, %v864
        %v961 = vpack.c.b16 %v869, %v865
        %v962 = vpack.c.b16 %v870, %v866
        %v963 = vpack.c.b16 %v871, %v867
        %v964 = vpack.c.b16 %v876, %v872
        %v965 = vpack.c.b16 %v877, %v873
        %v966 = vpack.c.b16 %v878, %v874
        %v967 = vpack.c.b16 %v879, %v875
        %v968 = vpack.c.b16 %v884, %v880
        %v969 = vpack.c.b16 %v885, %v881
        %v970 = vpack.c.b16 %v886, %v882
        %v971 = vpack.c.b16 %v887, %v883
        %v972 = vpack.c.b16 %v892, %v888
        %v973 = vpack.c.b16 %v893, %v889
        %v974 = vpack.c.b16 %v894, %v890
        %v975 = vpack.c.b16 %v895, %v891
        %v976 = vpack.c.b16 %v900, %v896
        %v977 = vpack.c.b16 %v901, %v897
        %v978 = vpack.c.b16 %v902, %v898
        %v979 = vpack.c.b16 %v903, %v899
        %v980 = vpack.c.b16 %v908, %v904
        %v981 = vpack.c.b16 %v909, %v905
        %v982 = vpack.c.b16 %v910, %v906
        %v983 = vpack.c.b16 %v911, %v907
        %v984 = vpack.c.b16 %v916, %v912
        %v985 = vpack.c.b16 %v917, %v913
        %v986 = vpack.c.b16 %v918, %v914
        %v987 = vpack.c.b16 %v919, %v915
        %v988 = vpack.c.b16 %v924, %v920
        %v989 = vpack.c.b16 %v925, %v921
        %v990 = vpack.c.b16 %v926, %v922
        %v991 = vpack.c.b16 %v927, %v923
        %1056 = vmatprep.subr.bf16.mxu0 %v929
        %1057 = vmatpush1.bf16.msra.mxu0 %v928
        %1058 = vmatprep.subr.bf16.mxu0 %v933
        %1059 = vmatpush1.bf16.msra.mxu0 %v932
        %1060 = vmatprep.subr.bf16.mxu0 %v937
        %1061 = vmatpush1.bf16.msra.mxu0 %v936
        %1062 = vmatprep.subr.bf16.mxu0 %v941
        %1063 = vmatpush1.bf16.msra.mxu0 %v940
        %1064 = vmatprep.subr.bf16.mxu0 %v945
        %1065 = vmatpush1.bf16.msra.mxu0 %v944
        %1066 = vmatprep.subr.bf16.mxu0 %v949
        %1067 = vmatpush1.bf16.msra.mxu0 %v948
        %1068 = vmatprep.subr.bf16.mxu0 %v953
        %1069 = vmatpush1.bf16.msra.mxu0 %v952
        %1070 = vmatprep.subr.bf16.mxu0 %v957
        %1071 = vmatpush1.bf16.msra.mxu0 %v956
        %1072 = vmatprep.subr.bf16.mxu0 %v961
        %1073 = vmatpush1.bf16.msra.mxu0 %v960
        %1074 = vmatprep.subr.bf16.mxu0 %v965
        %1075 = vmatpush1.bf16.msra.mxu0 %v964
        %1076 = vmatprep.subr.bf16.mxu0 %v969
        %1077 = vmatpush1.bf16.msra.mxu0 %v968
        %1078 = vmatprep.subr.bf16.mxu0 %v973
        %1079 = vmatpush1.bf16.msra.mxu0 %v972
        %1080 = vmatprep.subr.bf16.mxu0 %v977
        %1081 = vmatpush1.bf16.msra.mxu0 %v976
        %1082 = vmatprep.subr.bf16.mxu0 %v981
        %1083 = vmatpush1.bf16.msra.mxu0 %v980
        %1084 = vmatprep.subr.bf16.mxu0 %v985
        %1085 = vmatpush1.bf16.msra.mxu0 %v984
        %1086 = vmatprep.subr.bf16.mxu0 %v989
        %1087 = vmatpush1.bf16.msra.mxu0 %v988
        %1088 = vmatprep.mubr.bf16.mxu0 %v635
        %1089 = vmatmul.mubr.bf16.gmra.mrb[0].mxu0 %v634
        %v1090 = vpop.f32.mrb[0].mxu0
        %v1091 = vadd.f32 %v719, %v1090
        %v1092 = vpop.f32.mrb[0].mxu0
        %v1093 = vadd.f32 %v723, %v1092
        %v1094 = vpop.f32.mrb[0].mxu0
        %v1095 = vadd.f32 %v719, %v1094
        %v1096 = vpop.f32.mrb[0].mxu0
        %v1097 = vadd.f32 %v723, %v1096
        %1098 = vmatprep.mubr.bf16.mxu0 %v637
        %1099 = vmatmul.mubr.bf16.gmra.mrb[0].mxu0 %v636
        %v1100 = vpop.f32.mrb[0].mxu0
        %v1101 = vadd.f32 %v719, %v1100
        %v1102 = vpop.f32.mrb[0].mxu0
        %v1103 = vadd.f32 %v723, %v1102
        %v1104 = vpop.f32.mrb[0].mxu0
        %v1105 = vadd.f32 %v719, %v1104
        %v1106 = vpop.f32.mrb[0].mxu0
        %v1107 = vadd.f32 %v723, %v1106
        %1108 = vmatprep.mubr.bf16.mxu0 %v639
        %1109 = vmatmul.mubr.bf16.gmra.mrb[0].mxu0 %v638
        %v1110 = vpop.f32.mrb[0].mxu0
        %v1111 = vadd.f32 %v719, %v1110
        %v1112 = vpop.f32.mrb[0].mxu0
        %v1113 = vadd.f32 %v723, %v1112
        %v1114 = vpop.f32.mrb[0].mxu0
        %v1115 = vadd.f32 %v719, %v1114
        %v1116 = vpop.f32.mrb[0].mxu0
        %v1117 = vadd.f32 %v723, %v1116
        %1118 = vmatprep.mubr.bf16.mxu0 %v641
        %1119 = vmatmul.mubr.bf16.gmra.mrb[0].mxu0 %v640
        %v1120 = vpop.f32.mrb[0].mxu0
        %v1121 = vadd.f32 %v719, %v1120
        %v1122 = vpop.f32.mrb[0].mxu0
        %v1123 = vadd.f32 %v723, %v1122
        %v1124 = vpop.f32.mrb[0].mxu0
        %v1125 = vadd.f32 %v719, %v1124
        %v1126 = vpop.f32.mrb[0].mxu0
        %v1127 = vadd.f32 %v723, %v1126
        %1128 = vmatprep.mubr.bf16.mxu0 %v643
        %1129 = vmatmul.mubr.bf16.gmra.mrb[0].mxu0 %v642
        %v1130 = vpop.f32.mrb[0].mxu0
        %v1131 = vadd.f32 %v719, %v1130
        %v1132 = vpop.f32.mrb[0].mxu0
        %v1133 = vadd.f32 %v723, %v1132
        %v1134 = vpop.f32.mrb[0].mxu0
        %v1135 = vadd.f32 %v719, %v1134
        %v1136 = vpop.f32.mrb[0].mxu0
        %v1137 = vadd.f32 %v723, %v1136
        %1138 = vmatprep.mubr.bf16.mxu0 %v645
        %1139 = vmatmul.mubr.bf16.gmra.mrb[0].mxu0 %v644
        %v1140 = vpop.f32.mrb[0].mxu0
        %v1141 = vadd.f32 %v719, %v1140
        %v1142 = vpop.f32.mrb[0].mxu0
        %v1143 = vadd.f32 %v723, %v1142
        %v1144 = vpop.f32.mrb[0].mxu0
        %v1145 = vadd.f32 %v719, %v1144
        %v1146 = vpop.f32.mrb[0].mxu0
        %v1147 = vadd.f32 %v723, %v1146
        %1148 = vmatprep.mubr.bf16.mxu0 %v647
        %1149 = vmatmul.mubr.bf16.gmra.mrb[0].mxu0 %v646
        %v1150 = vpop.f32.mrb[0].mxu0
        %v1151 = vadd.f32 %v719, %v1150
        %v1152 = vpop.f32.mrb[0].mxu0
        %v1153 = vadd.f32 %v723, %v1152
        %v1154 = vpop.f32.mrb[0].mxu0
        %v1155 = vadd.f32 %v719, %v1154
        %v1156 = vpop.f32.mrb[0].mxu0
        %v1157 = vadd.f32 %v723, %v1156
        %1158 = vmatprep.mubr.bf16.mxu0 %v649
        %1159 = vmatmul.mubr.bf16.gmra.mrb[0].mxu0 %v648
        %v1160 = vpop.f32.mrb[0].mxu0
        %v1161 = vadd.f32 %v719, %v1160
        %v1162 = vpop.f32.mrb[0].mxu0
        %v1163 = vadd.f32 %v723, %v1162
        %v1164 = vpop.f32.mrb[0].mxu0
        %v1165 = vadd.f32 %v719, %v1164
        %v1166 = vpop.f32.mrb[0].mxu0
        %v1167 = vadd.f32 %v723, %v1166
        %1168 = vdwg.mxu0
        %1169 = vmatprep.subr.bf16.mxu0 %v931
        %1170 = vmatpush1.bf16.msra.mxu0 %v930
        %1171 = vmatprep.subr.bf16.mxu0 %v935
        %1172 = vmatpush1.bf16.msra.mxu0 %v934
        %1173 = vmatprep.subr.bf16.mxu0 %v939
        %1174 = vmatpush1.bf16.msra.mxu0 %v938
        %1175 = vmatprep.subr.bf16.mxu0 %v943
        %1176 = vmatpush1.bf16.msra.mxu0 %v942
        %1177 = vmatprep.subr.bf16.mxu0 %v947
        %1178 = vmatpush1.bf16.msra.mxu0 %v946
        %1179 = vmatprep.subr.bf16.mxu0 %v951
        %1180 = vmatpush1.bf16.msra.mxu0 %v950
        %1181 = vmatprep.subr.bf16.mxu0 %v955
        %1182 = vmatpush1.bf16.msra.mxu0 %v954
        %1183 = vmatprep.subr.bf16.mxu0 %v959
        %1184 = vmatpush1.bf16.msra.mxu0 %v958
        %1185 = vmatprep.subr.bf16.mxu0 %v963
        %1186 = vmatpush1.bf16.msra.mxu0 %v962
        %1187 = vmatprep.subr.bf16.mxu0 %v967
        %1188 = vmatpush1.bf16.msra.mxu0 %v966
        %1189 = vmatprep.subr.bf16.mxu0 %v971
        %1190 = vmatpush1.bf16.msra.mxu0 %v970
        %1191 = vmatprep.subr.bf16.mxu0 %v975
        %1192 = vmatpush1.bf16.msra.mxu0 %v974
        %1193 = vmatprep.subr.bf16.mxu0 %v979
        %1194 = vmatpush1.bf16.msra.mxu0 %v978
        %1195 = vmatprep.subr.bf16.mxu0 %v983
        %1196 = vmatpush1.bf16.msra.mxu0 %v982
        %1197 = vmatprep.subr.bf16.mxu0 %v987
        %1198 = vmatpush1.bf16.msra.mxu0 %v986
        %1199 = vmatprep.subr.bf16.mxu0 %v991
        %1200 = vmatpush1.bf16.msra.mxu0 %v990
        %1201 = vmatprep.mubr.bf16.mxu0 %v635
        %1202 = vmatmul.mubr.bf16.gmra.mrb[0].mxu0 %v634
        %v1203 = vpop.f32.mrb[0].mxu0
        %v1204 = vadd.f32 %v727, %v1203
        %v1205 = vpop.f32.mrb[0].mxu0
        %v1206 = vadd.f32 %v731, %v1205
        %v1207 = vpop.f32.mrb[0].mxu0
        %v1208 = vadd.f32 %v727, %v1207
        %v1209 = vpop.f32.mrb[0].mxu0
        %v1210 = vadd.f32 %v731, %v1209
        %1211 = vmatprep.mubr.bf16.mxu0 %v637
        %1212 = vmatmul.mubr.bf16.gmra.mrb[0].mxu0 %v636
        %v1213 = vpop.f32.mrb[0].mxu0
        %v1214 = vadd.f32 %v727, %v1213
        %v1215 = vpop.f32.mrb[0].mxu0
        %v1216 = vadd.f32 %v731, %v1215
        %v1217 = vpop.f32.mrb[0].mxu0
        %v1218 = vadd.f32 %v727, %v1217
        %v1219 = vpop.f32.mrb[0].mxu0
        %v1220 = vadd.f32 %v731, %v1219
        %1221 = vmatprep.mubr.bf16.mxu0 %v639
        %1222 = vmatmul.mubr.bf16.gmra.mrb[0].mxu0 %v638
        %v1223 = vpop.f32.mrb[0].mxu0
        %v1224 = vadd.f32 %v727, %v1223
        %v1225 = vpop.f32.mrb[0].mxu0
        %v1226 = vadd.f32 %v731, %v1225
        %v1227 = vpop.f32.mrb[0].mxu0
        %v1228 = vadd.f32 %v727, %v1227
        %v1229 = vpop.f32.mrb[0].mxu0
        %v1230 = vadd.f32 %v731, %v1229
        %1231 = vmatprep.mubr.bf16.mxu0 %v641
        %1232 = vmatmul.mubr.bf16.gmra.mrb[0].mxu0 %v640
        %v1233 = vpop.f32.mrb[0].mxu0
        %v1234 = vadd.f32 %v727, %v1233
        %v1235 = vpop.f32.mrb[0].mxu0
        %v1236 = vadd.f32 %v731, %v1235
        %v1237 = vpop.f32.mrb[0].mxu0
        %v1238 = vadd.f32 %v727, %v1237
        %v1239 = vpop.f32.mrb[0].mxu0
        %v1240 = vadd.f32 %v731, %v1239
        %1241 = vmatprep.mubr.bf16.mxu0 %v643
        %1242 = vmatmul.mubr.bf16.gmra.mrb[0].mxu0 %v642
        %v1243 = vpop.f32.mrb[0].mxu0
        %v1244 = vadd.f32 %v727, %v1243
        %v1245 = vpop.f32.mrb[0].mxu0
        %v1246 = vadd.f32 %v731, %v1245
        %v1247 = vpop.f32.mrb[0].mxu0
        %v1248 = vadd.f32 %v727, %v1247
        %v1249 = vpop.f32.mrb[0].mxu0
        %v1250 = vadd.f32 %v731, %v1249
        %1251 = vmatprep.mubr.bf16.mxu0 %v645
        %1252 = vmatmul.mubr.bf16.gmra.mrb[0].mxu0 %v644
        %v1253 = vpop.f32.mrb[0].mxu0
        %v1254 = vadd.f32 %v727, %v1253
        %v1255 = vpop.f32.mrb[0].mxu0
        %v1256 = vadd.f32 %v731, %v1255
        %v1257 = vpop.f32.mrb[0].mxu0
        %v1258 = vadd.f32 %v727, %v1257
        %v1259 = vpop.f32.mrb[0].mxu0
        %v1260 = vadd.f32 %v731, %v1259
        %1261 = vmatprep.mubr.bf16.mxu0 %v647
        %1262 = vmatmul.mubr.bf16.gmra.mrb[0].mxu0 %v646
        %v1263 = vpop.f32.mrb[0].mxu0
        %v1264 = vadd.f32 %v727, %v1263
        %v1265 = vpop.f32.mrb[0].mxu0
        %v1266 = vadd.f32 %v731, %v1265
        %v1267 = vpop.f32.mrb[0].mxu0
        %v1268 = vadd.f32 %v727, %v1267
        %v1269 = vpop.f32.mrb[0].mxu0
        %v1270 = vadd.f32 %v731, %v1269
        %1271 = vmatprep.mubr.bf16.mxu0 %v649
        %1272 = vmatmul.mubr.bf16.gmra.mrb[0].mxu0 %v648
        %v1273 = vpop.f32.mrb[0].mxu0
        %v1274 = vadd.f32 %v727, %v1273
        %v1275 = vpop.f32.mrb[0].mxu0
        %v1276 = vadd.f32 %v731, %v1275
        %v1277 = vpop.f32.mrb[0].mxu0
        %v1278 = vadd.f32 %v727, %v1277
        %v1279 = vpop.f32.mrb[0].mxu0
        %v1280 = vadd.f32 %v731, %v1279
        %1281 = vdwg.mxu0
        %v1282 = vmul.f32 %v1091, %v1091
        %v1283 = vmul.f32 %v1093, %v1093
        %v1284 = vmul.f32 %v1204, %v1204
        %v1285 = vmul.f32 %v1206, %v1206
        %v1286 = vmul.f32 %v1095, %v1095
        %v1287 = vmul.f32 %v1097, %v1097
        %v1288 = vmul.f32 %v1208, %v1208
        %v1289 = vmul.f32 %v1210, %v1210
        %v1290 = vmul.f32 %v1101, %v1101
        %v1291 = vmul.f32 %v1103, %v1103
        %v1292 = vmul.f32 %v1214, %v1214
        %v1293 = vmul.f32 %v1216, %v1216
        %v1294 = vmul.f32 %v1105, %v1105
        %v1295 = vmul.f32 %v1107, %v1107
        %v1296 = vmul.f32 %v1218, %v1218
        %v1297 = vmul.f32 %v1220, %v1220
        %v1298 = vmul.f32 %v1111, %v1111
        %v1299 = vmul.f32 %v1113, %v1113
        %v1300 = vmul.f32 %v1224, %v1224
        %v1301 = vmul.f32 %v1226, %v1226
        %v1302 = vmul.f32 %v1115, %v1115
        %v1303 = vmul.f32 %v1117, %v1117
        %v1304 = vmul.f32 %v1228, %v1228
        %v1305 = vmul.f32 %v1230, %v1230
        %v1306 = vmul.f32 %v1121, %v1121
        %v1307 = vmul.f32 %v1123, %v1123
        %v1308 = vmul.f32 %v1234, %v1234
        %v1309 = vmul.f32 %v1236, %v1236
        %v1310 = vmul.f32 %v1125, %v1125
        %v1311 = vmul.f32 %v1127, %v1127
        %v1312 = vmul.f32 %v1238, %v1238
        %v1313 = vmul.f32 %v1240, %v1240
        %v1314 = vmul.f32 %v1131, %v1131
        %v1315 = vmul.f32 %v1133, %v1133
        %v1316 = vmul.f32 %v1244, %v1244
        %v1317 = vmul.f32 %v1246, %v1246
        %v1318 = vmul.f32 %v1135, %v1135
        %v1319 = vmul.f32 %v1137, %v1137
        %v1320 = vmul.f32 %v1248, %v1248
        %v1321 = vmul.f32 %v1250, %v1250
        %v1322 = vmul.f32 %v1141, %v1141
        %v1323 = vmul.f32 %v1143, %v1143
        %v1324 = vmul.f32 %v1254, %v1254
        %v1325 = vmul.f32 %v1256, %v1256
        %v1326 = vmul.f32 %v1145, %v1145
        %v1327 = vmul.f32 %v1147, %v1147
        %v1328 = vmul.f32 %v1258, %v1258
        %v1329 = vmul.f32 %v1260, %v1260
        %v1330 = vmul.f32 %v1151, %v1151
        %v1331 = vmul.f32 %v1153, %v1153
        %v1332 = vmul.f32 %v1264, %v1264
        %v1333 = vmul.f32 %v1266, %v1266
        %v1334 = vmul.f32 %v1155, %v1155
        %v1335 = vmul.f32 %v1157, %v1157
        %v1336 = vmul.f32 %v1268, %v1268
        %v1337 = vmul.f32 %v1270, %v1270
        %v1338 = vmul.f32 %v1161, %v1161
        %v1339 = vmul.f32 %v1163, %v1163
        %v1340 = vmul.f32 %v1274, %v1274
        %v1341 = vmul.f32 %v1276, %v1276
        %v1342 = vmul.f32 %v1165, %v1165
        %v1343 = vmul.f32 %v1167, %v1167
        %v1344 = vmul.f32 %v1278, %v1278
        %v1345 = vmul.f32 %v1280, %v1280
        %v1346 = vmul.f32 %v1091, %v1282
        %v1347 = vmul.f32 %v1093, %v1283
        %v1348 = vmul.f32 %v1204, %v1284
        %v1349 = vmul.f32 %v1206, %v1285
        %v1350 = vmul.f32 %v1095, %v1286
        %v1351 = vmul.f32 %v1097, %v1287
        %v1352 = vmul.f32 %v1208, %v1288
        %v1353 = vmul.f32 %v1210, %v1289
        %v1354 = vmul.f32 %v1101, %v1290
        %v1355 = vmul.f32 %v1103, %v1291
        %v1356 = vmul.f32 %v1214, %v1292
        %v1357 = vmul.f32 %v1216, %v1293
        %v1358 = vmul.f32 %v1105, %v1294
        %v1359 = vmul.f32 %v1107, %v1295
        %v1360 = vmul.f32 %v1218, %v1296
        %v1361 = vmul.f32 %v1220, %v1297
        %v1362 = vmul.f32 %v1111, %v1298
        %v1363 = vmul.f32 %v1113, %v1299
        %v1364 = vmul.f32 %v1224, %v1300
        %v1365 = vmul.f32 %v1226, %v1301
        %v1366 = vmul.f32 %v1115, %v1302
        %v1367 = vmul.f32 %v1117, %v1303
        %v1368 = vmul.f32 %v1228, %v1304
        %v1369 = vmul.f32 %v1230, %v1305
        %v1370 = vmul.f32 %v1121, %v1306
        %v1371 = vmul.f32 %v1123, %v1307
        %v1372 = vmul.f32 %v1234, %v1308
        %v1373 = vmul.f32 %v1236, %v1309
        %v1374 = vmul.f32 %v1125, %v1310
        %v1375 = vmul.f32 %v1127, %v1311
        %v1376 = vmul.f32 %v1238, %v1312
        %v1377 = vmul.f32 %v1240, %v1313
        %v1378 = vmul.f32 %v1131, %v1314
        %v1379 = vmul.f32 %v1133, %v1315
        %v1380 = vmul.f32 %v1244, %v1316
        %v1381 = vmul.f32 %v1246, %v1317
        %v1382 = vmul.f32 %v1135, %v1318
        %v1383 = vmul.f32 %v1137, %v1319
        %v1384 = vmul.f32 %v1248, %v1320
        %v1385 = vmul.f32 %v1250, %v1321
        %v1386 = vmul.f32 %v1141, %v1322
        %v1387 = vmul.f32 %v1143, %v1323
        %v1388 = vmul.f32 %v1254, %v1324
        %v1389 = vmul.f32 %v1256, %v1325
        %v1390 = vmul.f32 %v1145, %v1326
        %v1391 = vmul.f32 %v1147, %v1327
        %v1392 = vmul.f32 %v1258, %v1328
        %v1393 = vmul.f32 %v1260, %v1329
        %v1394 = vmul.f32 %v1151, %v1330
        %v1395 = vmul.f32 %v1153, %v1331
        %v1396 = vmul.f32 %v1264, %v1332
        %v1397 = vmul.f32 %v1266, %v1333
        %v1398 = vmul.f32 %v1155, %v1334
        %v1399 = vmul.f32 %v1157, %v1335
        %v1400 = vmul.f32 %v1268, %v1336
        %v1401 = vmul.f32 %v1270, %v1337
        %v1402 = vmul.f32 %v1161, %v1338
        %v1403 = vmul.f32 %v1163, %v1339
        %v1404 = vmul.f32 %v1274, %v1340
        %v1405 = vmul.f32 %v1276, %v1341
        %v1406 = vmul.f32 %v1165, %v1342
        %v1407 = vmul.f32 %v1167, %v1343
        %v1408 = vmul.f32 %v1278, %v1344
        %v1409 = vmul.f32 %v1280, %v1345
        %v1410 = vmul.f32 %v1346, 0.044715
        %v1411 = vmul.f32 %v1347, 0.044715
        %v1412 = vmul.f32 %v1348, 0.044715
        %v1413 = vmul.f32 %v1349, 0.044715
        %v1414 = vmul.f32 %v1350, 0.044715
        %v1415 = vmul.f32 %v1351, 0.044715
        %v1416 = vmul.f32 %v1352, 0.044715
        %v1417 = vmul.f32 %v1353, 0.044715
        %v1418 = vmul.f32 %v1354, 0.044715
        %v1419 = vmul.f32 %v1355, 0.044715
        %v1420 = vmul.f32 %v1356, 0.044715
        %v1421 = vmul.f32 %v1357, 0.044715
        %v1422 = vmul.f32 %v1358, 0.044715
        %v1423 = vmul.f32 %v1359, 0.044715
        %v1424 = vmul.f32 %v1360, 0.044715
        %v1425 = vmul.f32 %v1361, 0.044715
        %v1426 = vmul.f32 %v1362, 0.044715
        %v1427 = vmul.f32 %v1363, 0.044715
        %v1428 = vmul.f32 %v1364, 0.044715
        %v1429 = vmul.f32 %v1365, 0.044715
        %v1430 = vmul.f32 %v1366, 0.044715
        %v1431 = vmul.f32 %v1367, 0.044715
        %v1432 = vmul.f32 %v1368, 0.044715
        %v1433 = vmul.f32 %v1369, 0.044715
        %v1434 = vmul.f32 %v1370, 0.044715
        %v1435 = vmul.f32 %v1371, 0.044715
        %v1436 = vmul.f32 %v1372, 0.044715
        %v1437 = vmul.f32 %v1373, 0.044715
        %v1438 = vmul.f32 %v1374, 0.044715
        %v1439 = vmul.f32 %v1375, 0.044715
        %v1440 = vmul.f32 %v1376, 0.044715
        %v1441 = vmul.f32 %v1377, 0.044715
        %v1442 = vmul.f32 %v1378, 0.044715
        %v1443 = vmul.f32 %v1379, 0.044715
        %v1444 = vmul.f32 %v1380, 0.044715
        %v1445 = vmul.f32 %v1381, 0.044715
        %v1446 = vmul.f32 %v1382, 0.044715
        %v1447 = vmul.f32 %v1383, 0.044715
        %v1448 = vmul.f32 %v1384, 0.044715
        %v1449 = vmul.f32 %v1385, 0.044715
        %v1450 = vmul.f32 %v1386, 0.044715
        %v1451 = vmul.f32 %v1387, 0.044715
        %v1452 = vmul.f32 %v1388, 0.044715
        %v1453 = vmul.f32 %v1389, 0.044715
        %v1454 = vmul.f32 %v1390, 0.044715
        %v1455 = vmul.f32 %v1391, 0.044715
        %v1456 = vmul.f32 %v1392, 0.044715
        %v1457 = vmul.f32 %v1393, 0.044715
        %v1458 = vmul.f32 %v1394, 0.044715
        %v1459 = vmul.f32 %v1395, 0.044715
        %v1460 = vmul.f32 %v1396, 0.044715
        %v1461 = vmul.f32 %v1397, 0.044715
        %v1462 = vmul.f32 %v1398, 0.044715
        %v1463 = vmul.f32 %v1399, 0.044715
        %v1464 = vmul.f32 %v1400, 0.044715
        %v1465 = vmul.f32 %v1401, 0.044715
        %v1466 = vmul.f32 %v1402, 0.044715
        %v1467 = vmul.f32 %v1403, 0.044715
        %v1468 = vmul.f32 %v1404, 0.044715
        %v1469 = vmul.f32 %v1405, 0.044715
        %v1470 = vmul.f32 %v1406, 0.044715
        %v1471 = vmul.f32 %v1407, 0.044715
        %v1472 = vmul.f32 %v1408, 0.044715
        %v1473 = vmul.f32 %v1409, 0.044715
        %v1474 = vadd.f32 %v1091, %v1410
        %v1475 = vadd.f32 %v1093, %v1411
        %v1476 = vadd.f32 %v1204, %v1412
        %v1477 = vadd.f32 %v1206, %v1413
        %v1478 = vadd.f32 %v1095, %v1414
        %v1479 = vadd.f32 %v1097, %v1415
        %v1480 = vadd.f32 %v1208, %v1416
        %v1481 = vadd.f32 %v1210, %v1417
        %v1482 = vadd.f32 %v1101, %v1418
        %v1483 = vadd.f32 %v1103, %v1419
        %v1484 = vadd.f32 %v1214, %v1420
        %v1485 = vadd.f32 %v1216, %v1421
        %v1486 = vadd.f32 %v1105, %v1422
        %v1487 = vadd.f32 %v1107, %v1423
        %v1488 = vadd.f32 %v1218, %v1424
        %v1489 = vadd.f32 %v1220, %v1425
        %v1490 = vadd.f32 %v1111, %v1426
        %v1491 = vadd.f32 %v1113, %v1427
        %v1492 = vadd.f32 %v1224, %v1428
        %v1493 = vadd.f32 %v1226, %v1429
        %v1494 = vadd.f32 %v1115, %v1430
        %v1495 = vadd.f32 %v1117, %v1431
        %v1496 = vadd.f32 %v1228, %v1432
        %v1497 = vadd.f32 %v1230, %v1433
        %v1498 = vadd.f32 %v1121, %v1434
        %v1499 = vadd.f32 %v1123, %v1435
        %v1500 = vadd.f32 %v1234, %v1436
        %v1501 = vadd.f32 %v1236, %v1437
        %v1502 = vadd.f32 %v1125, %v1438
        %v1503 = vadd.f32 %v1127, %v1439
        %v1504 = vadd.f32 %v1238, %v1440
        %v1505 = vadd.f32 %v1240, %v1441
        %v1506 = vadd.f32 %v1131, %v1442
        %v1507 = vadd.f32 %v1133, %v1443
        %v1508 = vadd.f32 %v1244, %v1444
        %v1509 = vadd.f32 %v1246, %v1445
        %v1510 = vadd.f32 %v1135, %v1446
        %v1511 = vadd.f32 %v1137, %v1447
        %v1512 = vadd.f32 %v1248, %v1448
        %v1513 = vadd.f32 %v1250, %v1449
        %v1514 = vadd.f32 %v1141, %v1450
        %v1515 = vadd.f32 %v1143, %v1451
        %v1516 = vadd.f32 %v1254, %v1452
        %v1517 = vadd.f32 %v1256, %v1453
        %v1518 = vadd.f32 %v1145, %v1454
        %v1519 = vadd.f32 %v1147, %v1455
        %v1520 = vadd.f32 %v1258, %v1456
        %v1521 = vadd.f32 %v1260, %v1457
        %v1522 = vadd.f32 %v1151, %v1458
        %v1523 = vadd.f32 %v1153, %v1459
        %v1524 = vadd.f32 %v1264, %v1460
        %v1525 = vadd.f32 %v1266, %v1461
        %v1526 = vadd.f32 %v1155, %v1462
        %v1527 = vadd.f32 %v1157, %v1463
        %v1528 = vadd.f32 %v1268, %v1464
        %v1529 = vadd.f32 %v1270, %v1465
        %v1530 = vadd.f32 %v1161, %v1466
        %v1531 = vadd.f32 %v1163, %v1467
        %v1532 = vadd.f32 %v1274, %v1468
        %v1533 = vadd.f32 %v1276, %v1469
        %v1534 = vadd.f32 %v1165, %v1470
        %v1535 = vadd.f32 %v1167, %v1471
        %v1536 = vadd.f32 %v1278, %v1472
        %v1537 = vadd.f32 %v1280, %v1473
        %v1538 = vmul.f32 %v1474, 0.7978846
        %v1539 = vmul.f32 %v1475, 0.7978846
        %v1540 = vmul.f32 %v1476, 0.7978846
        %v1541 = vmul.f32 %v1477, 0.7978846
        %v1542 = vmul.f32 %v1478, 0.7978846
        %v1543 = vmul.f32 %v1479, 0.7978846
        %v1544 = vmul.f32 %v1480, 0.7978846
        %v1545 = vmul.f32 %v1481, 0.7978846
        %v1546 = vmul.f32 %v1482, 0.7978846
        %v1547 = vmul.f32 %v1483, 0.7978846
        %v1548 = vmul.f32 %v1484, 0.7978846
        %v1549 = vmul.f32 %v1485, 0.7978846
        %v1550 = vmul.f32 %v1486, 0.7978846
        %v1551 = vmul.f32 %v1487, 0.7978846
        %v1552 = vmul.f32 %v1488, 0.7978846
        %v1553 = vmul.f32 %v1489, 0.7978846
        %v1554 = vmul.f32 %v1490, 0.7978846
        %v1555 = vmul.f32 %v1491, 0.7978846
        %v1556 = vmul.f32 %v1492, 0.7978846
        %v1557 = vmul.f32 %v1493, 0.7978846
        %v1558 = vmul.f32 %v1494, 0.7978846
        %v1559 = vmul.f32 %v1495, 0.7978846
        %v1560 = vmul.f32 %v1496, 0.7978846
        %v1561 = vmul.f32 %v1497, 0.7978846
        %v1562 = vmul.f32 %v1498, 0.7978846
        %v1563 = vmul.f32 %v1499, 0.7978846
        %v1564 = vmul.f32 %v1500, 0.7978846
        %v1565 = vmul.f32 %v1501, 0.7978846
        %v1566 = vmul.f32 %v1502, 0.7978846
        %v1567 = vmul.f32 %v1503, 0.7978846
        %v1568 = vmul.f32 %v1504, 0.7978846
        %v1569 = vmul.f32 %v1505, 0.7978846
        %v1570 = vmul.f32 %v1506, 0.7978846
        %v1571 = vmul.f32 %v1507, 0.7978846
        %v1572 = vmul.f32 %v1508, 0.7978846
        %v1573 = vmul.f32 %v1509, 0.7978846
        %v1574 = vmul.f32 %v1510, 0.7978846
        %v1575 = vmul.f32 %v1511, 0.7978846
        %v1576 = vmul.f32 %v1512, 0.7978846
        %v1577 = vmul.f32 %v1513, 0.7978846
        %v1578 = vmul.f32 %v1514, 0.7978846
        %v1579 = vmul.f32 %v1515, 0.7978846
        %v1580 = vmul.f32 %v1516, 0.7978846
        %v1581 = vmul.f32 %v1517, 0.7978846
        %v1582 = vmul.f32 %v1518, 0.7978846
        %v1583 = vmul.f32 %v1519, 0.7978846
        %v1584 = vmul.f32 %v1520, 0.7978846
        %v1585 = vmul.f32 %v1521, 0.7978846
        %v1586 = vmul.f32 %v1522, 0.7978846
        %v1587 = vmul.f32 %v1523, 0.7978846
        %v1588 = vmul.f32 %v1524, 0.7978846
        %v1589 = vmul.f32 %v1525, 0.7978846
        %v1590 = vmul.f32 %v1526, 0.7978846
        %v1591 = vmul.f32 %v1527, 0.7978846
        %v1592 = vmul.f32 %v1528, 0.7978846
        %v1593 = vmul.f32 %v1529, 0.7978846
        %v1594 = vmul.f32 %v1530, 0.7978846
        %v1595 = vmul.f32 %v1531, 0.7978846
        %v1596 = vmul.f32 %v1532, 0.7978846
        %v1597 = vmul.f32 %v1533, 0.7978846
        %v1598 = vmul.f32 %v1534, 0.7978846
        %v1599 = vmul.f32 %v1535, 0.7978846
        %v1600 = vmul.f32 %v1536, 0.7978846
        %v1601 = vmul.f32 %v1537, 0.7978846
        %v1602 = vtanh.pop %v1538
        %v1603 = vtanh.pop %v1539
        %v1604 = vtanh.pop %v1540
        %v1605 = vtanh.pop %v1541
        %v1606 = vtanh.pop %v1542
        %v1607 = vtanh.pop %v1543
        %v1608 = vtanh.pop %v1544
        %v1609 = vtanh.pop %v1545
        %v1610 = vtanh.pop %v1546
        %v1611 = vtanh.pop %v1547
        %v1612 = vtanh.pop %v1548
        %v1613 = vtanh.pop %v1549
        %v1614 = vtanh.pop %v1550
        %v1615 = vtanh.pop %v1551
        %v1616 = vtanh.pop %v1552
        %v1617 = vtanh.pop %v1553
        %v1618 = vtanh.pop %v1554
        %v1619 = vtanh.pop %v1555
        %v1620 = vtanh.pop %v1556
        %v1621 = vtanh.pop %v1557
        %v1622 = vtanh.pop %v1558
        %v1623 = vtanh.pop %v1559
        %v1624 = vtanh.pop %v1560
        %v1625 = vtanh.pop %v1561
        %v1626 = vtanh.pop %v1562
        %v1627 = vtanh.pop %v1563
        %v1628 = vtanh.pop %v1564
        %v1629 = vtanh.pop %v1565
        %v1630 = vtanh.pop %v1566
        %v1631 = vtanh.pop %v1567
        %v1632 = vtanh.pop %v1568
        %v1633 = vtanh.pop %v1569
        %v1634 = vtanh.pop %v1570
        %v1635 = vtanh.pop %v1571
        %v1636 = vtanh.pop %v1572
        %v1637 = vtanh.pop %v1573
        %v1638 = vtanh.pop %v1574
        %v1639 = vtanh.pop %v1575
        %v1640 = vtanh.pop %v1576
        %v1641 = vtanh.pop %v1577
        %v1642 = vtanh.pop %v1578
        %v1643 = vtanh.pop %v1579
        %v1644 = vtanh.pop %v1580
        %v1645 = vtanh.pop %v1581
        %v1646 = vtanh.pop %v1582
        %v1647 = vtanh.pop %v1583
        %v1648 = vtanh.pop %v1584
        %v1649 = vtanh.pop %v1585
        %v1650 = vtanh.pop %v1586
        %v1651 = vtanh.pop %v1587
        %v1652 = vtanh.pop %v1588
        %v1653 = vtanh.pop %v1589
        %v1654 = vtanh.pop %v1590
        %v1655 = vtanh.pop %v1591
        %v1656 = vtanh.pop %v1592
        %v1657 = vtanh.pop %v1593
        %v1658 = vtanh.pop %v1594
        %v1659 = vtanh.pop %v1595
        %v1660 = vtanh.pop %v1596
        %v1661 = vtanh.pop %v1597
        %v1662 = vtanh.pop %v1598
        %v1663 = vtanh.pop %v1599
        %v1664 = vtanh.pop %v1600
        %v1665 = vtanh.pop %v1601
        %v1666 = vadd.f32 %v1602, 1.0
        %v1667 = vadd.f32 %v1603, 1.0
        %v1668 = vadd.f32 %v1604, 1.0
        %v1669 = vadd.f32 %v1605, 1.0
        %v1670 = vadd.f32 %v1606, 1.0
        %v1671 = vadd.f32 %v1607, 1.0
        %v1672 = vadd.f32 %v1608, 1.0
        %v1673 = vadd.f32 %v1609, 1.0
        %v1674 = vadd.f32 %v1610, 1.0
        %v1675 = vadd.f32 %v1611, 1.0
        %v1676 = vadd.f32 %v1612, 1.0
        %v1677 = vadd.f32 %v1613, 1.0
        %v1678 = vadd.f32 %v1614, 1.0
        %v1679 = vadd.f32 %v1615, 1.0
        %v1680 = vadd.f32 %v1616, 1.0
        %v1681 = vadd.f32 %v1617, 1.0
        %v1682 = vadd.f32 %v1618, 1.0
        %v1683 = vadd.f32 %v1619, 1.0
        %v1684 = vadd.f32 %v1620, 1.0
        %v1685 = vadd.f32 %v1621, 1.0
        %v1686 = vadd.f32 %v1622, 1.0
        %v1687 = vadd.f32 %v1623, 1.0
        %v1688 = vadd.f32 %v1624, 1.0
        %v1689 = vadd.f32 %v1625, 1.0
        %v1690 = vadd.f32 %v1626, 1.0
        %v1691 = vadd.f32 %v1627, 1.0
        %v1692 = vadd.f32 %v1628, 1.0
        %v1693 = vadd.f32 %v1629, 1.0
        %v1694 = vadd.f32 %v1630, 1.0
        %v1695 = vadd.f32 %v1631, 1.0
        %v1696 = vadd.f32 %v1632, 1.0
        %v1697 = vadd.f32 %v1633, 1.0
        %v1698 = vadd.f32 %v1634, 1.0
        %v1699 = vadd.f32 %v1635, 1.0
        %v1700 = vadd.f32 %v1636, 1.0
        %v1701 = vadd.f32 %v1637, 1.0
        %v1702 = vadd.f32 %v1638, 1.0
        %v1703 = vadd.f32 %v1639, 1.0
        %v1704 = vadd.f32 %v1640, 1.0
        %v1705 = vadd.f32 %v1641, 1.0
        %v1706 = vadd.f32 %v1642, 1.0
        %v1707 = vadd.f32 %v1643, 1.0
        %v1708 = vadd.f32 %v1644, 1.0
        %v1709 = vadd.f32 %v1645, 1.0
        %v1710 = vadd.f32 %v1646, 1.0
        %v1711 = vadd.f32 %v1647, 1.0
        %v1712 = vadd.f32 %v1648, 1.0
        %v1713 = vadd.f32 %v1649, 1.0
        %v1714 = vadd.f32 %v1650, 1.0
        %v1715 = vadd.f32 %v1651, 1.0
        %v1716 = vadd.f32 %v1652, 1.0
        %v1717 = vadd.f32 %v1653, 1.0
        %v1718 = vadd.f32 %v1654, 1.0
        %v1719 = vadd.f32 %v1655, 1.0
        %v1720 = vadd.f32 %v1656, 1.0
        %v1721 = vadd.f32 %v1657, 1.0
        %v1722 = vadd.f32 %v1658, 1.0
        %v1723 = vadd.f32 %v1659, 1.0
        %v1724 = vadd.f32 %v1660, 1.0
        %v1725 = vadd.f32 %v1661, 1.0
        %v1726 = vadd.f32 %v1662, 1.0
        %v1727 = vadd.f32 %v1663, 1.0
        %v1728 = vadd.f32 %v1664, 1.0
        %v1729 = vadd.f32 %v1665, 1.0
        %v1730 = vmul.f32 %v1666, 0.5
        %v1731 = vmul.f32 %v1667, 0.5
        %v1732 = vmul.f32 %v1668, 0.5
        %v1733 = vmul.f32 %v1669, 0.5
        %v1734 = vmul.f32 %v1670, 0.5
        %v1735 = vmul.f32 %v1671, 0.5
        %v1736 = vmul.f32 %v1672, 0.5
        %v1737 = vmul.f32 %v1673, 0.5
        %v1738 = vmul.f32 %v1674, 0.5
        %v1739 = vmul.f32 %v1675, 0.5
        %v1740 = vmul.f32 %v1676, 0.5
        %v1741 = vmul.f32 %v1677, 0.5
        %v1742 = vmul.f32 %v1678, 0.5
        %v1743 = vmul.f32 %v1679, 0.5
        %v1744 = vmul.f32 %v1680, 0.5
        %v1745 = vmul.f32 %v1681, 0.5
        %v1746 = vmul.f32 %v1682, 0.5
        %v1747 = vmul.f32 %v1683, 0.5
        %v1748 = vmul.f32 %v1684, 0.5
        %v1749 = vmul.f32 %v1685, 0.5
        %v1750 = vmul.f32 %v1686, 0.5
        %v1751 = vmul.f32 %v1687, 0.5
        %v1752 = vmul.f32 %v1688, 0.5
        %v1753 = vmul.f32 %v1689, 0.5
        %v1754 = vmul.f32 %v1690, 0.5
        %v1755 = vmul.f32 %v1691, 0.5
        %v1756 = vmul.f32 %v1692, 0.5
        %v1757 = vmul.f32 %v1693, 0.5
        %v1758 = vmul.f32 %v1694, 0.5
        %v1759 = vmul.f32 %v1695, 0.5
        %v1760 = vmul.f32 %v1696, 0.5
        %v1761 = vmul.f32 %v1697, 0.5
        %v1762 = vmul.f32 %v1698, 0.5
        %v1763 = vmul.f32 %v1699, 0.5
        %v1764 = vmul.f32 %v1700, 0.5
        %v1765 = vmul.f32 %v1701, 0.5
        %v1766 = vmul.f32 %v1702, 0.5
        %v1767 = vmul.f32 %v1703, 0.5
        %v1768 = vmul.f32 %v1704, 0.5
        %v1769 = vmul.f32 %v1705, 0.5
        %v1770 = vmul.f32 %v1706, 0.5
        %v1771 = vmul.f32 %v1707, 0.5
        %v1772 = vmul.f32 %v1708, 0.5
        %v1773 = vmul.f32 %v1709, 0.5
        %v1774 = vmul.f32 %v1710, 0.5
        %v1775 = vmul.f32 %v1711, 0.5
        %v1776 = vmul.f32 %v1712, 0.5
        %v1777 = vmul.f32 %v1713, 0.5
        %v1778 = vmul.f32 %v1714, 0.5
        %v1779 = vmul.f32 %v1715, 0.5
        %v1780 = vmul.f32 %v1716, 0.5
        %v1781 = vmul.f32 %v1717, 0.5
        %v1782 = vmul.f32 %v1718, 0.5
        %v1783 = vmul.f32 %v1719, 0.5
        %v1784 = vmul.f32 %v1720, 0.5
        %v1785 = vmul.f32 %v1721, 0.5
        %v1786 = vmul.f32 %v1722, 0.5
        %v1787 = vmul.f32 %v1723, 0.5
        %v1788 = vmul.f32 %v1724, 0.5
        %v1789 = vmul.f32 %v1725, 0.5
        %v1790 = vmul.f32 %v1726, 0.5
        %v1791 = vmul.f32 %v1727, 0.5
        %v1792 = vmul.f32 %v1728, 0.5
        %v1793 = vmul.f32 %v1729, 0.5
        %v1794 = vmul.f32 %v1091, %v1730
        %v1795 = vmul.f32 %v1093, %v1731
        %v1796 = vmul.f32 %v1204, %v1732
        %v1797 = vmul.f32 %v1206, %v1733
        %v1798 = vmul.f32 %v1095, %v1734
        %v1799 = vmul.f32 %v1097, %v1735
        %v1800 = vmul.f32 %v1208, %v1736
        %v1801 = vmul.f32 %v1210, %v1737
        %v1802 = vmul.f32 %v1101, %v1738
        %v1803 = vmul.f32 %v1103, %v1739
        %v1804 = vmul.f32 %v1214, %v1740
        %v1805 = vmul.f32 %v1216, %v1741
        %v1806 = vmul.f32 %v1105, %v1742
        %v1807 = vmul.f32 %v1107, %v1743
        %v1808 = vmul.f32 %v1218, %v1744
        %v1809 = vmul.f32 %v1220, %v1745
        %v1810 = vmul.f32 %v1111, %v1746
        %v1811 = vmul.f32 %v1113, %v1747
        %v1812 = vmul.f32 %v1224, %v1748
        %v1813 = vmul.f32 %v1226, %v1749
        %v1814 = vmul.f32 %v1115, %v1750
        %v1815 = vmul.f32 %v1117, %v1751
        %v1816 = vmul.f32 %v1228, %v1752
        %v1817 = vmul.f32 %v1230, %v1753
        %v1818 = vmul.f32 %v1121, %v1754
        %v1819 = vmul.f32 %v1123, %v1755
        %v1820 = vmul.f32 %v1234, %v1756
        %v1821 = vmul.f32 %v1236, %v1757
        %v1822 = vmul.f32 %v1125, %v1758
        %v1823 = vmul.f32 %v1127, %v1759
        %v1824 = vmul.f32 %v1238, %v1760
        %v1825 = vmul.f32 %v1240, %v1761
        %v1826 = vmul.f32 %v1131, %v1762
        %v1827 = vmul.f32 %v1133, %v1763
        %v1828 = vmul.f32 %v1244, %v1764
        %v1829 = vmul.f32 %v1246, %v1765
        %v1830 = vmul.f32 %v1135, %v1766
        %v1831 = vmul.f32 %v1137, %v1767
        %v1832 = vmul.f32 %v1248, %v1768
        %v1833 = vmul.f32 %v1250, %v1769
        %v1834 = vmul.f32 %v1141, %v1770
        %v1835 = vmul.f32 %v1143, %v1771
        %v1836 = vmul.f32 %v1254, %v1772
        %v1837 = vmul.f32 %v1256, %v1773
        %v1838 = vmul.f32 %v1145, %v1774
        %v1839 = vmul.f32 %v1147, %v1775
        %v1840 = vmul.f32 %v1258, %v1776
        %v1841 = vmul.f32 %v1260, %v1777
        %v1842 = vmul.f32 %v1151, %v1778
        %v1843 = vmul.f32 %v1153, %v1779
        %v1844 = vmul.f32 %v1264, %v1780
        %v1845 = vmul.f32 %v1266, %v1781
        %v1846 = vmul.f32 %v1155, %v1782
        %v1847 = vmul.f32 %v1157, %v1783
        %v1848 = vmul.f32 %v1268, %v1784
        %v1849 = vmul.f32 %v1270, %v1785
        %v1850 = vmul.f32 %v1161, %v1786
        %v1851 = vmul.f32 %v1163, %v1787
        %v1852 = vmul.f32 %v1274, %v1788
        %v1853 = vmul.f32 %v1276, %v1789
        %v1854 = vmul.f32 %v1165, %v1790
        %v1855 = vmul.f32 %v1167, %v1791
        %v1856 = vmul.f32 %v1278, %v1792
        %v1857 = vmul.f32 %v1280, %v1793
        %v1858 = vpack.c.bf16 %v1798, %v1794
        %v1859 = vpack.c.bf16 %v1799, %v1795
        %v1860 = vpack.c.bf16 %v1800, %v1796
        %v1861 = vpack.c.bf16 %v1801, %v1797
        %v1862 = vpack.c.bf16 %v1806, %v1802
        %v1863 = vpack.c.bf16 %v1807, %v1803
        %v1864 = vpack.c.bf16 %v1808, %v1804
        %v1865 = vpack.c.bf16 %v1809, %v1805
        %v1866 = vpack.c.bf16 %v1814, %v1810
        %v1867 = vpack.c.bf16 %v1815, %v1811
        %v1868 = vpack.c.bf16 %v1816, %v1812
        %v1869 = vpack.c.bf16 %v1817, %v1813
        %v1870 = vpack.c.bf16 %v1822, %v1818
        %v1871 = vpack.c.bf16 %v1823, %v1819
        %v1872 = vpack.c.bf16 %v1824, %v1820
        %v1873 = vpack.c.bf16 %v1825, %v1821
        %v1874 = vpack.c.bf16 %v1830, %v1826
        %v1875 = vpack.c.bf16 %v1831, %v1827
        %v1876 = vpack.c.bf16 %v1832, %v1828
        %v1877 = vpack.c.bf16 %v1833, %v1829
        %v1878 = vpack.c.bf16 %v1838, %v1834
        %v1879 = vpack.c.bf16 %v1839, %v1835
        %v1880 = vpack.c.bf16 %v1840, %v1836
        %v1881 = vpack.c.bf16 %v1841, %v1837
        %v1882 = vpack.c.bf16 %v1846, %v1842
        %v1883 = vpack.c.bf16 %v1847, %v1843
        %v1884 = vpack.c.bf16 %v1848, %v1844
        %v1885 = vpack.c.bf16 %v1849, %v1845
        %v1886 = vpack.c.bf16 %v1854, %v1850
        %v1887 = vpack.c.bf16 %v1855, %v1851
        %v1888 = vpack.c.bf16 %v1856, %v1852
        %v1889 = vpack.c.bf16 %v1857, %v1853
        %v1890 = vld [vmem:[#allocation7] sm:$0xff]
        %v1891 = vld [vmem:[#allocation7 + $0x8] sm:$0xff]
        %v1892 = vld [vmem:[#allocation7 + $0x10] sm:$0xff]
        %v1893 = vld [vmem:[#allocation7 + $0x18] sm:$0xff]
        %v1894 = vld [vmem:[#allocation7 + $0x20] sm:$0xff]
        %v1895 = vld [vmem:[#allocation7 + $0x28] sm:$0xff]
        %v1896 = vld [vmem:[#allocation7 + $0x30] sm:$0xff]
        %v1897 = vld [vmem:[#allocation7 + $0x38] sm:$0xff]
        %v1898 = vld [vmem:[#allocation7 + $0x40] sm:$0xff]
        %v1899 = vld [vmem:[#allocation7 + $0x48] sm:$0xff]
        %v1900 = vld [vmem:[#allocation7 + $0x50] sm:$0xff]
        %v1901 = vld [vmem:[#allocation7 + $0x58] sm:$0xff]
        %v1902 = vld [vmem:[#allocation7 + $0x60] sm:$0xff]
        %v1903 = vld [vmem:[#allocation7 + $0x68] sm:$0xff]
        %v1904 = vld [vmem:[#allocation7 + $0x70] sm:$0xff]
        %v1905 = vld [vmem:[#allocation7 + $0x78] sm:$0xff]
        %v1906 = vld [vmem:[#allocation7 + $0x80] sm:$0xff]
        %v1907 = vld [vmem:[#allocation7 + $0x88] sm:$0xff]
        %v1908 = vld [vmem:[#allocation7 + $0x90] sm:$0xff]
        %v1909 = vld [vmem:[#allocation7 + $0x98] sm:$0xff]
        %v1910 = vld [vmem:[#allocation7 + $0xa0] sm:$0xff]
        %v1911 = vld [vmem:[#allocation7 + $0xa8] sm:$0xff]
        %v1912 = vld [vmem:[#allocation7 + $0xb0] sm:$0xff]
        %v1913 = vld [vmem:[#allocation7 + $0xb8] sm:$0xff]
        %v1914 = vld [vmem:[#allocation7 + $0xc0] sm:$0xff]
        %v1915 = vld [vmem:[#allocation7 + $0xc8] sm:$0xff]
        %v1916 = vld [vmem:[#allocation7 + $0xd0] sm:$0xff]
        %v1917 = vld [vmem:[#allocation7 + $0xd8] sm:$0xff]
        %v1918 = vld [vmem:[#allocation7 + $0xe0] sm:$0xff]
        %v1919 = vld [vmem:[#allocation7 + $0xe8] sm:$0xff]
        %v1920 = vld [vmem:[#allocation7 + $0xf0] sm:$0xff]
        %v1921 = vld [vmem:[#allocation7 + $0xf8] sm:$0xff]
        %v1922 = vld [vmem:[#allocation7 + $0x100] sm:$0xff]
        %v1923 = vld [vmem:[#allocation7 + $0x108] sm:$0xff]
        %v1924 = vld [vmem:[#allocation7 + $0x110] sm:$0xff]
        %v1925 = vld [vmem:[#allocation7 + $0x118] sm:$0xff]
        %v1926 = vld [vmem:[#allocation7 + $0x120] sm:$0xff]
        %v1927 = vld [vmem:[#allocation7 + $0x128] sm:$0xff]
        %v1928 = vld [vmem:[#allocation7 + $0x130] sm:$0xff]
        %v1929 = vld [vmem:[#allocation7 + $0x138] sm:$0xff]
        %v1930 = vld [vmem:[#allocation7 + $0x140] sm:$0xff]
        %v1931 = vld [vmem:[#allocation7 + $0x148] sm:$0xff]
        %v1932 = vld [vmem:[#allocation7 + $0x150] sm:$0xff]
        %v1933 = vld [vmem:[#allocation7 + $0x158] sm:$0xff]
        %v1934 = vld [vmem:[#allocation7 + $0x160] sm:$0xff]
        %v1935 = vld [vmem:[#allocation7 + $0x168] sm:$0xff]
        %v1936 = vld [vmem:[#allocation7 + $0x170] sm:$0xff]
        %v1937 = vld [vmem:[#allocation7 + $0x178] sm:$0xff]
        %v1938 = vld [vmem:[#allocation7 + $0x180] sm:$0xff]
        %v1939 = vld [vmem:[#allocation7 + $0x188] sm:$0xff]
        %v1940 = vld [vmem:[#allocation7 + $0x190] sm:$0xff]
        %v1941 = vld [vmem:[#allocation7 + $0x198] sm:$0xff]
        %v1942 = vld [vmem:[#allocation7 + $0x1a0] sm:$0xff]
        %v1943 = vld [vmem:[#allocation7 + $0x1a8] sm:$0xff]
        %v1944 = vld [vmem:[#allocation7 + $0x1b0] sm:$0xff]
        %v1945 = vld [vmem:[#allocation7 + $0x1b8] sm:$0xff]
        %v1946 = vld [vmem:[#allocation7 + $0x1c0] sm:$0xff]
        %v1947 = vld [vmem:[#allocation7 + $0x1c8] sm:$0xff]
        %v1948 = vld [vmem:[#allocation7 + $0x1d0] sm:$0xff]
        %v1949 = vld [vmem:[#allocation7 + $0x1d8] sm:$0xff]
        %v1950 = vld [vmem:[#allocation7 + $0x1e0] sm:$0xff]
        %v1951 = vld [vmem:[#allocation7 + $0x1e8] sm:$0xff]
        %v1952 = vld [vmem:[#allocation7 + $0x1f0] sm:$0xff]
        %v1953 = vld [vmem:[#allocation7 + $0x1f8] sm:$0xff]
        %v1954 = vld [vmem:[#allocation7 + $0x200] sm:$0xff]
        %v1955 = vld [vmem:[#allocation7 + $0x208] sm:$0xff]
        %v1956 = vld [vmem:[#allocation7 + $0x210] sm:$0xff]
        %v1957 = vld [vmem:[#allocation7 + $0x218] sm:$0xff]
        %v1958 = vld [vmem:[#allocation7 + $0x220] sm:$0xff]
        %v1959 = vld [vmem:[#allocation7 + $0x228] sm:$0xff]
        %v1960 = vld [vmem:[#allocation7 + $0x230] sm:$0xff]
        %v1961 = vld [vmem:[#allocation7 + $0x238] sm:$0xff]
        %v1962 = vld [vmem:[#allocation7 + $0x240] sm:$0xff]
        %v1963 = vld [vmem:[#allocation7 + $0x248] sm:$0xff]
        %v1964 = vld [vmem:[#allocation7 + $0x250] sm:$0xff]
        %v1965 = vld [vmem:[#allocation7 + $0x258] sm:$0xff]
        %v1966 = vld [vmem:[#allocation7 + $0x260] sm:$0xff]
        %v1967 = vld [vmem:[#allocation7 + $0x268] sm:$0xff]
        %v1968 = vld [vmem:[#allocation7 + $0x270] sm:$0xff]
        %v1969 = vld [vmem:[#allocation7 + $0x278] sm:$0xff]
        %v1970 = vld [vmem:[#allocation7 + $0x280] sm:$0xff]
        %v1971 = vld [vmem:[#allocation7 + $0x288] sm:$0xff]
        %v1972 = vld [vmem:[#allocation7 + $0x290] sm:$0xff]
        %v1973 = vld [vmem:[#allocation7 + $0x298] sm:$0xff]
        %v1974 = vld [vmem:[#allocation7 + $0x2a0] sm:$0xff]
        %v1975 = vld [vmem:[#allocation7 + $0x2a8] sm:$0xff]
        %v1976 = vld [vmem:[#allocation7 + $0x2b0] sm:$0xff]
        %v1977 = vld [vmem:[#allocation7 + $0x2b8] sm:$0xff]
        %v1978 = vld [vmem:[#allocation7 + $0x2c0] sm:$0xff]
        %v1979 = vld [vmem:[#allocation7 + $0x2c8] sm:$0xff]
        %v1980 = vld [vmem:[#allocation7 + $0x2d0] sm:$0xff]
        %v1981 = vld [vmem:[#allocation7 + $0x2d8] sm:$0xff]
        %v1982 = vld [vmem:[#allocation7 + $0x2e0] sm:$0xff]
        %v1983 = vld [vmem:[#allocation7 + $0x2e8] sm:$0xff]
        %v1984 = vld [vmem:[#allocation7 + $0x2f0] sm:$0xff]
        %v1985 = vld [vmem:[#allocation7 + $0x2f8] sm:$0xff]
        %v1986 = vld [vmem:[#allocation7 + $0x300] sm:$0xff]
        %v1987 = vld [vmem:[#allocation7 + $0x308] sm:$0xff]
        %v1988 = vld [vmem:[#allocation7 + $0x310] sm:$0xff]
        %v1989 = vld [vmem:[#allocation7 + $0x318] sm:$0xff]
        %v1990 = vld [vmem:[#allocation7 + $0x320] sm:$0xff]
        %v1991 = vld [vmem:[#allocation7 + $0x328] sm:$0xff]
        %v1992 = vld [vmem:[#allocation7 + $0x330] sm:$0xff]
        %v1993 = vld [vmem:[#allocation7 + $0x338] sm:$0xff]
        %v1994 = vld [vmem:[#allocation7 + $0x340] sm:$0xff]
        %v1995 = vld [vmem:[#allocation7 + $0x348] sm:$0xff]
        %v1996 = vld [vmem:[#allocation7 + $0x350] sm:$0xff]
        %v1997 = vld [vmem:[#allocation7 + $0x358] sm:$0xff]
        %v1998 = vld [vmem:[#allocation7 + $0x360] sm:$0xff]
        %v1999 = vld [vmem:[#allocation7 + $0x368] sm:$0xff]
        %v2000 = vld [vmem:[#allocation7 + $0x370] sm:$0xff]
        %v2001 = vld [vmem:[#allocation7 + $0x378] sm:$0xff]
        %v2002 = vld [vmem:[#allocation7 + $0x380] sm:$0xff]
        %v2003 = vld [vmem:[#allocation7 + $0x388] sm:$0xff]
        %v2004 = vld [vmem:[#allocation7 + $0x390] sm:$0xff]
        %v2005 = vld [vmem:[#allocation7 + $0x398] sm:$0xff]
        %v2006 = vld [vmem:[#allocation7 + $0x3a0] sm:$0xff]
        %v2007 = vld [vmem:[#allocation7 + $0x3a8] sm:$0xff]
        %v2008 = vld [vmem:[#allocation7 + $0x3b0] sm:$0xff]
        %v2009 = vld [vmem:[#allocation7 + $0x3b8] sm:$0xff]
        %v2010 = vld [vmem:[#allocation7 + $0x3c0] sm:$0xff]
        %v2011 = vld [vmem:[#allocation7 + $0x3c8] sm:$0xff]
        %v2012 = vld [vmem:[#allocation7 + $0x3d0] sm:$0xff]
        %v2013 = vld [vmem:[#allocation7 + $0x3d8] sm:$0xff]
        %v2014 = vld [vmem:[#allocation7 + $0x3e0] sm:$0xff]
        %v2015 = vld [vmem:[#allocation7 + $0x3e8] sm:$0xff]
        %v2016 = vld [vmem:[#allocation7 + $0x3f0] sm:$0xff]
        %v2017 = vld [vmem:[#allocation7 + $0x3f8] sm:$0xff]
        %v2018 = vld [vmem:[%s4] sm:$0xf]
        %v2020 = vlaneseq
        %v2021 = vshrl.u32 %v2020, 7
        %v2022 = vsub.s32 0, %v2021
        %v2023 = vrot.slane %v2018, %v2022
        %v2024 = vlaneseq
        %v2025 = vshrl.u32 %v2024, 7
        %v2026 = vsub.s32 1, %v2025
        %v2027 = vrot.slane %v2018, %v2026
        %v2028 = vlaneseq
        %v2029 = vshrl.u32 %v2028, 7
        %v2030 = vsub.s32 2, %v2029
        %v2031 = vrot.slane %v2018, %v2030
        %v2032 = vlaneseq
        %v2033 = vshrl.u32 %v2032, 7
        %v2034 = vsub.s32 3, %v2033
        %v2035 = vrot.slane %v2018, %v2034
        %v2168 = vunpack.c.l.b16 %v1890
        %v2169 = vunpack.c.h.b16 %v1890
        %v2170 = vunpack.c.l.b16 %v1891
        %v2171 = vunpack.c.h.b16 %v1891
        %v2172 = vunpack.c.l.b16 %v1892
        %v2173 = vunpack.c.h.b16 %v1892
        %v2174 = vunpack.c.l.b16 %v1893
        %v2175 = vunpack.c.h.b16 %v1893
        %v2176 = vunpack.c.l.b16 %v1894
        %v2177 = vunpack.c.h.b16 %v1894
        %v2178 = vunpack.c.l.b16 %v1895
        %v2179 = vunpack.c.h.b16 %v1895
        %v2180 = vunpack.c.l.b16 %v1896
        %v2181 = vunpack.c.h.b16 %v1896
        %v2182 = vunpack.c.l.b16 %v1897
        %v2183 = vunpack.c.h.b16 %v1897
        %v2184 = vunpack.c.l.b16 %v1898
        %v2185 = vunpack.c.h.b16 %v1898
        %v2186 = vunpack.c.l.b16 %v1899
        %v2187 = vunpack.c.h.b16 %v1899
        %v2188 = vunpack.c.l.b16 %v1900
        %v2189 = vunpack.c.h.b16 %v1900
        %v2190 = vunpack.c.l.b16 %v1901
        %v2191 = vunpack.c.h.b16 %v1901
        %v2192 = vunpack.c.l.b16 %v1902
        %v2193 = vunpack.c.h.b16 %v1902
        %v2194 = vunpack.c.l.b16 %v1903
        %v2195 = vunpack.c.h.b16 %v1903
        %v2196 = vunpack.c.l.b16 %v1904
        %v2197 = vunpack.c.h.b16 %v1904
        %v2198 = vunpack.c.l.b16 %v1905
        %v2199 = vunpack.c.h.b16 %v1905
        %v2200 = vunpack.c.l.b16 %v1906
        %v2201 = vunpack.c.h.b16 %v1906
        %v2202 = vunpack.c.l.b16 %v1907
        %v2203 = vunpack.c.h.b16 %v1907
        %v2204 = vunpack.c.l.b16 %v1908
        %v2205 = vunpack.c.h.b16 %v1908
        %v2206 = vunpack.c.l.b16 %v1909
        %v2207 = vunpack.c.h.b16 %v1909
        %v2208 = vunpack.c.l.b16 %v1910
        %v2209 = vunpack.c.h.b16 %v1910
        %v2210 = vunpack.c.l.b16 %v1911
        %v2211 = vunpack.c.h.b16 %v1911
        %v2212 = vunpack.c.l.b16 %v1912
        %v2213 = vunpack.c.h.b16 %v1912
        %v2214 = vunpack.c.l.b16 %v1913
        %v2215 = vunpack.c.h.b16 %v1913
        %v2216 = vunpack.c.l.b16 %v1914
        %v2217 = vunpack.c.h.b16 %v1914
        %v2218 = vunpack.c.l.b16 %v1915
        %v2219 = vunpack.c.h.b16 %v1915
        %v2220 = vunpack.c.l.b16 %v1916
        %v2221 = vunpack.c.h.b16 %v1916
        %v2222 = vunpack.c.l.b16 %v1917
        %v2223 = vunpack.c.h.b16 %v1917
        %v2224 = vunpack.c.l.b16 %v1918
        %v2225 = vunpack.c.h.b16 %v1918
        %v2226 = vunpack.c.l.b16 %v1919
        %v2227 = vunpack.c.h.b16 %v1919
        %v2228 = vunpack.c.l.b16 %v1920
        %v2229 = vunpack.c.h.b16 %v1920
        %v2230 = vunpack.c.l.b16 %v1921
        %v2231 = vunpack.c.h.b16 %v1921
        %v2232 = vunpack.c.l.b16 %v1922
        %v2233 = vunpack.c.h.b16 %v1922
        %v2234 = vunpack.c.l.b16 %v1923
        %v2235 = vunpack.c.h.b16 %v1923
        %v2236 = vunpack.c.l.b16 %v1924
        %v2237 = vunpack.c.h.b16 %v1924
        %v2238 = vunpack.c.l.b16 %v1925
        %v2239 = vunpack.c.h.b16 %v1925
        %v2240 = vunpack.c.l.b16 %v1926
        %v2241 = vunpack.c.h.b16 %v1926
        %v2242 = vunpack.c.l.b16 %v1927
        %v2243 = vunpack.c.h.b16 %v1927
        %v2244 = vunpack.c.l.b16 %v1928
        %v2245 = vunpack.c.h.b16 %v1928
        %v2246 = vunpack.c.l.b16 %v1929
        %v2247 = vunpack.c.h.b16 %v1929
        %v2248 = vunpack.c.l.b16 %v1930
        %v2249 = vunpack.c.h.b16 %v1930
        %v2250 = vunpack.c.l.b16 %v1931
        %v2251 = vunpack.c.h.b16 %v1931
        %v2252 = vunpack.c.l.b16 %v1932
        %v2253 = vunpack.c.h.b16 %v1932
        %v2254 = vunpack.c.l.b16 %v1933
        %v2255 = vunpack.c.h.b16 %v1933
        %v2256 = vunpack.c.l.b16 %v1934
        %v2257 = vunpack.c.h.b16 %v1934
        %v2258 = vunpack.c.l.b16 %v1935
        %v2259 = vunpack.c.h.b16 %v1935
        %v2260 = vunpack.c.l.b16 %v1936
        %v2261 = vunpack.c.h.b16 %v1936
        %v2262 = vunpack.c.l.b16 %v1937
        %v2263 = vunpack.c.h.b16 %v1937
        %v2264 = vunpack.c.l.b16 %v1938
        %v2265 = vunpack.c.h.b16 %v1938
        %v2266 = vunpack.c.l.b16 %v1939
        %v2267 = vunpack.c.h.b16 %v1939
        %v2268 = vunpack.c.l.b16 %v1940
        %v2269 = vunpack.c.h.b16 %v1940
        %v2270 = vunpack.c.l.b16 %v1941
        %v2271 = vunpack.c.h.b16 %v1941
        %v2272 = vunpack.c.l.b16 %v1942
        %v2273 = vunpack.c.h.b16 %v1942
        %v2274 = vunpack.c.l.b16 %v1943
        %v2275 = vunpack.c.h.b16 %v1943
        %v2276 = vunpack.c.l.b16 %v1944
        %v2277 = vunpack.c.h.b16 %v1944
        %v2278 = vunpack.c.l.b16 %v1945
        %v2279 = vunpack.c.h.b16 %v1945
        %v2280 = vunpack.c.l.b16 %v1946
        %v2281 = vunpack.c.h.b16 %v1946
        %v2282 = vunpack.c.l.b16 %v1947
        %v2283 = vunpack.c.h.b16 %v1947
        %v2284 = vunpack.c.l.b16 %v1948
        %v2285 = vunpack.c.h.b16 %v1948
        %v2286 = vunpack.c.l.b16 %v1949
        %v2287 = vunpack.c.h.b16 %v1949
        %v2288 = vunpack.c.l.b16 %v1950
        %v2289 = vunpack.c.h.b16 %v1950
        %v2290 = vunpack.c.l.b16 %v1951
        %v2291 = vunpack.c.h.b16 %v1951
        %v2292 = vunpack.c.l.b16 %v1952
        %v2293 = vunpack.c.h.b16 %v1952
        %v2294 = vunpack.c.l.b16 %v1953
        %v2295 = vunpack.c.h.b16 %v1953
        %v2296 = vunpack.c.l.b16 %v1954
        %v2297 = vunpack.c.h.b16 %v1954
        %v2298 = vunpack.c.l.b16 %v1955
        %v2299 = vunpack.c.h.b16 %v1955
        %v2300 = vunpack.c.l.b16 %v1956
        %v2301 = vunpack.c.h.b16 %v1956
        %v2302 = vunpack.c.l.b16 %v1957
        %v2303 = vunpack.c.h.b16 %v1957
        %v2304 = vunpack.c.l.b16 %v1958
        %v2305 = vunpack.c.h.b16 %v1958
        %v2306 = vunpack.c.l.b16 %v1959
        %v2307 = vunpack.c.h.b16 %v1959
        %v2308 = vunpack.c.l.b16 %v1960
        %v2309 = vunpack.c.h.b16 %v1960
        %v2310 = vunpack.c.l.b16 %v1961
        %v2311 = vunpack.c.h.b16 %v1961
        %v2312 = vunpack.c.l.b16 %v1962
        %v2313 = vunpack.c.h.b16 %v1962
        %v2314 = vunpack.c.l.b16 %v1963
        %v2315 = vunpack.c.h.b16 %v1963
        %v2316 = vunpack.c.l.b16 %v1964
        %v2317 = vunpack.c.h.b16 %v1964
        %v2318 = vunpack.c.l.b16 %v1965
        %v2319 = vunpack.c.h.b16 %v1965
        %v2320 = vunpack.c.l.b16 %v1966
        %v2321 = vunpack.c.h.b16 %v1966
        %v2322 = vunpack.c.l.b16 %v1967
        %v2323 = vunpack.c.h.b16 %v1967
        %v2324 = vunpack.c.l.b16 %v1968
        %v2325 = vunpack.c.h.b16 %v1968
        %v2326 = vunpack.c.l.b16 %v1969
        %v2327 = vunpack.c.h.b16 %v1969
        %v2328 = vunpack.c.l.b16 %v1970
        %v2329 = vunpack.c.h.b16 %v1970
        %v2330 = vunpack.c.l.b16 %v1971
        %v2331 = vunpack.c.h.b16 %v1971
        %v2332 = vunpack.c.l.b16 %v1972
        %v2333 = vunpack.c.h.b16 %v1972
        %v2334 = vunpack.c.l.b16 %v1973
        %v2335 = vunpack.c.h.b16 %v1973
        %v2336 = vunpack.c.l.b16 %v1974
        %v2337 = vunpack.c.h.b16 %v1974
        %v2338 = vunpack.c.l.b16 %v1975
        %v2339 = vunpack.c.h.b16 %v1975
        %v2340 = vunpack.c.l.b16 %v1976
        %v2341 = vunpack.c.h.b16 %v1976
        %v2342 = vunpack.c.l.b16 %v1977
        %v2343 = vunpack.c.h.b16 %v1977
        %v2344 = vunpack.c.l.b16 %v1978
        %v2345 = vunpack.c.h.b16 %v1978
        %v2346 = vunpack.c.l.b16 %v1979
        %v2347 = vunpack.c.h.b16 %v1979
        %v2348 = vunpack.c.l.b16 %v1980
        %v2349 = vunpack.c.h.b16 %v1980
        %v2350 = vunpack.c.l.b16 %v1981
        %v2351 = vunpack.c.h.b16 %v1981
        %v2352 = vunpack.c.l.b16 %v1982
        %v2353 = vunpack.c.h.b16 %v1982
        %v2354 = vunpack.c.l.b16 %v1983
        %v2355 = vunpack.c.h.b16 %v1983
        %v2356 = vunpack.c.l.b16 %v1984
        %v2357 = vunpack.c.h.b16 %v1984
        %v2358 = vunpack.c.l.b16 %v1985
        %v2359 = vunpack.c.h.b16 %v1985
        %v2360 = vunpack.c.l.b16 %v1986
        %v2361 = vunpack.c.h.b16 %v1986
        %v2362 = vunpack.c.l.b16 %v1987
        %v2363 = vunpack.c.h.b16 %v1987
        %v2364 = vunpack.c.l.b16 %v1988
        %v2365 = vunpack.c.h.b16 %v1988
        %v2366 = vunpack.c.l.b16 %v1989
        %v2367 = vunpack.c.h.b16 %v1989
        %v2368 = vunpack.c.l.b16 %v1990
        %v2369 = vunpack.c.h.b16 %v1990
        %v2370 = vunpack.c.l.b16 %v1991
        %v2371 = vunpack.c.h.b16 %v1991
        %v2372 = vunpack.c.l.b16 %v1992
        %v2373 = vunpack.c.h.b16 %v1992
        %v2374 = vunpack.c.l.b16 %v1993
        %v2375 = vunpack.c.h.b16 %v1993
        %v2376 = vunpack.c.l.b16 %v1994
        %v2377 = vunpack.c.h.b16 %v1994
        %v2378 = vunpack.c.l.b16 %v1995
        %v2379 = vunpack.c.h.b16 %v1995
        %v2380 = vunpack.c.l.b16 %v1996
        %v2381 = vunpack.c.h.b16 %v1996
        %v2382 = vunpack.c.l.b16 %v1997
        %v2383 = vunpack.c.h.b16 %v1997
        %v2384 = vunpack.c.l.b16 %v1998
        %v2385 = vunpack.c.h.b16 %v1998
        %v2386 = vunpack.c.l.b16 %v1999
        %v2387 = vunpack.c.h.b16 %v1999
        %v2388 = vunpack.c.l.b16 %v2000
        %v2389 = vunpack.c.h.b16 %v2000
        %v2390 = vunpack.c.l.b16 %v2001
        %v2391 = vunpack.c.h.b16 %v2001
        %v2392 = vunpack.c.l.b16 %v2002
        %v2393 = vunpack.c.h.b16 %v2002
        %v2394 = vunpack.c.l.b16 %v2003
        %v2395 = vunpack.c.h.b16 %v2003
        %v2396 = vunpack.c.l.b16 %v2004
        %v2397 = vunpack.c.h.b16 %v2004
        %v2398 = vunpack.c.l.b16 %v2005
        %v2399 = vunpack.c.h.b16 %v2005
        %v2400 = vunpack.c.l.b16 %v2006
        %v2401 = vunpack.c.h.b16 %v2006
        %v2402 = vunpack.c.l.b16 %v2007
        %v2403 = vunpack.c.h.b16 %v2007
        %v2404 = vunpack.c.l.b16 %v2008
        %v2405 = vunpack.c.h.b16 %v2008
        %v2406 = vunpack.c.l.b16 %v2009
        %v2407 = vunpack.c.h.b16 %v2009
        %v2408 = vunpack.c.l.b16 %v2010
        %v2409 = vunpack.c.h.b16 %v2010
        %v2410 = vunpack.c.l.b16 %v2011
        %v2411 = vunpack.c.h.b16 %v2011
        %v2412 = vunpack.c.l.b16 %v2012
        %v2413 = vunpack.c.h.b16 %v2012
        %v2414 = vunpack.c.l.b16 %v2013
        %v2415 = vunpack.c.h.b16 %v2013
        %v2416 = vunpack.c.l.b16 %v2014
        %v2417 = vunpack.c.h.b16 %v2014
        %v2418 = vunpack.c.l.b16 %v2015
        %v2419 = vunpack.c.h.b16 %v2015
        %v2420 = vunpack.c.l.b16 %v2016
        %v2421 = vunpack.c.h.b16 %v2016
        %v2422 = vunpack.c.l.b16 %v2017
        %v2423 = vunpack.c.h.b16 %v2017
        %v2424 = vpack.c.b16 %v2172, %v2168
        %v2425 = vpack.c.b16 %v2173, %v2169
        %v2426 = vpack.c.b16 %v2174, %v2170
        %v2427 = vpack.c.b16 %v2175, %v2171
        %v2428 = vpack.c.b16 %v2180, %v2176
        %v2429 = vpack.c.b16 %v2181, %v2177
        %v2430 = vpack.c.b16 %v2182, %v2178
        %v2431 = vpack.c.b16 %v2183, %v2179
        %v2432 = vpack.c.b16 %v2188, %v2184
        %v2433 = vpack.c.b16 %v2189, %v2185
        %v2434 = vpack.c.b16 %v2190, %v2186
        %v2435 = vpack.c.b16 %v2191, %v2187
        %v2436 = vpack.c.b16 %v2196, %v2192
        %v2437 = vpack.c.b16 %v2197, %v2193
        %v2438 = vpack.c.b16 %v2198, %v2194
        %v2439 = vpack.c.b16 %v2199, %v2195
        %v2440 = vpack.c.b16 %v2204, %v2200
        %v2441 = vpack.c.b16 %v2205, %v2201
        %v2442 = vpack.c.b16 %v2206, %v2202
        %v2443 = vpack.c.b16 %v2207, %v2203
        %v2444 = vpack.c.b16 %v2212, %v2208
        %v2445 = vpack.c.b16 %v2213, %v2209
        %v2446 = vpack.c.b16 %v2214, %v2210
        %v2447 = vpack.c.b16 %v2215, %v2211
        %v2448 = vpack.c.b16 %v2220, %v2216
        %v2449 = vpack.c.b16 %v2221, %v2217
        %v2450 = vpack.c.b16 %v2222, %v2218
        %v2451 = vpack.c.b16 %v2223, %v2219
        %v2452 = vpack.c.b16 %v2228, %v2224
        %v2453 = vpack.c.b16 %v2229, %v2225
        %v2454 = vpack.c.b16 %v2230, %v2226
        %v2455 = vpack.c.b16 %v2231, %v2227
        %v2456 = vpack.c.b16 %v2236, %v2232
        %v2457 = vpack.c.b16 %v2237, %v2233
        %v2458 = vpack.c.b16 %v2238, %v2234
        %v2459 = vpack.c.b16 %v2239, %v2235
        %v2460 = vpack.c.b16 %v2244, %v2240
        %v2461 = vpack.c.b16 %v2245, %v2241
        %v2462 = vpack.c.b16 %v2246, %v2242
        %v2463 = vpack.c.b16 %v2247, %v2243
        %v2464 = vpack.c.b16 %v2252, %v2248
        %v2465 = vpack.c.b16 %v2253, %v2249
        %v2466 = vpack.c.b16 %v2254, %v2250
        %v2467 = vpack.c.b16 %v2255, %v2251
        %v2468 = vpack.c.b16 %v2260, %v2256
        %v2469 = vpack.c.b16 %v2261, %v2257
        %v2470 = vpack.c.b16 %v2262, %v2258
        %v2471 = vpack.c.b16 %v2263, %v2259
        %v2472 = vpack.c.b16 %v2268, %v2264
        %v2473 = vpack.c.b16 %v2269, %v2265
        %v2474 = vpack.c.b16 %v2270, %v2266
        %v2475 = vpack.c.b16 %v2271, %v2267
        %v2476 = vpack.c.b16 %v2276, %v2272
        %v2477 = vpack.c.b16 %v2277, %v2273
        %v2478 = vpack.c.b16 %v2278, %v2274
        %v2479 = vpack.c.b16 %v2279, %v2275
        %v2480 = vpack.c.b16 %v2284, %v2280
        %v2481 = vpack.c.b16 %v2285, %v2281
        %v2482 = vpack.c.b16 %v2286, %v2282
        %v2483 = vpack.c.b16 %v2287, %v2283
        %v2484 = vpack.c.b16 %v2292, %v2288
        %v2485 = vpack.c.b16 %v2293, %v2289
        %v2486 = vpack.c.b16 %v2294, %v2290
        %v2487 = vpack.c.b16 %v2295, %v2291
        %v2488 = vpack.c.b16 %v2300, %v2296
        %v2489 = vpack.c.b16 %v2301, %v2297
        %v2490 = vpack.c.b16 %v2302, %v2298
        %v2491 = vpack.c.b16 %v2303, %v2299
        %v2492 = vpack.c.b16 %v2308, %v2304
        %v2493 = vpack.c.b16 %v2309, %v2305
        %v2494 = vpack.c.b16 %v2310, %v2306
        %v2495 = vpack.c.b16 %v2311, %v2307
        %v2496 = vpack.c.b16 %v2316, %v2312
        %v2497 = vpack.c.b16 %v2317, %v2313
        %v2498 = vpack.c.b16 %v2318, %v2314
        %v2499 = vpack.c.b16 %v2319, %v2315
        %v2500 = vpack.c.b16 %v2324, %v2320
        %v2501 = vpack.c.b16 %v2325, %v2321
        %v2502 = vpack.c.b16 %v2326, %v2322
        %v2503 = vpack.c.b16 %v2327, %v2323
        %v2504 = vpack.c.b16 %v2332, %v2328
        %v2505 = vpack.c.b16 %v2333, %v2329
        %v2506 = vpack.c.b16 %v2334, %v2330
        %v2507 = vpack.c.b16 %v2335, %v2331
        %v2508 = vpack.c.b16 %v2340, %v2336
        %v2509 = vpack.c.b16 %v2341, %v2337
        %v2510 = vpack.c.b16 %v2342, %v2338
        %v2511 = vpack.c.b16 %v2343, %v2339
        %v2512 = vpack.c.b16 %v2348, %v2344
        %v2513 = vpack.c.b16 %v2349, %v2345
        %v2514 = vpack.c.b16 %v2350, %v2346
        %v2515 = vpack.c.b16 %v2351, %v2347
        %v2516 = vpack.c.b16 %v2356, %v2352
        %v2517 = vpack.c.b16 %v2357, %v2353
        %v2518 = vpack.c.b16 %v2358, %v2354
        %v2519 = vpack.c.b16 %v2359, %v2355
        %v2520 = vpack.c.b16 %v2364, %v2360
        %v2521 = vpack.c.b16 %v2365, %v2361
        %v2522 = vpack.c.b16 %v2366, %v2362
        %v2523 = vpack.c.b16 %v2367, %v2363
        %v2524 = vpack.c.b16 %v2372, %v2368
        %v2525 = vpack.c.b16 %v2373, %v2369
        %v2526 = vpack.c.b16 %v2374, %v2370
        %v2527 = vpack.c.b16 %v2375, %v2371
        %v2528 = vpack.c.b16 %v2380, %v2376
        %v2529 = vpack.c.b16 %v2381, %v2377
        %v2530 = vpack.c.b16 %v2382, %v2378
        %v2531 = vpack.c.b16 %v2383, %v2379
        %v2532 = vpack.c.b16 %v2388, %v2384
        %v2533 = vpack.c.b16 %v2389, %v2385
        %v2534 = vpack.c.b16 %v2390, %v2386
        %v2535 = vpack.c.b16 %v2391, %v2387
        %v2536 = vpack.c.b16 %v2396, %v2392
        %v2537 = vpack.c.b16 %v2397, %v2393
        %v2538 = vpack.c.b16 %v2398, %v2394
        %v2539 = vpack.c.b16 %v2399, %v2395
        %v2540 = vpack.c.b16 %v2404, %v2400
        %v2541 = vpack.c.b16 %v2405, %v2401
        %v2542 = vpack.c.b16 %v2406, %v2402
        %v2543 = vpack.c.b16 %v2407, %v2403
        %v2544 = vpack.c.b16 %v2412, %v2408
        %v2545 = vpack.c.b16 %v2413, %v2409
        %v2546 = vpack.c.b16 %v2414, %v2410
        %v2547 = vpack.c.b16 %v2415, %v2411
        %v2548 = vpack.c.b16 %v2420, %v2416
        %v2549 = vpack.c.b16 %v2421, %v2417
        %v2550 = vpack.c.b16 %v2422, %v2418
        %v2551 = vpack.c.b16 %v2423, %v2419
        %2680 = vmatprep.subr.bf16.mxu0 %v2425
        %2681 = vmatpush1.bf16.msra.mxu0 %v2424
        %2682 = vmatprep.subr.bf16.mxu0 %v2429
        %2683 = vmatpush1.bf16.msra.mxu0 %v2428
        %2684 = vmatprep.subr.bf16.mxu0 %v2433
        %2685 = vmatpush1.bf16.msra.mxu0 %v2432
        %2686 = vmatprep.subr.bf16.mxu0 %v2437
        %2687 = vmatpush1.bf16.msra.mxu0 %v2436
        %2688 = vmatprep.subr.bf16.mxu0 %v2441
        %2689 = vmatpush1.bf16.msra.mxu0 %v2440
        %2690 = vmatprep.subr.bf16.mxu0 %v2445
        %2691 = vmatpush1.bf16.msra.mxu0 %v2444
        %2692 = vmatprep.subr.bf16.mxu0 %v2449
        %2693 = vmatpush1.bf16.msra.mxu0 %v2448
        %2694 = vmatprep.subr.bf16.mxu0 %v2453
        %2695 = vmatpush1.bf16.msra.mxu0 %v2452
        %2696 = vmatprep.subr.bf16.mxu0 %v2457
        %2697 = vmatpush1.bf16.msra.mxu0 %v2456
        %2698 = vmatprep.subr.bf16.mxu0 %v2461
        %2699 = vmatpush1.bf16.msra.mxu0 %v2460
        %2700 = vmatprep.subr.bf16.mxu0 %v2465
        %2701 = vmatpush1.bf16.msra.mxu0 %v2464
        %2702 = vmatprep.subr.bf16.mxu0 %v2469
        %2703 = vmatpush1.bf16.msra.mxu0 %v2468
        %2704 = vmatprep.subr.bf16.mxu0 %v2473
        %2705 = vmatpush1.bf16.msra.mxu0 %v2472
        %2706 = vmatprep.subr.bf16.mxu0 %v2477
        %2707 = vmatpush1.bf16.msra.mxu0 %v2476
        %2708 = vmatprep.subr.bf16.mxu0 %v2481
        %2709 = vmatpush1.bf16.msra.mxu0 %v2480
        %2710 = vmatprep.subr.bf16.mxu0 %v2485
        %2711 = vmatpush1.bf16.msra.mxu0 %v2484
        %2712 = vmatprep.mubr.bf16.mxu0 %v1859
        %2713 = vmatmul.mubr.bf16.gmra.mrb[0].mxu0 %v1858
        %v2714 = vpop.f32.mrb[0].mxu0
        %v2715 = vadd.f32 %v2023, %v2714
        %v2716 = vpop.f32.mrb[0].mxu0
        %v2717 = vadd.f32 %v2027, %v2716
        %v2718 = vpop.f32.mrb[0].mxu0
        %v2719 = vadd.f32 %v2023, %v2718
        %v2720 = vpop.f32.mrb[0].mxu0
        %v2721 = vadd.f32 %v2027, %v2720
        %2722 = vmatprep.mubr.bf16.mxu0 %v1863
        %2723 = vmatmul.mubr.bf16.gmra.mrb[0].mxu0 %v1862
        %v2724 = vpop.f32.mrb[0].mxu0
        %v2725 = vadd.f32 %v2023, %v2724
        %v2726 = vpop.f32.mrb[0].mxu0
        %v2727 = vadd.f32 %v2027, %v2726
        %v2728 = vpop.f32.mrb[0].mxu0
        %v2729 = vadd.f32 %v2023, %v2728
        %v2730 = vpop.f32.mrb[0].mxu0
        %v2731 = vadd.f32 %v2027, %v2730
        %2732 = vmatprep.mubr.bf16.mxu0 %v1867
        %2733 = vmatmul.mubr.bf16.gmra.mrb[0].mxu0 %v1866
        %v2734 = vpop.f32.mrb[0].mxu0
        %v2735 = vadd.f32 %v2023, %v2734
        %v2736 = vpop.f32.mrb[0].mxu0
        %v2737 = vadd.f32 %v2027, %v2736
        %v2738 = vpop.f32.mrb[0].mxu0
        %v2739 = vadd.f32 %v2023, %v2738
        %v2740 = vpop.f32.mrb[0].mxu0
        %v2741 = vadd.f32 %v2027, %v2740
        %2742 = vmatprep.mubr.bf16.mxu0 %v1871
        %2743 = vmatmul.mubr.bf16.gmra.mrb[0].mxu0 %v1870
        %v2744 = vpop.f32.mrb[0].mxu0
        %v2745 = vadd.f32 %v2023, %v2744
        %v2746 = vpop.f32.mrb[0].mxu0
        %v2747 = vadd.f32 %v2027, %v2746
        %v2748 = vpop.f32.mrb[0].mxu0
        %v2749 = vadd.f32 %v2023, %v2748
        %v2750 = vpop.f32.mrb[0].mxu0
        %v2751 = vadd.f32 %v2027, %v2750
        %2752 = vmatprep.mubr.bf16.mxu0 %v1875
        %2753 = vmatmul.mubr.bf16.gmra.mrb[0].mxu0 %v1874
        %v2754 = vpop.f32.mrb[0].mxu0
        %v2755 = vadd.f32 %v2023, %v2754
        %v2756 = vpop.f32.mrb[0].mxu0
        %v2757 = vadd.f32 %v2027, %v2756
        %v2758 = vpop.f32.mrb[0].mxu0
        %v2759 = vadd.f32 %v2023, %v2758
        %v2760 = vpop.f32.mrb[0].mxu0
        %v2761 = vadd.f32 %v2027, %v2760
        %2762 = vmatprep.mubr.bf16.mxu0 %v1879
        %2763 = vmatmul.mubr.bf16.gmra.mrb[0].mxu0 %v1878
        %v2764 = vpop.f32.mrb[0].mxu0
        %v2765 = vadd.f32 %v2023, %v2764
        %v2766 = vpop.f32.mrb[0].mxu0
        %v2767 = vadd.f32 %v2027, %v2766
        %v2768 = vpop.f32.mrb[0].mxu0
        %v2769 = vadd.f32 %v2023, %v2768
        %v2770 = vpop.f32.mrb[0].mxu0
        %v2771 = vadd.f32 %v2027, %v2770
        %2772 = vmatprep.mubr.bf16.mxu0 %v1883
        %2773 = vmatmul.mubr.bf16.gmra.mrb[0].mxu0 %v1882
        %v2774 = vpop.f32.mrb[0].mxu0
        %v2775 = vadd.f32 %v2023, %v2774
        %v2776 = vpop.f32.mrb[0].mxu0
        %v2777 = vadd.f32 %v2027, %v2776
        %v2778 = vpop.f32.mrb[0].mxu0
        %v2779 = vadd.f32 %v2023, %v2778
        %v2780 = vpop.f32.mrb[0].mxu0
        %v2781 = vadd.f32 %v2027, %v2780
        %2782 = vmatprep.mubr.bf16.mxu0 %v1887
        %2783 = vmatmul.mubr.bf16.gmra.mrb[0].mxu0 %v1886
        %v2784 = vpop.f32.mrb[0].mxu0
        %v2785 = vadd.f32 %v2023, %v2784
        %v2786 = vpop.f32.mrb[0].mxu0
        %v2787 = vadd.f32 %v2027, %v2786
        %v2788 = vpop.f32.mrb[0].mxu0
        %v2789 = vadd.f32 %v2023, %v2788
        %v2790 = vpop.f32.mrb[0].mxu0
        %v2791 = vadd.f32 %v2027, %v2790
        %2792 = vdwg.mxu0
        %2793 = vmatprep.subr.bf16.mxu0 %v2489
        %2794 = vmatpush1.bf16.msra.mxu0 %v2488
        %2795 = vmatprep.subr.bf16.mxu0 %v2493
        %2796 = vmatpush1.bf16.msra.mxu0 %v2492
        %2797 = vmatprep.subr.bf16.mxu0 %v2497
        %2798 = vmatpush1.bf16.msra.mxu0 %v2496
        %2799 = vmatprep.subr.bf16.mxu0 %v2501
        %2800 = vmatpush1.bf16.msra.mxu0 %v2500
        %2801 = vmatprep.subr.bf16.mxu0 %v2505
        %2802 = vmatpush1.bf16.msra.mxu0 %v2504
        %2803 = vmatprep.subr.bf16.mxu0 %v2509
        %2804 = vmatpush1.bf16.msra.mxu0 %v2508
        %2805 = vmatprep.subr.bf16.mxu0 %v2513
        %2806 = vmatpush1.bf16.msra.mxu0 %v2512
        %2807 = vmatprep.subr.bf16.mxu0 %v2517
        %2808 = vmatpush1.bf16.msra.mxu0 %v2516
        %2809 = vmatprep.subr.bf16.mxu0 %v2521
        %2810 = vmatpush1.bf16.msra.mxu0 %v2520
        %2811 = vmatprep.subr.bf16.mxu0 %v2525
        %2812 = vmatpush1.bf16.msra.mxu0 %v2524
        %2813 = vmatprep.subr.bf16.mxu0 %v2529
        %2814 = vmatpush1.bf16.msra.mxu0 %v2528
        %2815 = vmatprep.subr.bf16.mxu0 %v2533
        %2816 = vmatpush1.bf16.msra.mxu0 %v2532
        %2817 = vmatprep.subr.bf16.mxu0 %v2537
        %2818 = vmatpush1.bf16.msra.mxu0 %v2536
        %2819 = vmatprep.subr.bf16.mxu0 %v2541
        %2820 = vmatpush1.bf16.msra.mxu0 %v2540
        %2821 = vmatprep.subr.bf16.mxu0 %v2545
        %2822 = vmatpush1.bf16.msra.mxu0 %v2544
        %2823 = vmatprep.subr.bf16.mxu0 %v2549
        %2824 = vmatpush1.bf16.msra.mxu0 %v2548
        %2825 = vmatprep.mubr.bf16.mxu0 %v1861
        %2826 = vmatmul.mubr.bf16.gmra.mrb[0].mxu0 %v1860
        %v2827 = vpop.f32.mrb[0].mxu0
        %v2828 = vadd.f32 %v2715, %v2827
        %v2829 = vpop.f32.mrb[0].mxu0
        %v2830 = vadd.f32 %v2717, %v2829
        %v2831 = vpop.f32.mrb[0].mxu0
        %v2832 = vadd.f32 %v2719, %v2831
        %v2833 = vpop.f32.mrb[0].mxu0
        %v2834 = vadd.f32 %v2721, %v2833
        %2835 = vmatprep.mubr.bf16.mxu0 %v1865
        %2836 = vmatmul.mubr.bf16.gmra.mrb[0].mxu0 %v1864
        %v2837 = vpop.f32.mrb[0].mxu0
        %v2838 = vadd.f32 %v2725, %v2837
        %v2839 = vpop.f32.mrb[0].mxu0
        %v2840 = vadd.f32 %v2727, %v2839
        %v2841 = vpop.f32.mrb[0].mxu0
        %v2842 = vadd.f32 %v2729, %v2841
        %v2843 = vpop.f32.mrb[0].mxu0
        %v2844 = vadd.f32 %v2731, %v2843
        %2845 = vmatprep.mubr.bf16.mxu0 %v1869
        %2846 = vmatmul.mubr.bf16.gmra.mrb[0].mxu0 %v1868
        %v2847 = vpop.f32.mrb[0].mxu0
        %v2848 = vadd.f32 %v2735, %v2847
        %v2849 = vpop.f32.mrb[0].mxu0
        %v2850 = vadd.f32 %v2737, %v2849
        %v2851 = vpop.f32.mrb[0].mxu0
        %v2852 = vadd.f32 %v2739, %v2851
        %v2853 = vpop.f32.mrb[0].mxu0
        %v2854 = vadd.f32 %v2741, %v2853
        %2855 = vmatprep.mubr.bf16.mxu0 %v1873
        %2856 = vmatmul.mubr.bf16.gmra.mrb[0].mxu0 %v1872
        %v2857 = vpop.f32.mrb[0].mxu0
        %v2858 = vadd.f32 %v2745, %v2857
        %v2859 = vpop.f32.mrb[0].mxu0
        %v2860 = vadd.f32 %v2747, %v2859
        %v2861 = vpop.f32.mrb[0].mxu0
        %v2862 = vadd.f32 %v2749, %v2861
        %v2863 = vpop.f32.mrb[0].mxu0
        %v2864 = vadd.f32 %v2751, %v2863
        %2865 = vmatprep.mubr.bf16.mxu0 %v1877
        %2866 = vmatmul.mubr.bf16.gmra.mrb[0].mxu0 %v1876
        %v2867 = vpop.f32.mrb[0].mxu0
        %v2868 = vadd.f32 %v2755, %v2867
        %v2869 = vpop.f32.mrb[0].mxu0
        %v2870 = vadd.f32 %v2757, %v2869
        %v2871 = vpop.f32.mrb[0].mxu0
        %v2872 = vadd.f32 %v2759, %v2871
        %v2873 = vpop.f32.mrb[0].mxu0
        %v2874 = vadd.f32 %v2761, %v2873
        %2875 = vmatprep.mubr.bf16.mxu0 %v1881
        %2876 = vmatmul.mubr.bf16.gmra.mrb[0].mxu0 %v1880
        %v2877 = vpop.f32.mrb[0].mxu0
        %v2878 = vadd.f32 %v2765, %v2877
        %v2879 = vpop.f32.mrb[0].mxu0
        %v2880 = vadd.f32 %v2767, %v2879
        %v2881 = vpop.f32.mrb[0].mxu0
        %v2882 = vadd.f32 %v2769, %v2881
        %v2883 = vpop.f32.mrb[0].mxu0
        %v2884 = vadd.f32 %v2771, %v2883
        %2885 = vmatprep.mubr.bf16.mxu0 %v1885
        %2886 = vmatmul.mubr.bf16.gmra.mrb[0].mxu0 %v1884
        %v2887 = vpop.f32.mrb[0].mxu0
        %v2888 = vadd.f32 %v2775, %v2887
        %v2889 = vpop.f32.mrb[0].mxu0
        %v2890 = vadd.f32 %v2777, %v2889
        %v2891 = vpop.f32.mrb[0].mxu0
        %v2892 = vadd.f32 %v2779, %v2891
        %v2893 = vpop.f32.mrb[0].mxu0
        %v2894 = vadd.f32 %v2781, %v2893
        %2895 = vmatprep.mubr.bf16.mxu0 %v1889
        %2896 = vmatmul.mubr.bf16.gmra.mrb[0].mxu0 %v1888
        %v2897 = vpop.f32.mrb[0].mxu0
        %v2898 = vadd.f32 %v2785, %v2897
        %v2899 = vpop.f32.mrb[0].mxu0
        %v2900 = vadd.f32 %v2787, %v2899
        %v2901 = vpop.f32.mrb[0].mxu0
        %v2902 = vadd.f32 %v2789, %v2901
        %v2903 = vpop.f32.mrb[0].mxu0
        %v2904 = vadd.f32 %v2791, %v2903
        %2905 = vdwg.mxu0
        %2906 = vmatprep.subr.bf16.mxu0 %v2427
        %2907 = vmatpush1.bf16.msra.mxu0 %v2426
        %2908 = vmatprep.subr.bf16.mxu0 %v2431
        %2909 = vmatpush1.bf16.msra.mxu0 %v2430
        %2910 = vmatprep.subr.bf16.mxu0 %v2435
        %2911 = vmatpush1.bf16.msra.mxu0 %v2434
        %2912 = vmatprep.subr.bf16.mxu0 %v2439
        %2913 = vmatpush1.bf16.msra.mxu0 %v2438
        %2914 = vmatprep.subr.bf16.mxu0 %v2443
        %2915 = vmatpush1.bf16.msra.mxu0 %v2442
        %2916 = vmatprep.subr.bf16.mxu0 %v2447
        %2917 = vmatpush1.bf16.msra.mxu0 %v2446
        %2918 = vmatprep.subr.bf16.mxu0 %v2451
        %2919 = vmatpush1.bf16.msra.mxu0 %v2450
        %2920 = vmatprep.subr.bf16.mxu0 %v2455
        %2921 = vmatpush1.bf16.msra.mxu0 %v2454
        %2922 = vmatprep.subr.bf16.mxu0 %v2459
        %2923 = vmatpush1.bf16.msra.mxu0 %v2458
        %2924 = vmatprep.subr.bf16.mxu0 %v2463
        %2925 = vmatpush1.bf16.msra.mxu0 %v2462
        %2926 = vmatprep.subr.bf16.mxu0 %v2467
        %2927 = vmatpush1.bf16.msra.mxu0 %v2466
        %2928 = vmatprep.subr.bf16.mxu0 %v2471
        %2929 = vmatpush1.bf16.msra.mxu0 %v2470
        %2930 = vmatprep.subr.bf16.mxu0 %v2475
        %2931 = vmatpush1.bf16.msra.mxu0 %v2474
        %2932 = vmatprep.subr.bf16.mxu0 %v2479
        %2933 = vmatpush1.bf16.msra.mxu0 %v2478
        %2934 = vmatprep.subr.bf16.mxu0 %v2483
        %2935 = vmatpush1.bf16.msra.mxu0 %v2482
        %2936 = vmatprep.subr.bf16.mxu0 %v2487
        %2937 = vmatpush1.bf16.msra.mxu0 %v2486
        %2938 = vmatprep.mubr.bf16.mxu0 %v1859
        %2939 = vmatmul.mubr.bf16.gmra.mrb[0].mxu0 %v1858
        %v2940 = vpop.f32.mrb[0].mxu0
        %v2941 = vadd.f32 %v2031, %v2940
        %v2942 = vpop.f32.mrb[0].mxu0
        %v2943 = vadd.f32 %v2035, %v2942
        %v2944 = vpop.f32.mrb[0].mxu0
        %v2945 = vadd.f32 %v2031, %v2944
        %v2946 = vpop.f32.mrb[0].mxu0
        %v2947 = vadd.f32 %v2035, %v2946
        %2948 = vmatprep.mubr.bf16.mxu0 %v1863
        %2949 = vmatmul.mubr.bf16.gmra.mrb[0].mxu0 %v1862
        %v2950 = vpop.f32.mrb[0].mxu0
        %v2951 = vadd.f32 %v2031, %v2950
        %v2952 = vpop.f32.mrb[0].mxu0
        %v2953 = vadd.f32 %v2035, %v2952
        %v2954 = vpop.f32.mrb[0].mxu0
        %v2955 = vadd.f32 %v2031, %v2954
        %v2956 = vpop.f32.mrb[0].mxu0
        %v2957 = vadd.f32 %v2035, %v2956
        %2958 = vmatprep.mubr.bf16.mxu0 %v1867
        %2959 = vmatmul.mubr.bf16.gmra.mrb[0].mxu0 %v1866
        %v2960 = vpop.f32.mrb[0].mxu0
        %v2961 = vadd.f32 %v2031, %v2960
        %v2962 = vpop.f32.mrb[0].mxu0
        %v2963 = vadd.f32 %v2035, %v2962
        %v2964 = vpop.f32.mrb[0].mxu0
        %v2965 = vadd.f32 %v2031, %v2964
        %v2966 = vpop.f32.mrb[0].mxu0
        %v2967 = vadd.f32 %v2035, %v2966
        %2968 = vmatprep.mubr.bf16.mxu0 %v1871
        %2969 = vmatmul.mubr.bf16.gmra.mrb[0].mxu0 %v1870
        %v2970 = vpop.f32.mrb[0].mxu0
        %v2971 = vadd.f32 %v2031, %v2970
        %v2972 = vpop.f32.mrb[0].mxu0
        %v2973 = vadd.f32 %v2035, %v2972
        %v2974 = vpop.f32.mrb[0].mxu0
        %v2975 = vadd.f32 %v2031, %v2974
        %v2976 = vpop.f32.mrb[0].mxu0
        %v2977 = vadd.f32 %v2035, %v2976
        %2978 = vmatprep.mubr.bf16.mxu0 %v1875
        %2979 = vmatmul.mubr.bf16.gmra.mrb[0].mxu0 %v1874
        %v2980 = vpop.f32.mrb[0].mxu0
        %v2981 = vadd.f32 %v2031, %v2980
        %v2982 = vpop.f32.mrb[0].mxu0
        %v2983 = vadd.f32 %v2035, %v2982
        %v2984 = vpop.f32.mrb[0].mxu0
        %v2985 = vadd.f32 %v2031, %v2984
        %v2986 = vpop.f32.mrb[0].mxu0
        %v2987 = vadd.f32 %v2035, %v2986
        %2988 = vmatprep.mubr.bf16.mxu0 %v1879
        %2989 = vmatmul.mubr.bf16.gmra.mrb[0].mxu0 %v1878
        %v2990 = vpop.f32.mrb[0].mxu0
        %v2991 = vadd.f32 %v2031, %v2990
        %v2992 = vpop.f32.mrb[0].mxu0
        %v2993 = vadd.f32 %v2035, %v2992
        %v2994 = vpop.f32.mrb[0].mxu0
        %v2995 = vadd.f32 %v2031, %v2994
        %v2996 = vpop.f32.mrb[0].mxu0
        %v2997 = vadd.f32 %v2035, %v2996
        %2998 = vmatprep.mubr.bf16.mxu0 %v1883
        %2999 = vmatmul.mubr.bf16.gmra.mrb[0].mxu0 %v1882
        %v3000 = vpop.f32.mrb[0].mxu0
        %v3001 = vadd.f32 %v2031, %v3000
        %v3002 = vpop.f32.mrb[0].mxu0
        %v3003 = vadd.f32 %v2035, %v3002
        %v3004 = vpop.f32.mrb[0].mxu0
        %v3005 = vadd.f32 %v2031, %v3004
        %v3006 = vpop.f32.mrb[0].mxu0
        %v3007 = vadd.f32 %v2035, %v3006
        %3008 = vmatprep.mubr.bf16.mxu0 %v1887
        %3009 = vmatmul.mubr.bf16.gmra.mrb[0].mxu0 %v1886
        %v3010 = vpop.f32.mrb[0].mxu0
        %v3011 = vadd.f32 %v2031, %v3010
        %v3012 = vpop.f32.mrb[0].mxu0
        %v3013 = vadd.f32 %v2035, %v3012
        %v3014 = vpop.f32.mrb[0].mxu0
        %v3015 = vadd.f32 %v2031, %v3014
        %v3016 = vpop.f32.mrb[0].mxu0
        %v3017 = vadd.f32 %v2035, %v3016
        %3018 = vdwg.mxu0
        %3019 = vmatprep.subr.bf16.mxu0 %v2491
        %3020 = vmatpush1.bf16.msra.mxu0 %v2490
        %3021 = vmatprep.subr.bf16.mxu0 %v2495
        %3022 = vmatpush1.bf16.msra.mxu0 %v2494
        %3023 = vmatprep.subr.bf16.mxu0 %v2499
        %3024 = vmatpush1.bf16.msra.mxu0 %v2498
        %3025 = vmatprep.subr.bf16.mxu0 %v2503
        %3026 = vmatpush1.bf16.msra.mxu0 %v2502
        %3027 = vmatprep.subr.bf16.mxu0 %v2507
        %3028 = vmatpush1.bf16.msra.mxu0 %v2506
        %3029 = vmatprep.subr.bf16.mxu0 %v2511
        %3030 = vmatpush1.bf16.msra.mxu0 %v2510
        %3031 = vmatprep.subr.bf16.mxu0 %v2515
        %3032 = vmatpush1.bf16.msra.mxu0 %v2514
        %3033 = vmatprep.subr.bf16.mxu0 %v2519
        %3034 = vmatpush1.bf16.msra.mxu0 %v2518
        %3035 = vmatprep.subr.bf16.mxu0 %v2523
        %3036 = vmatpush1.bf16.msra.mxu0 %v2522
        %3037 = vmatprep.subr.bf16.mxu0 %v2527
        %3038 = vmatpush1.bf16.msra.mxu0 %v2526
        %3039 = vmatprep.subr.bf16.mxu0 %v2531
        %3040 = vmatpush1.bf16.msra.mxu0 %v2530
        %3041 = vmatprep.subr.bf16.mxu0 %v2535
        %3042 = vmatpush1.bf16.msra.mxu0 %v2534
        %3043 = vmatprep.subr.bf16.mxu0 %v2539
        %3044 = vmatpush1.bf16.msra.mxu0 %v2538
        %3045 = vmatprep.subr.bf16.mxu0 %v2543
        %3046 = vmatpush1.bf16.msra.mxu0 %v2542
        %3047 = vmatprep.subr.bf16.mxu0 %v2547
        %3048 = vmatpush1.bf16.msra.mxu0 %v2546
        %3049 = vmatprep.subr.bf16.mxu0 %v2551
        %3050 = vmatpush1.bf16.msra.mxu0 %v2550
        %3051 = vmatprep.mubr.bf16.mxu0 %v1861
        %3052 = vmatmul.mubr.bf16.gmra.mrb[0].mxu0 %v1860
        %v3053 = vpop.f32.mrb[0].mxu0
        %v3054 = vadd.f32 %v2941, %v3053
        %v3055 = vpop.f32.mrb[0].mxu0
        %v3056 = vadd.f32 %v2943, %v3055
        %v3057 = vpop.f32.mrb[0].mxu0
        %v3058 = vadd.f32 %v2945, %v3057
        %v3059 = vpop.f32.mrb[0].mxu0
        %v3060 = vadd.f32 %v2947, %v3059
        %3061 = vmatprep.mubr.bf16.mxu0 %v1865
        %3062 = vmatmul.mubr.bf16.gmra.mrb[0].mxu0 %v1864
        %v3063 = vpop.f32.mrb[0].mxu0
        %v3064 = vadd.f32 %v2951, %v3063
        %v3065 = vpop.f32.mrb[0].mxu0
        %v3066 = vadd.f32 %v2953, %v3065
        %v3067 = vpop.f32.mrb[0].mxu0
        %v3068 = vadd.f32 %v2955, %v3067
        %v3069 = vpop.f32.mrb[0].mxu0
        %v3070 = vadd.f32 %v2957, %v3069
        %3071 = vmatprep.mubr.bf16.mxu0 %v1869
        %3072 = vmatmul.mubr.bf16.gmra.mrb[0].mxu0 %v1868
        %v3073 = vpop.f32.mrb[0].mxu0
        %v3074 = vadd.f32 %v2961, %v3073
        %v3075 = vpop.f32.mrb[0].mxu0
        %v3076 = vadd.f32 %v2963, %v3075
        %v3077 = vpop.f32.mrb[0].mxu0
        %v3078 = vadd.f32 %v2965, %v3077
        %v3079 = vpop.f32.mrb[0].mxu0
        %v3080 = vadd.f32 %v2967, %v3079
        %3081 = vmatprep.mubr.bf16.mxu0 %v1873
        %3082 = vmatmul.mubr.bf16.gmra.mrb[0].mxu0 %v1872
        %v3083 = vpop.f32.mrb[0].mxu0
        %v3084 = vadd.f32 %v2971, %v3083
        %v3085 = vpop.f32.mrb[0].mxu0
        %v3086 = vadd.f32 %v2973, %v3085
        %v3087 = vpop.f32.mrb[0].mxu0
        %v3088 = vadd.f32 %v2975, %v3087
        %v3089 = vpop.f32.mrb[0].mxu0
        %v3090 = vadd.f32 %v2977, %v3089
        %3091 = vmatprep.mubr.bf16.mxu0 %v1877
        %3092 = vmatmul.mubr.bf16.gmra.mrb[0].mxu0 %v1876
        %v3093 = vpop.f32.mrb[0].mxu0
        %v3094 = vadd.f32 %v2981, %v3093
        %v3095 = vpop.f32.mrb[0].mxu0
        %v3096 = vadd.f32 %v2983, %v3095
        %v3097 = vpop.f32.mrb[0].mxu0
        %v3098 = vadd.f32 %v2985, %v3097
        %v3099 = vpop.f32.mrb[0].mxu0
        %v3100 = vadd.f32 %v2987, %v3099
        %3101 = vmatprep.mubr.bf16.mxu0 %v1881
        %3102 = vmatmul.mubr.bf16.gmra.mrb[0].mxu0 %v1880
        %v3103 = vpop.f32.mrb[0].mxu0
        %v3104 = vadd.f32 %v2991, %v3103
        %v3105 = vpop.f32.mrb[0].mxu0
        %v3106 = vadd.f32 %v2993, %v3105
        %v3107 = vpop.f32.mrb[0].mxu0
        %v3108 = vadd.f32 %v2995, %v3107
        %v3109 = vpop.f32.mrb[0].mxu0
        %v3110 = vadd.f32 %v2997, %v3109
        %3111 = vmatprep.mubr.bf16.mxu0 %v1885
        %3112 = vmatmul.mubr.bf16.gmra.mrb[0].mxu0 %v1884
        %v3113 = vpop.f32.mrb[0].mxu0
        %v3114 = vadd.f32 %v3001, %v3113
        %v3115 = vpop.f32.mrb[0].mxu0
        %v3116 = vadd.f32 %v3003, %v3115
        %v3117 = vpop.f32.mrb[0].mxu0
        %v3118 = vadd.f32 %v3005, %v3117
        %v3119 = vpop.f32.mrb[0].mxu0
        %v3120 = vadd.f32 %v3007, %v3119
        %3121 = vmatprep.mubr.bf16.mxu0 %v1889
        %3122 = vmatmul.mubr.bf16.gmra.mrb[0].mxu0 %v1888
        %v3123 = vpop.f32.mrb[0].mxu0
        %v3124 = vadd.f32 %v3011, %v3123
        %v3125 = vpop.f32.mrb[0].mxu0
        %v3126 = vadd.f32 %v3013, %v3125
        %v3127 = vpop.f32.mrb[0].mxu0
        %v3128 = vadd.f32 %v3015, %v3127
        %v3129 = vpop.f32.mrb[0].mxu0
        %v3130 = vadd.f32 %v3017, %v3129
        %3131 = vdwg.mxu0
        %v3132 = vmul.f32 %v2828, %v2828
        %v3133 = vmul.f32 %v2830, %v2830
        %v3134 = vmul.f32 %v3054, %v3054
        %v3135 = vmul.f32 %v3056, %v3056
        %v3136 = vmul.f32 %v2832, %v2832
        %v3137 = vmul.f32 %v2834, %v2834
        %v3138 = vmul.f32 %v3058, %v3058
        %v3139 = vmul.f32 %v3060, %v3060
        %v3140 = vmul.f32 %v2838, %v2838
        %v3141 = vmul.f32 %v2840, %v2840
        %v3142 = vmul.f32 %v3064, %v3064
        %v3143 = vmul.f32 %v3066, %v3066
        %v3144 = vmul.f32 %v2842, %v2842
        %v3145 = vmul.f32 %v2844, %v2844
        %v3146 = vmul.f32 %v3068, %v3068
        %v3147 = vmul.f32 %v3070, %v3070
        %v3148 = vmul.f32 %v2848, %v2848
        %v3149 = vmul.f32 %v2850, %v2850
        %v3150 = vmul.f32 %v3074, %v3074
        %v3151 = vmul.f32 %v3076, %v3076
        %v3152 = vmul.f32 %v2852, %v2852
        %v3153 = vmul.f32 %v2854, %v2854
        %v3154 = vmul.f32 %v3078, %v3078
        %v3155 = vmul.f32 %v3080, %v3080
        %v3156 = vmul.f32 %v2858, %v2858
        %v3157 = vmul.f32 %v2860, %v2860
        %v3158 = vmul.f32 %v3084, %v3084
        %v3159 = vmul.f32 %v3086, %v3086
        %v3160 = vmul.f32 %v2862, %v2862
        %v3161 = vmul.f32 %v2864, %v2864
        %v3162 = vmul.f32 %v3088, %v3088
        %v3163 = vmul.f32 %v3090, %v3090
        %v3164 = vmul.f32 %v2868, %v2868
        %v3165 = vmul.f32 %v2870, %v2870
        %v3166 = vmul.f32 %v3094, %v3094
        %v3167 = vmul.f32 %v3096, %v3096
        %v3168 = vmul.f32 %v2872, %v2872
        %v3169 = vmul.f32 %v2874, %v2874
        %v3170 = vmul.f32 %v3098, %v3098
        %v3171 = vmul.f32 %v3100, %v3100
        %v3172 = vmul.f32 %v2878, %v2878
        %v3173 = vmul.f32 %v2880, %v2880
        %v3174 = vmul.f32 %v3104, %v3104
        %v3175 = vmul.f32 %v3106, %v3106
        %v3176 = vmul.f32 %v2882, %v2882
        %v3177 = vmul.f32 %v2884, %v2884
        %v3178 = vmul.f32 %v3108, %v3108
        %v3179 = vmul.f32 %v3110, %v3110
        %v3180 = vmul.f32 %v2888, %v2888
        %v3181 = vmul.f32 %v2890, %v2890
        %v3182 = vmul.f32 %v3114, %v3114
        %v3183 = vmul.f32 %v3116, %v3116
        %v3184 = vmul.f32 %v2892, %v2892
        %v3185 = vmul.f32 %v2894, %v2894
        %v3186 = vmul.f32 %v3118, %v3118
        %v3187 = vmul.f32 %v3120, %v3120
        %v3188 = vmul.f32 %v2898, %v2898
        %v3189 = vmul.f32 %v2900, %v2900
        %v3190 = vmul.f32 %v3124, %v3124
        %v3191 = vmul.f32 %v3126, %v3126
        %v3192 = vmul.f32 %v2902, %v2902
        %v3193 = vmul.f32 %v2904, %v2904
        %v3194 = vmul.f32 %v3128, %v3128
        %v3195 = vmul.f32 %v3130, %v3130
        %v3196 = vmul.f32 %v2828, %v3132
        %v3197 = vmul.f32 %v2830, %v3133
        %v3198 = vmul.f32 %v3054, %v3134
        %v3199 = vmul.f32 %v3056, %v3135
        %v3200 = vmul.f32 %v2832, %v3136
        %v3201 = vmul.f32 %v2834, %v3137
        %v3202 = vmul.f32 %v3058, %v3138
        %v3203 = vmul.f32 %v3060, %v3139
        %v3204 = vmul.f32 %v2838, %v3140
        %v3205 = vmul.f32 %v2840, %v3141
        %v3206 = vmul.f32 %v3064, %v3142
        %v3207 = vmul.f32 %v3066, %v3143
        %v3208 = vmul.f32 %v2842, %v3144
        %v3209 = vmul.f32 %v2844, %v3145
        %v3210 = vmul.f32 %v3068, %v3146
        %v3211 = vmul.f32 %v3070, %v3147
        %v3212 = vmul.f32 %v2848, %v3148
        %v3213 = vmul.f32 %v2850, %v3149
        %v3214 = vmul.f32 %v3074, %v3150
        %v3215 = vmul.f32 %v3076, %v3151
        %v3216 = vmul.f32 %v2852, %v3152
        %v3217 = vmul.f32 %v2854, %v3153
        %v3218 = vmul.f32 %v3078, %v3154
        %v3219 = vmul.f32 %v3080, %v3155
        %v3220 = vmul.f32 %v2858, %v3156
        %v3221 = vmul.f32 %v2860, %v3157
        %v3222 = vmul.f32 %v3084, %v3158
        %v3223 = vmul.f32 %v3086, %v3159
        %v3224 = vmul.f32 %v2862, %v3160
        %v3225 = vmul.f32 %v2864, %v3161
        %v3226 = vmul.f32 %v3088, %v3162
        %v3227 = vmul.f32 %v3090, %v3163
        %v3228 = vmul.f32 %v2868, %v3164
        %v3229 = vmul.f32 %v2870, %v3165
        %v3230 = vmul.f32 %v3094, %v3166
        %v3231 = vmul.f32 %v3096, %v3167
        %v3232 = vmul.f32 %v2872, %v3168
        %v3233 = vmul.f32 %v2874, %v3169
        %v3234 = vmul.f32 %v3098, %v3170
        %v3235 = vmul.f32 %v3100, %v3171
        %v3236 = vmul.f32 %v2878, %v3172
        %v3237 = vmul.f32 %v2880, %v3173
        %v3238 = vmul.f32 %v3104, %v3174
        %v3239 = vmul.f32 %v3106, %v3175
        %v3240 = vmul.f32 %v2882, %v3176
        %v3241 = vmul.f32 %v2884, %v3177
        %v3242 = vmul.f32 %v3108, %v3178
        %v3243 = vmul.f32 %v3110, %v3179
        %v3244 = vmul.f32 %v2888, %v3180
        %v3245 = vmul.f32 %v2890, %v3181
        %v3246 = vmul.f32 %v3114, %v3182
        %v3247 = vmul.f32 %v3116, %v3183
        %v3248 = vmul.f32 %v2892, %v3184
        %v3249 = vmul.f32 %v2894, %v3185
        %v3250 = vmul.f32 %v3118, %v3186
        %v3251 = vmul.f32 %v3120, %v3187
        %v3252 = vmul.f32 %v2898, %v3188
        %v3253 = vmul.f32 %v2900, %v3189
        %v3254 = vmul.f32 %v3124, %v3190
        %v3255 = vmul.f32 %v3126, %v3191
        %v3256 = vmul.f32 %v2902, %v3192
        %v3257 = vmul.f32 %v2904, %v3193
        %v3258 = vmul.f32 %v3128, %v3194
        %v3259 = vmul.f32 %v3130, %v3195
        %v3260 = vmul.f32 %v3196, 0.044715
        %v3261 = vmul.f32 %v3197, 0.044715
        %v3262 = vmul.f32 %v3198, 0.044715
        %v3263 = vmul.f32 %v3199, 0.044715
        %v3264 = vmul.f32 %v3200, 0.044715
        %v3265 = vmul.f32 %v3201, 0.044715
        %v3266 = vmul.f32 %v3202, 0.044715
        %v3267 = vmul.f32 %v3203, 0.044715
        %v3268 = vmul.f32 %v3204, 0.044715
        %v3269 = vmul.f32 %v3205, 0.044715
        %v3270 = vmul.f32 %v3206, 0.044715
        %v3271 = vmul.f32 %v3207, 0.044715
        %v3272 = vmul.f32 %v3208, 0.044715
        %v3273 = vmul.f32 %v3209, 0.044715
        %v3274 = vmul.f32 %v3210, 0.044715
        %v3275 = vmul.f32 %v3211, 0.044715
        %v3276 = vmul.f32 %v3212, 0.044715
        %v3277 = vmul.f32 %v3213, 0.044715
        %v3278 = vmul.f32 %v3214, 0.044715
        %v3279 = vmul.f32 %v3215, 0.044715
        %v3280 = vmul.f32 %v3216, 0.044715
        %v3281 = vmul.f32 %v3217, 0.044715
        %v3282 = vmul.f32 %v3218, 0.044715
        %v3283 = vmul.f32 %v3219, 0.044715
        %v3284 = vmul.f32 %v3220, 0.044715
        %v3285 = vmul.f32 %v3221, 0.044715
        %v3286 = vmul.f32 %v3222, 0.044715
        %v3287 = vmul.f32 %v3223, 0.044715
        %v3288 = vmul.f32 %v3224, 0.044715
        %v3289 = vmul.f32 %v3225, 0.044715
        %v3290 = vmul.f32 %v3226, 0.044715
        %v3291 = vmul.f32 %v3227, 0.044715
        %v3292 = vmul.f32 %v3228, 0.044715
        %v3293 = vmul.f32 %v3229, 0.044715
        %v3294 = vmul.f32 %v3230, 0.044715
        %v3295 = vmul.f32 %v3231, 0.044715
        %v3296 = vmul.f32 %v3232, 0.044715
        %v3297 = vmul.f32 %v3233, 0.044715
        %v3298 = vmul.f32 %v3234, 0.044715
        %v3299 = vmul.f32 %v3235, 0.044715
        %v3300 = vmul.f32 %v3236, 0.044715
        %v3301 = vmul.f32 %v3237, 0.044715
        %v3302 = vmul.f32 %v3238, 0.044715
        %v3303 = vmul.f32 %v3239, 0.044715
        %v3304 = vmul.f32 %v3240, 0.044715
        %v3305 = vmul.f32 %v3241, 0.044715
        %v3306 = vmul.f32 %v3242, 0.044715
        %v3307 = vmul.f32 %v3243, 0.044715
        %v3308 = vmul.f32 %v3244, 0.044715
        %v3309 = vmul.f32 %v3245, 0.044715
        %v3310 = vmul.f32 %v3246, 0.044715
        %v3311 = vmul.f32 %v3247, 0.044715
        %v3312 = vmul.f32 %v3248, 0.044715
        %v3313 = vmul.f32 %v3249, 0.044715
        %v3314 = vmul.f32 %v3250, 0.044715
        %v3315 = vmul.f32 %v3251, 0.044715
        %v3316 = vmul.f32 %v3252, 0.044715
        %v3317 = vmul.f32 %v3253, 0.044715
        %v3318 = vmul.f32 %v3254, 0.044715
        %v3319 = vmul.f32 %v3255, 0.044715
        %v3320 = vmul.f32 %v3256, 0.044715
        %v3321 = vmul.f32 %v3257, 0.044715
        %v3322 = vmul.f32 %v3258, 0.044715
        %v3323 = vmul.f32 %v3259, 0.044715
        %v3324 = vadd.f32 %v2828, %v3260
        %v3325 = vadd.f32 %v2830, %v3261
        %v3326 = vadd.f32 %v3054, %v3262
        %v3327 = vadd.f32 %v3056, %v3263
        %v3328 = vadd.f32 %v2832, %v3264
        %v3329 = vadd.f32 %v2834, %v3265
        %v3330 = vadd.f32 %v3058, %v3266
        %v3331 = vadd.f32 %v3060, %v3267
        %v3332 = vadd.f32 %v2838, %v3268
        %v3333 = vadd.f32 %v2840, %v3269
        %v3334 = vadd.f32 %v3064, %v3270
        %v3335 = vadd.f32 %v3066, %v3271
        %v3336 = vadd.f32 %v2842, %v3272
        %v3337 = vadd.f32 %v2844, %v3273
        %v3338 = vadd.f32 %v3068, %v3274
        %v3339 = vadd.f32 %v3070, %v3275
        %v3340 = vadd.f32 %v2848, %v3276
        %v3341 = vadd.f32 %v2850, %v3277
        %v3342 = vadd.f32 %v3074, %v3278
        %v3343 = vadd.f32 %v3076, %v3279
        %v3344 = vadd.f32 %v2852, %v3280
        %v3345 = vadd.f32 %v2854, %v3281
        %v3346 = vadd.f32 %v3078, %v3282
        %v3347 = vadd.f32 %v3080, %v3283
        %v3348 = vadd.f32 %v2858, %v3284
        %v3349 = vadd.f32 %v2860, %v3285
        %v3350 = vadd.f32 %v3084, %v3286
        %v3351 = vadd.f32 %v3086, %v3287
        %v3352 = vadd.f32 %v2862, %v3288
        %v3353 = vadd.f32 %v2864, %v3289
        %v3354 = vadd.f32 %v3088, %v3290
        %v3355 = vadd.f32 %v3090, %v3291
        %v3356 = vadd.f32 %v2868, %v3292
        %v3357 = vadd.f32 %v2870, %v3293
        %v3358 = vadd.f32 %v3094, %v3294
        %v3359 = vadd.f32 %v3096, %v3295
        %v3360 = vadd.f32 %v2872, %v3296
        %v3361 = vadd.f32 %v2874, %v3297
        %v3362 = vadd.f32 %v3098, %v3298
        %v3363 = vadd.f32 %v3100, %v3299
        %v3364 = vadd.f32 %v2878, %v3300
        %v3365 = vadd.f32 %v2880, %v3301
        %v3366 = vadd.f32 %v3104, %v3302
        %v3367 = vadd.f32 %v3106, %v3303
        %v3368 = vadd.f32 %v2882, %v3304
        %v3369 = vadd.f32 %v2884, %v3305
        %v3370 = vadd.f32 %v3108, %v3306
        %v3371 = vadd.f32 %v3110, %v3307
        %v3372 = vadd.f32 %v2888, %v3308
        %v3373 = vadd.f32 %v2890, %v3309
        %v3374 = vadd.f32 %v3114, %v3310
        %v3375 = vadd.f32 %v3116, %v3311
        %v3376 = vadd.f32 %v2892, %v3312
        %v3377 = vadd.f32 %v2894, %v3313
        %v3378 = vadd.f32 %v3118, %v3314
        %v3379 = vadd.f32 %v3120, %v3315
        %v3380 = vadd.f32 %v2898, %v3316
        %v3381 = vadd.f32 %v2900, %v3317
        %v3382 = vadd.f32 %v3124, %v3318
        %v3383 = vadd.f32 %v3126, %v3319
        %v3384 = vadd.f32 %v2902, %v3320
        %v3385 = vadd.f32 %v2904, %v3321
        %v3386 = vadd.f32 %v3128, %v3322
        %v3387 = vadd.f32 %v3130, %v3323
        %v3388 = vmul.f32 %v3324, 0.7978846
        %v3389 = vmul.f32 %v3325, 0.7978846
        %v3390 = vmul.f32 %v3326, 0.7978846
        %v3391 = vmul.f32 %v3327, 0.7978846
        %v3392 = vmul.f32 %v3328, 0.7978846
        %v3393 = vmul.f32 %v3329, 0.7978846
        %v3394 = vmul.f32 %v3330, 0.7978846
        %v3395 = vmul.f32 %v3331, 0.7978846
        %v3396 = vmul.f32 %v3332, 0.7978846
        %v3397 = vmul.f32 %v3333, 0.7978846
        %v3398 = vmul.f32 %v3334, 0.7978846
        %v3399 = vmul.f32 %v3335, 0.7978846
        %v3400 = vmul.f32 %v3336, 0.7978846
        %v3401 = vmul.f32 %v3337, 0.7978846
        %v3402 = vmul.f32 %v3338, 0.7978846
        %v3403 = vmul.f32 %v3339, 0.7978846
        %v3404 = vmul.f32 %v3340, 0.7978846
        %v3405 = vmul.f32 %v3341, 0.7978846
        %v3406 = vmul.f32 %v3342, 0.7978846
        %v3407 = vmul.f32 %v3343, 0.7978846
        %v3408 = vmul.f32 %v3344, 0.7978846
        %v3409 = vmul.f32 %v3345, 0.7978846
        %v3410 = vmul.f32 %v3346, 0.7978846
        %v3411 = vmul.f32 %v3347, 0.7978846
        %v3412 = vmul.f32 %v3348, 0.7978846
        %v3413 = vmul.f32 %v3349, 0.7978846
        %v3414 = vmul.f32 %v3350, 0.7978846
        %v3415 = vmul.f32 %v3351, 0.7978846
        %v3416 = vmul.f32 %v3352, 0.7978846
        %v3417 = vmul.f32 %v3353, 0.7978846
        %v3418 = vmul.f32 %v3354, 0.7978846
        %v3419 = vmul.f32 %v3355, 0.7978846
        %v3420 = vmul.f32 %v3356, 0.7978846
        %v3421 = vmul.f32 %v3357, 0.7978846
        %v3422 = vmul.f32 %v3358, 0.7978846
        %v3423 = vmul.f32 %v3359, 0.7978846
        %v3424 = vmul.f32 %v3360, 0.7978846
        %v3425 = vmul.f32 %v3361, 0.7978846
        %v3426 = vmul.f32 %v3362, 0.7978846
        %v3427 = vmul.f32 %v3363, 0.7978846
        %v3428 = vmul.f32 %v3364, 0.7978846
        %v3429 = vmul.f32 %v3365, 0.7978846
        %v3430 = vmul.f32 %v3366, 0.7978846
        %v3431 = vmul.f32 %v3367, 0.7978846
        %v3432 = vmul.f32 %v3368, 0.7978846
        %v3433 = vmul.f32 %v3369, 0.7978846
        %v3434 = vmul.f32 %v3370, 0.7978846
        %v3435 = vmul.f32 %v3371, 0.7978846
        %v3436 = vmul.f32 %v3372, 0.7978846
        %v3437 = vmul.f32 %v3373, 0.7978846
        %v3438 = vmul.f32 %v3374, 0.7978846
        %v3439 = vmul.f32 %v3375, 0.7978846
        %v3440 = vmul.f32 %v3376, 0.7978846
        %v3441 = vmul.f32 %v3377, 0.7978846
        %v3442 = vmul.f32 %v3378, 0.7978846
        %v3443 = vmul.f32 %v3379, 0.7978846
        %v3444 = vmul.f32 %v3380, 0.7978846
        %v3445 = vmul.f32 %v3381, 0.7978846
        %v3446 = vmul.f32 %v3382, 0.7978846
        %v3447 = vmul.f32 %v3383, 0.7978846
        %v3448 = vmul.f32 %v3384, 0.7978846
        %v3449 = vmul.f32 %v3385, 0.7978846
        %v3450 = vmul.f32 %v3386, 0.7978846
        %v3451 = vmul.f32 %v3387, 0.7978846
        %v3452 = vtanh.pop %v3388
        %v3453 = vtanh.pop %v3389
        %v3454 = vtanh.pop %v3390
        %v3455 = vtanh.pop %v3391
        %v3456 = vtanh.pop %v3392
        %v3457 = vtanh.pop %v3393
        %v3458 = vtanh.pop %v3394
        %v3459 = vtanh.pop %v3395
        %v3460 = vtanh.pop %v3396
        %v3461 = vtanh.pop %v3397
        %v3462 = vtanh.pop %v3398
        %v3463 = vtanh.pop %v3399
        %v3464 = vtanh.pop %v3400
        %v3465 = vtanh.pop %v3401
        %v3466 = vtanh.pop %v3402
        %v3467 = vtanh.pop %v3403
        %v3468 = vtanh.pop %v3404
        %v3469 = vtanh.pop %v3405
        %v3470 = vtanh.pop %v3406
        %v3471 = vtanh.pop %v3407
        %v3472 = vtanh.pop %v3408
        %v3473 = vtanh.pop %v3409
        %v3474 = vtanh.pop %v3410
        %v3475 = vtanh.pop %v3411
        %v3476 = vtanh.pop %v3412
        %v3477 = vtanh.pop %v3413
        %v3478 = vtanh.pop %v3414
        %v3479 = vtanh.pop %v3415
        %v3480 = vtanh.pop %v3416
        %v3481 = vtanh.pop %v3417
        %v3482 = vtanh.pop %v3418
        %v3483 = vtanh.pop %v3419
        %v3484 = vtanh.pop %v3420
        %v3485 = vtanh.pop %v3421
        %v3486 = vtanh.pop %v3422
        %v3487 = vtanh.pop %v3423
        %v3488 = vtanh.pop %v3424
        %v3489 = vtanh.pop %v3425
        %v3490 = vtanh.pop %v3426
        %v3491 = vtanh.pop %v3427
        %v3492 = vtanh.pop %v3428
        %v3493 = vtanh.pop %v3429
        %v3494 = vtanh.pop %v3430
        %v3495 = vtanh.pop %v3431
        %v3496 = vtanh.pop %v3432
        %v3497 = vtanh.pop %v3433
        %v3498 = vtanh.pop %v3434
        %v3499 = vtanh.pop %v3435
        %v3500 = vtanh.pop %v3436
        %v3501 = vtanh.pop %v3437
        %v3502 = vtanh.pop %v3438
        %v3503 = vtanh.pop %v3439
        %v3504 = vtanh.pop %v3440
        %v3505 = vtanh.pop %v3441
        %v3506 = vtanh.pop %v3442
        %v3507 = vtanh.pop %v3443
        %v3508 = vtanh.pop %v3444
        %v3509 = vtanh.pop %v3445
        %v3510 = vtanh.pop %v3446
        %v3511 = vtanh.pop %v3447
        %v3512 = vtanh.pop %v3448
        %v3513 = vtanh.pop %v3449
        %v3514 = vtanh.pop %v3450
        %v3515 = vtanh.pop %v3451
        %v3516 = vadd.f32 %v3452, 1.0
        %v3517 = vadd.f32 %v3453, 1.0
        %v3518 = vadd.f32 %v3454, 1.0
        %v3519 = vadd.f32 %v3455, 1.0
        %v3520 = vadd.f32 %v3456, 1.0
        %v3521 = vadd.f32 %v3457, 1.0
        %v3522 = vadd.f32 %v3458, 1.0
        %v3523 = vadd.f32 %v3459, 1.0
        %v3524 = vadd.f32 %v3460, 1.0
        %v3525 = vadd.f32 %v3461, 1.0
        %v3526 = vadd.f32 %v3462, 1.0
        %v3527 = vadd.f32 %v3463, 1.0
        %v3528 = vadd.f32 %v3464, 1.0
        %v3529 = vadd.f32 %v3465, 1.0
        %v3530 = vadd.f32 %v3466, 1.0
        %v3531 = vadd.f32 %v3467, 1.0
        %v3532 = vadd.f32 %v3468, 1.0
        %v3533 = vadd.f32 %v3469, 1.0
        %v3534 = vadd.f32 %v3470, 1.0
        %v3535 = vadd.f32 %v3471, 1.0
        %v3536 = vadd.f32 %v3472, 1.0
        %v3537 = vadd.f32 %v3473, 1.0
        %v3538 = vadd.f32 %v3474, 1.0
        %v3539 = vadd.f32 %v3475, 1.0
        %v3540 = vadd.f32 %v3476, 1.0
        %v3541 = vadd.f32 %v3477, 1.0
        %v3542 = vadd.f32 %v3478, 1.0
        %v3543 = vadd.f32 %v3479, 1.0
        %v3544 = vadd.f32 %v3480, 1.0
        %v3545 = vadd.f32 %v3481, 1.0
        %v3546 = vadd.f32 %v3482, 1.0
        %v3547 = vadd.f32 %v3483, 1.0
        %v3548 = vadd.f32 %v3484, 1.0
        %v3549 = vadd.f32 %v3485, 1.0
        %v3550 = vadd.f32 %v3486, 1.0
        %v3551 = vadd.f32 %v3487, 1.0
        %v3552 = vadd.f32 %v3488, 1.0
        %v3553 = vadd.f32 %v3489, 1.0
        %v3554 = vadd.f32 %v3490, 1.0
        %v3555 = vadd.f32 %v3491, 1.0
        %v3556 = vadd.f32 %v3492, 1.0
        %v3557 = vadd.f32 %v3493, 1.0
        %v3558 = vadd.f32 %v3494, 1.0
        %v3559 = vadd.f32 %v3495, 1.0
        %v3560 = vadd.f32 %v3496, 1.0
        %v3561 = vadd.f32 %v3497, 1.0
        %v3562 = vadd.f32 %v3498, 1.0
        %v3563 = vadd.f32 %v3499, 1.0
        %v3564 = vadd.f32 %v3500, 1.0
        %v3565 = vadd.f32 %v3501, 1.0
        %v3566 = vadd.f32 %v3502, 1.0
        %v3567 = vadd.f32 %v3503, 1.0
        %v3568 = vadd.f32 %v3504, 1.0
        %v3569 = vadd.f32 %v3505, 1.0
        %v3570 = vadd.f32 %v3506, 1.0
        %v3571 = vadd.f32 %v3507, 1.0
        %v3572 = vadd.f32 %v3508, 1.0
        %v3573 = vadd.f32 %v3509, 1.0
        %v3574 = vadd.f32 %v3510, 1.0
        %v3575 = vadd.f32 %v3511, 1.0
        %v3576 = vadd.f32 %v3512, 1.0
        %v3577 = vadd.f32 %v3513, 1.0
        %v3578 = vadd.f32 %v3514, 1.0
        %v3579 = vadd.f32 %v3515, 1.0
        %v3580 = vmul.f32 %v3516, 0.5
        %v3581 = vmul.f32 %v3517, 0.5
        %v3582 = vmul.f32 %v3518, 0.5
        %v3583 = vmul.f32 %v3519, 0.5
        %v3584 = vmul.f32 %v3520, 0.5
        %v3585 = vmul.f32 %v3521, 0.5
        %v3586 = vmul.f32 %v3522, 0.5
        %v3587 = vmul.f32 %v3523, 0.5
        %v3588 = vmul.f32 %v3524, 0.5
        %v3589 = vmul.f32 %v3525, 0.5
        %v3590 = vmul.f32 %v3526, 0.5
        %v3591 = vmul.f32 %v3527, 0.5
        %v3592 = vmul.f32 %v3528, 0.5
        %v3593 = vmul.f32 %v3529, 0.5
        %v3594 = vmul.f32 %v3530, 0.5
        %v3595 = vmul.f32 %v3531, 0.5
        %v3596 = vmul.f32 %v3532, 0.5
        %v3597 = vmul.f32 %v3533, 0.5
        %v3598 = vmul.f32 %v3534, 0.5
        %v3599 = vmul.f32 %v3535, 0.5
        %v3600 = vmul.f32 %v3536, 0.5
        %v3601 = vmul.f32 %v3537, 0.5
        %v3602 = vmul.f32 %v3538, 0.5
        %v3603 = vmul.f32 %v3539, 0.5
        %v3604 = vmul.f32 %v3540, 0.5
        %v3605 = vmul.f32 %v3541, 0.5
        %v3606 = vmul.f32 %v3542, 0.5
        %v3607 = vmul.f32 %v3543, 0.5
        %v3608 = vmul.f32 %v3544, 0.5
        %v3609 = vmul.f32 %v3545, 0.5
        %v3610 = vmul.f32 %v3546, 0.5
        %v3611 = vmul.f32 %v3547, 0.5
        %v3612 = vmul.f32 %v3548, 0.5
        %v3613 = vmul.f32 %v3549, 0.5
        %v3614 = vmul.f32 %v3550, 0.5
        %v3615 = vmul.f32 %v3551, 0.5
        %v3616 = vmul.f32 %v3552, 0.5
        %v3617 = vmul.f32 %v3553, 0.5
        %v3618 = vmul.f32 %v3554, 0.5
        %v3619 = vmul.f32 %v3555, 0.5
        %v3620 = vmul.f32 %v3556, 0.5
        %v3621 = vmul.f32 %v3557, 0.5
        %v3622 = vmul.f32 %v3558, 0.5
        %v3623 = vmul.f32 %v3559, 0.5
        %v3624 = vmul.f32 %v3560, 0.5
        %v3625 = vmul.f32 %v3561, 0.5
        %v3626 = vmul.f32 %v3562, 0.5
        %v3627 = vmul.f32 %v3563, 0.5
        %v3628 = vmul.f32 %v3564, 0.5
        %v3629 = vmul.f32 %v3565, 0.5
        %v3630 = vmul.f32 %v3566, 0.5
        %v3631 = vmul.f32 %v3567, 0.5
        %v3632 = vmul.f32 %v3568, 0.5
        %v3633 = vmul.f32 %v3569, 0.5
        %v3634 = vmul.f32 %v3570, 0.5
        %v3635 = vmul.f32 %v3571, 0.5
        %v3636 = vmul.f32 %v3572, 0.5
        %v3637 = vmul.f32 %v3573, 0.5
        %v3638 = vmul.f32 %v3574, 0.5
        %v3639 = vmul.f32 %v3575, 0.5
        %v3640 = vmul.f32 %v3576, 0.5
        %v3641 = vmul.f32 %v3577, 0.5
        %v3642 = vmul.f32 %v3578, 0.5
        %v3643 = vmul.f32 %v3579, 0.5
        %v3644 = vmul.f32 %v2828, %v3580
        %v3645 = vmul.f32 %v2830, %v3581
        %v3646 = vmul.f32 %v3054, %v3582
        %v3647 = vmul.f32 %v3056, %v3583
        %v3648 = vmul.f32 %v2832, %v3584
        %v3649 = vmul.f32 %v2834, %v3585
        %v3650 = vmul.f32 %v3058, %v3586
        %v3651 = vmul.f32 %v3060, %v3587
        %v3652 = vmul.f32 %v2838, %v3588
        %v3653 = vmul.f32 %v2840, %v3589
        %v3654 = vmul.f32 %v3064, %v3590
        %v3655 = vmul.f32 %v3066, %v3591
        %v3656 = vmul.f32 %v2842, %v3592
        %v3657 = vmul.f32 %v2844, %v3593
        %v3658 = vmul.f32 %v3068, %v3594
        %v3659 = vmul.f32 %v3070, %v3595
        %v3660 = vmul.f32 %v2848, %v3596
        %v3661 = vmul.f32 %v2850, %v3597
        %v3662 = vmul.f32 %v3074, %v3598
        %v3663 = vmul.f32 %v3076, %v3599
        %v3664 = vmul.f32 %v2852, %v3600
        %v3665 = vmul.f32 %v2854, %v3601
        %v3666 = vmul.f32 %v3078, %v3602
        %v3667 = vmul.f32 %v3080, %v3603
        %v3668 = vmul.f32 %v2858, %v3604
        %v3669 = vmul.f32 %v2860, %v3605
        %v3670 = vmul.f32 %v3084, %v3606
        %v3671 = vmul.f32 %v3086, %v3607
        %v3672 = vmul.f32 %v2862, %v3608
        %v3673 = vmul.f32 %v2864, %v3609
        %v3674 = vmul.f32 %v3088, %v3610
        %v3675 = vmul.f32 %v3090, %v3611
        %v3676 = vmul.f32 %v2868, %v3612
        %v3677 = vmul.f32 %v2870, %v3613
        %v3678 = vmul.f32 %v3094, %v3614
        %v3679 = vmul.f32 %v3096, %v3615
        %v3680 = vmul.f32 %v2872, %v3616
        %v3681 = vmul.f32 %v2874, %v3617
        %v3682 = vmul.f32 %v3098, %v3618
        %v3683 = vmul.f32 %v3100, %v3619
        %v3684 = vmul.f32 %v2878, %v3620
        %v3685 = vmul.f32 %v2880, %v3621
        %v3686 = vmul.f32 %v3104, %v3622
        %v3687 = vmul.f32 %v3106, %v3623
        %v3688 = vmul.f32 %v2882, %v3624
        %v3689 = vmul.f32 %v2884, %v3625
        %v3690 = vmul.f32 %v3108, %v3626
        %v3691 = vmul.f32 %v3110, %v3627
        %v3692 = vmul.f32 %v2888, %v3628
        %v3693 = vmul.f32 %v2890, %v3629
        %v3694 = vmul.f32 %v3114, %v3630
        %v3695 = vmul.f32 %v3116, %v3631
        %v3696 = vmul.f32 %v2892, %v3632
        %v3697 = vmul.f32 %v2894, %v3633
        %v3698 = vmul.f32 %v3118, %v3634
        %v3699 = vmul.f32 %v3120, %v3635
        %v3700 = vmul.f32 %v2898, %v3636
        %v3701 = vmul.f32 %v2900, %v3637
        %v3702 = vmul.f32 %v3124, %v3638
        %v3703 = vmul.f32 %v3126, %v3639
        %v3704 = vmul.f32 %v2902, %v3640
        %v3705 = vmul.f32 %v2904, %v3641
        %v3706 = vmul.f32 %v3128, %v3642
        %v3707 = vmul.f32 %v3130, %v3643
        %v3708 = vpack.c.bf16 %v3648, %v3644
        %v3709 = vpack.c.bf16 %v3649, %v3645
        %v3710 = vpack.c.bf16 %v3650, %v3646
        %v3711 = vpack.c.bf16 %v3651, %v3647
        %v3712 = vpack.c.bf16 %v3656, %v3652
        %v3713 = vpack.c.bf16 %v3657, %v3653
        %v3714 = vpack.c.bf16 %v3658, %v3654
        %v3715 = vpack.c.bf16 %v3659, %v3655
        %v3716 = vpack.c.bf16 %v3664, %v3660
        %v3717 = vpack.c.bf16 %v3665, %v3661
        %v3718 = vpack.c.bf16 %v3666, %v3662
        %v3719 = vpack.c.bf16 %v3667, %v3663
        %v3720 = vpack.c.bf16 %v3672, %v3668
        %v3721 = vpack.c.bf16 %v3673, %v3669
        %v3722 = vpack.c.bf16 %v3674, %v3670
        %v3723 = vpack.c.bf16 %v3675, %v3671
        %v3724 = vpack.c.bf16 %v3680, %v3676
        %v3725 = vpack.c.bf16 %v3681, %v3677
        %v3726 = vpack.c.bf16 %v3682, %v3678
        %v3727 = vpack.c.bf16 %v3683, %v3679
        %v3728 = vpack.c.bf16 %v3688, %v3684
        %v3729 = vpack.c.bf16 %v3689, %v3685
        %v3730 = vpack.c.bf16 %v3690, %v3686
        %v3731 = vpack.c.bf16 %v3691, %v3687
        %v3732 = vpack.c.bf16 %v3696, %v3692
        %v3733 = vpack.c.bf16 %v3697, %v3693
        %v3734 = vpack.c.bf16 %v3698, %v3694
        %v3735 = vpack.c.bf16 %v3699, %v3695
        %v3736 = vpack.c.bf16 %v3704, %v3700
        %v3737 = vpack.c.bf16 %v3705, %v3701
        %v3738 = vpack.c.bf16 %v3706, %v3702
        %v3739 = vpack.c.bf16 %v3707, %v3703
        %v3740 = vld [vmem:[#allocation8] sm:$0xf]
        %v3741 = vld [vmem:[#allocation8 + $0x4] sm:$0xf]
        %v3742 = vld [vmem:[#allocation8 + $0x8] sm:$0xf]
        %v3743 = vld [vmem:[#allocation8 + $0xc] sm:$0xf]
        %v3744 = vld [vmem:[#allocation8 + $0x10] sm:$0xf]
        %v3745 = vld [vmem:[#allocation8 + $0x14] sm:$0xf]
        %v3746 = vld [vmem:[#allocation8 + $0x18] sm:$0xf]
        %v3747 = vld [vmem:[#allocation8 + $0x1c] sm:$0xf]
        %v3748 = vld [vmem:[#allocation8 + $0x20] sm:$0xf]
        %v3749 = vld [vmem:[#allocation8 + $0x24] sm:$0xf]
        %v3750 = vld [vmem:[#allocation8 + $0x28] sm:$0xf]
        %v3751 = vld [vmem:[#allocation8 + $0x2c] sm:$0xf]
        %v3752 = vld [vmem:[#allocation8 + $0x30] sm:$0xf]
        %v3753 = vld [vmem:[#allocation8 + $0x34] sm:$0xf]
        %v3754 = vld [vmem:[#allocation8 + $0x38] sm:$0xf]
        %v3755 = vld [vmem:[#allocation8 + $0x3c] sm:$0xf]
        %v3756 = vld [vmem:[#allocation8 + $0x40] sm:$0xf]
        %v3757 = vld [vmem:[#allocation8 + $0x44] sm:$0xf]
        %v3758 = vld [vmem:[#allocation8 + $0x48] sm:$0xf]
        %v3759 = vld [vmem:[#allocation8 + $0x4c] sm:$0xf]
        %v3760 = vld [vmem:[#allocation8 + $0x50] sm:$0xf]
        %v3761 = vld [vmem:[#allocation8 + $0x54] sm:$0xf]
        %v3762 = vld [vmem:[#allocation8 + $0x58] sm:$0xf]
        %v3763 = vld [vmem:[#allocation8 + $0x5c] sm:$0xf]
        %v3764 = vld [vmem:[#allocation8 + $0x60] sm:$0xf]
        %v3765 = vld [vmem:[#allocation8 + $0x64] sm:$0xf]
        %v3766 = vld [vmem:[#allocation8 + $0x68] sm:$0xf]
        %v3767 = vld [vmem:[#allocation8 + $0x6c] sm:$0xf]
        %v3768 = vld [vmem:[#allocation8 + $0x70] sm:$0xf]
        %v3769 = vld [vmem:[#allocation8 + $0x74] sm:$0xf]
        %v3770 = vld [vmem:[#allocation8 + $0x78] sm:$0xf]
        %v3771 = vld [vmem:[#allocation8 + $0x7c] sm:$0xf]
        %v3772 = vld [vmem:[#allocation8 + $0x80] sm:$0xf]
        %v3773 = vld [vmem:[#allocation8 + $0x84] sm:$0xf]
        %v3774 = vld [vmem:[#allocation8 + $0x88] sm:$0xf]
        %v3775 = vld [vmem:[#allocation8 + $0x8c] sm:$0xf]
        %v3776 = vld [vmem:[#allocation8 + $0x90] sm:$0xf]
        %v3777 = vld [vmem:[#allocation8 + $0x94] sm:$0xf]
        %v3778 = vld [vmem:[#allocation8 + $0x98] sm:$0xf]
        %v3779 = vld [vmem:[#allocation8 + $0x9c] sm:$0xf]
        %v3780 = vld [vmem:[#allocation8 + $0xa0] sm:$0xf]
        %v3781 = vld [vmem:[#allocation8 + $0xa4] sm:$0xf]
        %v3782 = vld [vmem:[#allocation8 + $0xa8] sm:$0xf]
        %v3783 = vld [vmem:[#allocation8 + $0xac] sm:$0xf]
        %v3784 = vld [vmem:[#allocation8 + $0xb0] sm:$0xf]
        %v3785 = vld [vmem:[#allocation8 + $0xb4] sm:$0xf]
        %v3786 = vld [vmem:[#allocation8 + $0xb8] sm:$0xf]
        %v3787 = vld [vmem:[#allocation8 + $0xbc] sm:$0xf]
        %v3788 = vld [vmem:[#allocation8 + $0xc0] sm:$0xf]
        %v3789 = vld [vmem:[#allocation8 + $0xc4] sm:$0xf]
        %v3790 = vld [vmem:[#allocation8 + $0xc8] sm:$0xf]
        %v3791 = vld [vmem:[#allocation8 + $0xcc] sm:$0xf]
        %v3792 = vld [vmem:[#allocation8 + $0xd0] sm:$0xf]
        %v3793 = vld [vmem:[#allocation8 + $0xd4] sm:$0xf]
        %v3794 = vld [vmem:[#allocation8 + $0xd8] sm:$0xf]
        %v3795 = vld [vmem:[#allocation8 + $0xdc] sm:$0xf]
        %v3796 = vld [vmem:[#allocation8 + $0xe0] sm:$0xf]
        %v3797 = vld [vmem:[#allocation8 + $0xe4] sm:$0xf]
        %v3798 = vld [vmem:[#allocation8 + $0xe8] sm:$0xf]
        %v3799 = vld [vmem:[#allocation8 + $0xec] sm:$0xf]
        %v3800 = vld [vmem:[#allocation8 + $0xf0] sm:$0xf]
        %v3801 = vld [vmem:[#allocation8 + $0xf4] sm:$0xf]
        %v3802 = vld [vmem:[#allocation8 + $0xf8] sm:$0xf]
        %v3803 = vld [vmem:[#allocation8 + $0xfc] sm:$0xf]
        %v3804 = vld [vmem:[%s6] sm:$0x1]
        %v3806 = vlaneseq
        %v3807 = vshrl.u32 %v3806, 7
        %v3808 = vsub.s32 0, %v3807
        %v3809 = vrot.slane %v3804, %v3808
        %v3875 = vunpack.c.l.b16 %v3740
        %v3876 = vunpack.c.l.b16 %v3741
        %v3877 = vunpack.c.l.b16 %v3742
        %v3878 = vunpack.c.l.b16 %v3743
        %v3879 = vunpack.c.l.b16 %v3744
        %v3880 = vunpack.c.l.b16 %v3745
        %v3881 = vunpack.c.l.b16 %v3746
        %v3882 = vunpack.c.l.b16 %v3747
        %v3883 = vunpack.c.l.b16 %v3748
        %v3884 = vunpack.c.l.b16 %v3749
        %v3885 = vunpack.c.l.b16 %v3750
        %v3886 = vunpack.c.l.b16 %v3751
        %v3887 = vunpack.c.l.b16 %v3752
        %v3888 = vunpack.c.l.b16 %v3753
        %v3889 = vunpack.c.l.b16 %v3754
        %v3890 = vunpack.c.l.b16 %v3755
        %v3891 = vunpack.c.l.b16 %v3756
        %v3892 = vunpack.c.l.b16 %v3757
        %v3893 = vunpack.c.l.b16 %v3758
        %v3894 = vunpack.c.l.b16 %v3759
        %v3895 = vunpack.c.l.b16 %v3760
        %v3896 = vunpack.c.l.b16 %v3761
        %v3897 = vunpack.c.l.b16 %v3762
        %v3898 = vunpack.c.l.b16 %v3763
        %v3899 = vunpack.c.l.b16 %v3764
        %v3900 = vunpack.c.l.b16 %v3765
        %v3901 = vunpack.c.l.b16 %v3766
        %v3902 = vunpack.c.l.b16 %v3767
        %v3903 = vunpack.c.l.b16 %v3768
        %v3904 = vunpack.c.l.b16 %v3769
        %v3905 = vunpack.c.l.b16 %v3770
        %v3906 = vunpack.c.l.b16 %v3771
        %v3907 = vunpack.c.l.b16 %v3772
        %v3908 = vunpack.c.l.b16 %v3773
        %v3909 = vunpack.c.l.b16 %v3774
        %v3910 = vunpack.c.l.b16 %v3775
        %v3911 = vunpack.c.l.b16 %v3776
        %v3912 = vunpack.c.l.b16 %v3777
        %v3913 = vunpack.c.l.b16 %v3778
        %v3914 = vunpack.c.l.b16 %v3779
        %v3915 = vunpack.c.l.b16 %v3780
        %v3916 = vunpack.c.l.b16 %v3781
        %v3917 = vunpack.c.l.b16 %v3782
        %v3918 = vunpack.c.l.b16 %v3783
        %v3919 = vunpack.c.l.b16 %v3784
        %v3920 = vunpack.c.l.b16 %v3785
        %v3921 = vunpack.c.l.b16 %v3786
        %v3922 = vunpack.c.l.b16 %v3787
        %v3923 = vunpack.c.l.b16 %v3788
        %v3924 = vunpack.c.l.b16 %v3789
        %v3925 = vunpack.c.l.b16 %v3790
        %v3926 = vunpack.c.l.b16 %v3791
        %v3927 = vunpack.c.l.b16 %v3792
        %v3928 = vunpack.c.l.b16 %v3793
        %v3929 = vunpack.c.l.b16 %v3794
        %v3930 = vunpack.c.l.b16 %v3795
        %v3931 = vunpack.c.l.b16 %v3796
        %v3932 = vunpack.c.l.b16 %v3797
        %v3933 = vunpack.c.l.b16 %v3798
        %v3934 = vunpack.c.l.b16 %v3799
        %v3935 = vunpack.c.l.b16 %v3800
        %v3936 = vunpack.c.l.b16 %v3801
        %v3937 = vunpack.c.l.b16 %v3802
        %v3938 = vunpack.c.l.b16 %v3803
        %v3939 = vpack.c.b16 %v3876, %v3875
        %v3940 = vpack.c.b16 %v3878, %v3877
        %v3941 = vpack.c.b16 %v3880, %v3879
        %v3942 = vpack.c.b16 %v3882, %v3881
        %v3943 = vpack.c.b16 %v3884, %v3883
        %v3944 = vpack.c.b16 %v3886, %v3885
        %v3945 = vpack.c.b16 %v3888, %v3887
        %v3946 = vpack.c.b16 %v3890, %v3889
        %v3947 = vpack.c.b16 %v3892, %v3891
        %v3948 = vpack.c.b16 %v3894, %v3893
        %v3949 = vpack.c.b16 %v3896, %v3895
        %v3950 = vpack.c.b16 %v3898, %v3897
        %v3951 = vpack.c.b16 %v3900, %v3899
        %v3952 = vpack.c.b16 %v3902, %v3901
        %v3953 = vpack.c.b16 %v3904, %v3903
        %v3954 = vpack.c.b16 %v3906, %v3905
        %v3955 = vpack.c.b16 %v3908, %v3907
        %v3956 = vpack.c.b16 %v3910, %v3909
        %v3957 = vpack.c.b16 %v3912, %v3911
        %v3958 = vpack.c.b16 %v3914, %v3913
        %v3959 = vpack.c.b16 %v3916, %v3915
        %v3960 = vpack.c.b16 %v3918, %v3917
        %v3961 = vpack.c.b16 %v3920, %v3919
        %v3962 = vpack.c.b16 %v3922, %v3921
        %v3963 = vpack.c.b16 %v3924, %v3923
        %v3964 = vpack.c.b16 %v3926, %v3925
        %v3965 = vpack.c.b16 %v3928, %v3927
        %v3966 = vpack.c.b16 %v3930, %v3929
        %v3967 = vpack.c.b16 %v3932, %v3931
        %v3968 = vpack.c.b16 %v3934, %v3933
        %v3969 = vpack.c.b16 %v3936, %v3935
        %v3970 = vpack.c.b16 %v3938, %v3937
        %4003 = vmatprep.subr.bf16.mxu0 0
        %4004 = vmatpush1.bf16.msra.mxu0 %v3939
        %4005 = vmatprep.subr.bf16.mxu0 0
        %4006 = vmatpush1.bf16.msra.mxu0 %v3940
        %4007 = vmatprep.subr.bf16.mxu0 0
        %4008 = vmatpush1.bf16.msra.mxu0 %v3941
        %4009 = vmatprep.subr.bf16.mxu0 0
        %4010 = vmatpush1.bf16.msra.mxu0 %v3942
        %4011 = vmatprep.subr.bf16.mxu0 0
        %4012 = vmatpush1.bf16.msra.mxu0 %v3943
        %4013 = vmatprep.subr.bf16.mxu0 0
        %4014 = vmatpush1.bf16.msra.mxu0 %v3944
        %4015 = vmatprep.subr.bf16.mxu0 0
        %4016 = vmatpush1.bf16.msra.mxu0 %v3945
        %4017 = vmatprep.subr.bf16.mxu0 0
        %4018 = vmatpush1.bf16.msra.mxu0 %v3946
        %4019 = vmatprep.subr.bf16.mxu0 0
        %4020 = vmatpush1.bf16.msra.mxu0 %v3947
        %4021 = vmatprep.subr.bf16.mxu0 0
        %4022 = vmatpush1.bf16.msra.mxu0 %v3948
        %4023 = vmatprep.subr.bf16.mxu0 0
        %4024 = vmatpush1.bf16.msra.mxu0 %v3949
        %4025 = vmatprep.subr.bf16.mxu0 0
        %4026 = vmatpush1.bf16.msra.mxu0 %v3950
        %4027 = vmatprep.subr.bf16.mxu0 0
        %4028 = vmatpush1.bf16.msra.mxu0 %v3951
        %4029 = vmatprep.subr.bf16.mxu0 0
        %4030 = vmatpush1.bf16.msra.mxu0 %v3952
        %4031 = vmatprep.subr.bf16.mxu0 0
        %4032 = vmatpush1.bf16.msra.mxu0 %v3953
        %4033 = vmatprep.subr.bf16.mxu0 0
        %4034 = vmatpush1.bf16.msra.mxu0 %v3954
        %4035 = vmatprep.mubr.bf16.mxu0 %v3709
        %4036 = vmatmul.mubr.bf16.gmra.mrb[0].mxu0 %v3708
        %v4037 = vpop.f32.mrb[0].mxu0
        %v4038 = vadd.f32 %v3809, %v4037
        %v4039 = vpop.f32.mrb[0].mxu0
        %v4040 = vpop.f32.mrb[0].mxu0
        %v4041 = vadd.f32 %v3809, %v4040
        %v4042 = vpop.f32.mrb[0].mxu0
        %4043 = vmatprep.mubr.bf16.mxu0 %v3713
        %4044 = vmatmul.mubr.bf16.gmra.mrb[0].mxu0 %v3712
        %v4045 = vpop.f32.mrb[0].mxu0
        %v4046 = vadd.f32 %v3809, %v4045
        %v4047 = vpop.f32.mrb[0].mxu0
        %v4048 = vpop.f32.mrb[0].mxu0
        %v4049 = vadd.f32 %v3809, %v4048
        %v4050 = vpop.f32.mrb[0].mxu0
        %4051 = vmatprep.mubr.bf16.mxu0 %v3717
        %4052 = vmatmul.mubr.bf16.gmra.mrb[0].mxu0 %v3716
        %v4053 = vpop.f32.mrb[0].mxu0
        %v4054 = vadd.f32 %v3809, %v4053
        %v4055 = vpop.f32.mrb[0].mxu0
        %v4056 = vpop.f32.mrb[0].mxu0
        %v4057 = vadd.f32 %v3809, %v4056
        %v4058 = vpop.f32.mrb[0].mxu0
        %4059 = vmatprep.mubr.bf16.mxu0 %v3721
        %4060 = vmatmul.mubr.bf16.gmra.mrb[0].mxu0 %v3720
        %v4061 = vpop.f32.mrb[0].mxu0
        %v4062 = vadd.f32 %v3809, %v4061
        %v4063 = vpop.f32.mrb[0].mxu0
        %v4064 = vpop.f32.mrb[0].mxu0
        %v4065 = vadd.f32 %v3809, %v4064
        %v4066 = vpop.f32.mrb[0].mxu0
        %4067 = vmatprep.mubr.bf16.mxu0 %v3725
        %4068 = vmatmul.mubr.bf16.gmra.mrb[0].mxu0 %v3724
        %v4069 = vpop.f32.mrb[0].mxu0
        %v4070 = vadd.f32 %v3809, %v4069
        %v4071 = vpop.f32.mrb[0].mxu0
        %v4072 = vpop.f32.mrb[0].mxu0
        %v4073 = vadd.f32 %v3809, %v4072
        %v4074 = vpop.f32.mrb[0].mxu0
        %4075 = vmatprep.mubr.bf16.mxu0 %v3729
        %4076 = vmatmul.mubr.bf16.gmra.mrb[0].mxu0 %v3728
        %v4077 = vpop.f32.mrb[0].mxu0
        %v4078 = vadd.f32 %v3809, %v4077
        %v4079 = vpop.f32.mrb[0].mxu0
        %v4080 = vpop.f32.mrb[0].mxu0
        %v4081 = vadd.f32 %v3809, %v4080
        %v4082 = vpop.f32.mrb[0].mxu0
        %4083 = vmatprep.mubr.bf16.mxu0 %v3733
        %4084 = vmatmul.mubr.bf16.gmra.mrb[0].mxu0 %v3732
        %v4085 = vpop.f32.mrb[0].mxu0
        %v4086 = vadd.f32 %v3809, %v4085
        %v4087 = vpop.f32.mrb[0].mxu0
        %v4088 = vpop.f32.mrb[0].mxu0
        %v4089 = vadd.f32 %v3809, %v4088
        %v4090 = vpop.f32.mrb[0].mxu0
        %4091 = vmatprep.mubr.bf16.mxu0 %v3737
        %4092 = vmatmul.mubr.bf16.gmra.mrb[0].mxu0 %v3736
        %v4093 = vpop.f32.mrb[0].mxu0
        %v4094 = vadd.f32 %v3809, %v4093
        %v4095 = vpop.f32.mrb[0].mxu0
        %v4096 = vpop.f32.mrb[0].mxu0
        %v4097 = vadd.f32 %v3809, %v4096
        %v4098 = vpop.f32.mrb[0].mxu0
        %4099 = vdwg.mxu0
        %4100 = vmatprep.subr.bf16.mxu0 0
        %4101 = vmatpush1.bf16.msra.mxu0 %v3955
        %4102 = vmatprep.subr.bf16.mxu0 0
        %4103 = vmatpush1.bf16.msra.mxu0 %v3956
        %4104 = vmatprep.subr.bf16.mxu0 0
        %4105 = vmatpush1.bf16.msra.mxu0 %v3957
        %4106 = vmatprep.subr.bf16.mxu0 0
        %4107 = vmatpush1.bf16.msra.mxu0 %v3958
        %4108 = vmatprep.subr.bf16.mxu0 0
        %4109 = vmatpush1.bf16.msra.mxu0 %v3959
        %4110 = vmatprep.subr.bf16.mxu0 0
        %4111 = vmatpush1.bf16.msra.mxu0 %v3960
        %4112 = vmatprep.subr.bf16.mxu0 0
        %4113 = vmatpush1.bf16.msra.mxu0 %v3961
        %4114 = vmatprep.subr.bf16.mxu0 0
        %4115 = vmatpush1.bf16.msra.mxu0 %v3962
        %4116 = vmatprep.subr.bf16.mxu0 0
        %4117 = vmatpush1.bf16.msra.mxu0 %v3963
        %4118 = vmatprep.subr.bf16.mxu0 0
        %4119 = vmatpush1.bf16.msra.mxu0 %v3964
        %4120 = vmatprep.subr.bf16.mxu0 0
        %4121 = vmatpush1.bf16.msra.mxu0 %v3965
        %4122 = vmatprep.subr.bf16.mxu0 0
        %4123 = vmatpush1.bf16.msra.mxu0 %v3966
        %4124 = vmatprep.subr.bf16.mxu0 0
        %4125 = vmatpush1.bf16.msra.mxu0 %v3967
        %4126 = vmatprep.subr.bf16.mxu0 0
        %4127 = vmatpush1.bf16.msra.mxu0 %v3968
        %4128 = vmatprep.subr.bf16.mxu0 0
        %4129 = vmatpush1.bf16.msra.mxu0 %v3969
        %4130 = vmatprep.subr.bf16.mxu0 0
        %4131 = vmatpush1.bf16.msra.mxu0 %v3970
        %4132 = vmatprep.mubr.bf16.mxu0 %v3711
        %4133 = vmatmul.mubr.bf16.gmra.mrb[0].mxu0 %v3710
        %v4134 = vpop.f32.mrb[0].mxu0
        %v4135 = vadd.f32 %v4038, %v4134
        %v4136 = vpop.f32.mrb[0].mxu0
        %v4137 = vpop.f32.mrb[0].mxu0
        %v4138 = vadd.f32 %v4041, %v4137
        %v4139 = vpop.f32.mrb[0].mxu0
        %4140 = vmatprep.mubr.bf16.mxu0 %v3715
        %4141 = vmatmul.mubr.bf16.gmra.mrb[0].mxu0 %v3714
        %v4142 = vpop.f32.mrb[0].mxu0
        %v4143 = vadd.f32 %v4046, %v4142
        %v4144 = vpop.f32.mrb[0].mxu0
        %v4145 = vpop.f32.mrb[0].mxu0
        %v4146 = vadd.f32 %v4049, %v4145
        %v4147 = vpop.f32.mrb[0].mxu0
        %4148 = vmatprep.mubr.bf16.mxu0 %v3719
        %4149 = vmatmul.mubr.bf16.gmra.mrb[0].mxu0 %v3718
        %v4150 = vpop.f32.mrb[0].mxu0
        %v4151 = vadd.f32 %v4054, %v4150
        %v4152 = vpop.f32.mrb[0].mxu0
        %v4153 = vpop.f32.mrb[0].mxu0
        %v4154 = vadd.f32 %v4057, %v4153
        %v4155 = vpop.f32.mrb[0].mxu0
        %4156 = vmatprep.mubr.bf16.mxu0 %v3723
        %4157 = vmatmul.mubr.bf16.gmra.mrb[0].mxu0 %v3722
        %v4158 = vpop.f32.mrb[0].mxu0
        %v4159 = vadd.f32 %v4062, %v4158
        %v4160 = vpop.f32.mrb[0].mxu0
        %v4161 = vpop.f32.mrb[0].mxu0
        %v4162 = vadd.f32 %v4065, %v4161
        %v4163 = vpop.f32.mrb[0].mxu0
        %4164 = vmatprep.mubr.bf16.mxu0 %v3727
        %4165 = vmatmul.mubr.bf16.gmra.mrb[0].mxu0 %v3726
        %v4166 = vpop.f32.mrb[0].mxu0
        %v4167 = vadd.f32 %v4070, %v4166
        %v4168 = vpop.f32.mrb[0].mxu0
        %v4169 = vpop.f32.mrb[0].mxu0
        %v4170 = vadd.f32 %v4073, %v4169
        %v4171 = vpop.f32.mrb[0].mxu0
        %4172 = vmatprep.mubr.bf16.mxu0 %v3731
        %4173 = vmatmul.mubr.bf16.gmra.mrb[0].mxu0 %v3730
        %v4174 = vpop.f32.mrb[0].mxu0
        %v4175 = vadd.f32 %v4078, %v4174
        %v4176 = vpop.f32.mrb[0].mxu0
        %v4177 = vpop.f32.mrb[0].mxu0
        %v4178 = vadd.f32 %v4081, %v4177
        %v4179 = vpop.f32.mrb[0].mxu0
        %4180 = vmatprep.mubr.bf16.mxu0 %v3735
        %4181 = vmatmul.mubr.bf16.gmra.mrb[0].mxu0 %v3734
        %v4182 = vpop.f32.mrb[0].mxu0
        %v4183 = vadd.f32 %v4086, %v4182
        %v4184 = vpop.f32.mrb[0].mxu0
        %v4185 = vpop.f32.mrb[0].mxu0
        %v4186 = vadd.f32 %v4089, %v4185
        %v4187 = vpop.f32.mrb[0].mxu0
        %4188 = vmatprep.mubr.bf16.mxu0 %v3739
        %4189 = vmatmul.mubr.bf16.gmra.mrb[0].mxu0 %v3738
        %v4190 = vpop.f32.mrb[0].mxu0
        %v4191 = vadd.f32 %v4094, %v4190
        %v4192 = vpop.f32.mrb[0].mxu0
        %v4193 = vpop.f32.mrb[0].mxu0
        %v4194 = vadd.f32 %v4097, %v4193
        %v4195 = vpop.f32.mrb[0].mxu0
        %4196 = vdwg.mxu0
        %v4197 = vmul.f32 %v4135, %v4135
        %v4198 = vmul.f32 %v4138, %v4138
        %v4199 = vmul.f32 %v4143, %v4143
        %v4200 = vmul.f32 %v4146, %v4146
        %v4201 = vmul.f32 %v4151, %v4151
        %v4202 = vmul.f32 %v4154, %v4154
        %v4203 = vmul.f32 %v4159, %v4159
        %v4204 = vmul.f32 %v4162, %v4162
        %v4205 = vmul.f32 %v4167, %v4167
        %v4206 = vmul.f32 %v4170, %v4170
        %v4207 = vmul.f32 %v4175, %v4175
        %v4208 = vmul.f32 %v4178, %v4178
        %v4209 = vmul.f32 %v4183, %v4183
        %v4210 = vmul.f32 %v4186, %v4186
        %v4211 = vmul.f32 %v4191, %v4191
        %v4212 = vmul.f32 %v4194, %v4194
        %4213 = vadd.xlane.f32.xlu0 %v4197
        %v4214 = vpop.xlane.xlu0 %4213
        %4215 = vadd.xlane.f32.xlu0 %v4198
        %v4216 = vpop.xlane.xlu0 %4215
        %4217 = vadd.xlane.f32.xlu0 %v4199
        %v4218 = vpop.xlane.xlu0 %4217
        %4219 = vadd.xlane.f32.xlu0 %v4200
        %v4220 = vpop.xlane.xlu0 %4219
        %4221 = vadd.xlane.f32.xlu0 %v4201
        %v4222 = vpop.xlane.xlu0 %4221
        %4223 = vadd.xlane.f32.xlu0 %v4202
        %v4224 = vpop.xlane.xlu0 %4223
        %4225 = vadd.xlane.f32.xlu0 %v4203
        %v4226 = vpop.xlane.xlu0 %4225
        %4227 = vadd.xlane.f32.xlu0 %v4204
        %v4228 = vpop.xlane.xlu0 %4227
        %4229 = vadd.xlane.f32.xlu0 %v4205
        %v4230 = vpop.xlane.xlu0 %4229
        %4231 = vadd.xlane.f32.xlu0 %v4206
        %v4232 = vpop.xlane.xlu0 %4231
        %4233 = vadd.xlane.f32.xlu0 %v4207
        %v4234 = vpop.xlane.xlu0 %4233
        %4235 = vadd.xlane.f32.xlu0 %v4208
        %v4236 = vpop.xlane.xlu0 %4235
        %4237 = vadd.xlane.f32.xlu0 %v4209
        %v4238 = vpop.xlane.xlu0 %4237
        %4239 = vadd.xlane.f32.xlu0 %v4210
        %v4240 = vpop.xlane.xlu0 %4239
        %4241 = vadd.xlane.f32.xlu0 %v4211
        %v4242 = vpop.xlane.xlu0 %4241
        %4243 = vadd.xlane.f32.xlu0 %v4212
        %v4244 = vpop.xlane.xlu0 %4243
        %v4245 = vmax.f32 %v4214, 1e-24
        %v4246 = vmax.f32 %v4216, 1e-24
        %v4247 = vmax.f32 %v4218, 1e-24
        %v4248 = vmax.f32 %v4220, 1e-24
        %v4249 = vmax.f32 %v4222, 1e-24
        %v4250 = vmax.f32 %v4224, 1e-24
        %v4251 = vmax.f32 %v4226, 1e-24
        %v4252 = vmax.f32 %v4228, 1e-24
        %v4253 = vmax.f32 %v4230, 1e-24
        %v4254 = vmax.f32 %v4232, 1e-24
        %v4255 = vmax.f32 %v4234, 1e-24
        %v4256 = vmax.f32 %v4236, 1e-24
        %v4257 = vmax.f32 %v4238, 1e-24
        %v4258 = vmax.f32 %v4240, 1e-24
        %v4259 = vmax.f32 %v4242, 1e-24
        %v4260 = vmax.f32 %v4244, 1e-24
        %v4261 = vrsqrt.pop %v4245
        %v4262 = vrsqrt.pop %v4246
        %v4263 = vrsqrt.pop %v4247
        %v4264 = vrsqrt.pop %v4248
        %v4265 = vrsqrt.pop %v4249
        %v4266 = vrsqrt.pop %v4250
        %v4267 = vrsqrt.pop %v4251
        %v4268 = vrsqrt.pop %v4252
        %v4269 = vrsqrt.pop %v4253
        %v4270 = vrsqrt.pop %v4254
        %v4271 = vrsqrt.pop %v4255
        %v4272 = vrsqrt.pop %v4256
        %v4273 = vrsqrt.pop %v4257
        %v4274 = vrsqrt.pop %v4258
        %v4275 = vrsqrt.pop %v4259
        %v4276 = vrsqrt.pop %v4260
        %v4277 = vmul.f32 %v4135, %v4261
        %v4278 = vmul.f32 %v4138, %v4262
        %v4279 = vmul.f32 %v4143, %v4263
        %v4280 = vmul.f32 %v4146, %v4264
        %v4281 = vmul.f32 %v4151, %v4265
        %v4282 = vmul.f32 %v4154, %v4266
        %v4283 = vmul.f32 %v4159, %v4267
        %v4284 = vmul.f32 %v4162, %v4268
        %v4285 = vmul.f32 %v4167, %v4269
        %v4286 = vmul.f32 %v4170, %v4270
        %v4287 = vmul.f32 %v4175, %v4271
        %v4288 = vmul.f32 %v4178, %v4272
        %v4289 = vmul.f32 %v4183, %v4273
        %v4290 = vmul.f32 %v4186, %v4274
        %v4291 = vmul.f32 %v4191, %v4275
        %v4292 = vmul.f32 %v4194, %v4276
        %4293 = vst [vmem:[%s341] sm:$0xff] %v4277
        %4294 = vst [vmem:[%s341 + $0x8] sm:$0xff] %v4278
        %4295 = vst [vmem:[%s341 + $0x10] sm:$0xff] %v4279
        %4296 = vst [vmem:[%s341 + $0x18] sm:$0xff] %v4280
        %4297 = vst [vmem:[%s341 + $0x20] sm:$0xff] %v4281
        %4298 = vst [vmem:[%s341 + $0x28] sm:$0xff] %v4282
        %4299 = vst [vmem:[%s341 + $0x30] sm:$0xff] %v4283
        %4300 = vst [vmem:[%s341 + $0x38] sm:$0xff] %v4284
        %4301 = vst [vmem:[%s341 + $0x40] sm:$0xff] %v4285
        %4302 = vst [vmem:[%s341 + $0x48] sm:$0xff] %v4286
        %4303 = vst [vmem:[%s341 + $0x50] sm:$0xff] %v4287
        %4304 = vst [vmem:[%s341 + $0x58] sm:$0xff] %v4288
        %4305 = vst [vmem:[%s341 + $0x60] sm:$0xff] %v4289
        %4306 = vst [vmem:[%s341 + $0x68] sm:$0xff] %v4290
        %4307 = vst [vmem:[%s341 + $0x70] sm:$0xff] %v4291
        %4308 = vst [vmem:[%s341 + $0x78] sm:$0xff] %v4292
        %s4309 = sand.u32 %s186, 1
        %s4310 = scalar_lea.sflag [#allocation4], %s4309
        %s4311 = sand.u32 %s186, 1
        %s4312 = smul.addr %s4311, 128
        %s4313 = scalar_lea.vmem [#allocation10], %s4312
        // Predicated region
        $region65: #{tpu_custom_call.1} parent=47 // pred_check
          %p4314 = pneg %p196
        $region66: #{tpu_custom_call.1} parent=47 // pred_check_branch
          %4316 = sbr.rel (%p4314) target = $region68
        $region67: #{tpu_custom_call.1} parent=47 // pred_region
          %s4317 = smul.u32 16, %s26
          %s4319 = ssub.s32 2048, 2048
          %4320 = vsyncadd %s4310, %s4319
          %s4321 = smul.addr %s4317, 128
          %s4322 = scalar_lea.hbm %s7, %s4321
          %s4323 = sshll.u32 %s4313, 4
          %s4324 = int_to_ptr.vmem [resolvable:$true] %s4323
          %4329 = dma.vmem_to_hbm [thread:$0]  %s4324, 2048, %s4322, %s4310, 128, 128, 8
        $region68: #{tpu_custom_call.1} parent=47 // pred_fallthru
          _
      $region48: #{tpu_custom_call.1} parent=5 // pred_fallthru
        _
      %p4330 = scmp.le.s32.totalorder 2, %s21
      // Predicated region
      $region69: #{tpu_custom_call.1} parent=5 // pred_check
        %p4331 = pneg %p4330
      $region70: #{tpu_custom_call.1} parent=5 // pred_check_branch
        %4333 = sbr.rel (%p4331) target = $region72
      $region71: #{tpu_custom_call.1} parent=5 // pred_region
        %s4334 = ssub.s32 %s21, 2
        // Predicated region
        $region73: #{tpu_custom_call.1} parent=71 // pred_check
          %p4335 = pneg %p202
        $region74: #{tpu_custom_call.1} parent=71 // pred_check_branch
          %4337 = sbr.rel (%p4335) target = $region76
        $region75: #{tpu_custom_call.1} parent=71 // pred_region
          %s4338 = sand.u32 %s187, 1
          %s4339 = scalar_lea.sflag [#allocation4], %s4338
          %s4340 = sand.u32 %s187, 1
          %s4341 = smul.addr %s4340, 128
          %s4342 = scalar_lea.vmem [#allocation10], %s4341
          %4343 = dma.done %s4339, 2048
        $region76: #{tpu_custom_call.1} parent=71 // pred_fallthru
          _
      $region72: #{tpu_custom_call.1} parent=5 // pred_fallthru
        _
    $region6: #{tpu_custom_call.1} parent=1 // loop_footer
      %s25 = sadd.s32 1, %s21
    $region7: #{tpu_custom_call.1} parent=1 // loop_footer_branch
      %20 = sbr.rel target = $region3
    $region8: #{tpu_custom_call.1} parent=1 // loop_exit
      _
    %4344 = vsyncpa [#allocation3], 1
    %s4345 = scalar_lea.sflag [#allocation3], 1
    %4346 = vsyncpa %s4345, 1
    %4347 = vsyncpa [#allocation6], 1
    %4348 = vsyncpa [#allocation9], 1
    %4349 = vsyncpa [#allocation4], 1
    %s4350 = scalar_lea.sflag [#allocation4], 1
    %4351 = vsyncpa %s4350, 1

</llo_original>
